<compile_context>
chip_gen: v6e
topology: v6e:2x2x1
jax: 0.10.0
libtpu: 0.0.40
codegen_flags: <defaults>
</compile_context>

<pallas_src>
import functools

import jax
import jax.numpy as jnp
from jax.experimental import pallas as pl
from jax.experimental.pallas import tpu as pltpu


LRELU_SLOPE = 0.2
_VMEM_LIMIT = 32 * 1024 * 1024


def _round_up(x, m):
    return (x + m - 1) // m * m


def _pick_tile(m):
    for t in (1024, 512, 256, 128, 64, 32, 16, 8):
        if m % t == 0:
            return t
    return m  # full extent (exempt from the (8,128) block rule)


# ----------------------------- Pallas kernels ------------------------------

def _mm_act_kernel(a_ref, w_ref, b_ref, o_ref, *, act, slope):
    # (tm, K) @ (K, Cp) on the MXU with f32 accumulation; epilogue on the VPU.
    y = jnp.dot(a_ref[...], w_ref[...], preferred_element_type=jnp.float32)
    y = y + b_ref[...]
    if act == "lrelu":
        y = jnp.maximum(y, slope * y)          # LeakyReLU(slope)
    elif act == "sigmoid":
        y = 1.0 / (1.0 + jnp.exp(-y))          # exact sigmoid in f32
    o_ref[...] = y.astype(o_ref.dtype)


def _head_kernel(a_ref, w4_ref, b4_ref, w5_ref, b5_ref, o_ref, *, slope):
    # Fused layers 4+5: conv4-as-matmul + bias + LeakyReLU, then conv5 (4x4
    # kernel covering the whole 4x4 map == weighted reduction) + bias + sigmoid.
    # One grid step per image; layer-4 activations never leave registers/VMEM.
    a = a_ref[0]                                              # (S4, K4) bf16
    y = jnp.dot(a, w4_ref[...], preferred_element_type=jnp.float32)
    y = y + b4_ref[...]
    y = jnp.maximum(y, slope * y)                             # (S4, C4P) f32
    t = jnp.sum(y * w5_ref[...], axis=1, keepdims=True)       # (S4, 1)
    s = jnp.sum(t, axis=0, keepdims=True) + b5_ref[...]       # (1, 1)
    o_ref[...] = (1.0 / (1.0 + jnp.exp(-s))).reshape(1, 1, 1)


# --------------------------------- glue ------------------------------------

def _l2norm(v, eps=1e-12):
    return v / (jnp.linalg.norm(v) + eps)


def _sn_sigma(w, u):
    # One power iteration on w.view(Cout, -1) as in SNConv2d (inference:
    # u is used but not persisted / returned).
    w_mat = w.reshape(w.shape[0], -1)              # (Cout, K)
    v = _l2norm(jnp.matmul(u, w_mat))              # (1, K)
    u_new = _l2norm(jnp.matmul(v, w_mat.T))        # (1, Cout)
    return jnp.sum(u_new * jnp.matmul(v, w_mat.T))


def _prep_conv_weight(w, u, cout_pad):
    # torch layout (Cout, Cin, KH, KW) -> (KH*KW*Cin, Cout_pad) bf16,
    # spectral norm folded in as a scalar 1/sigma on the tiny matrix.
    cout, cin, kh, kw = w.shape
    sigma = _sn_sigma(w, u)
    w_mat = jnp.transpose(w, (2, 3, 1, 0)).reshape(kh * kw * cin, cout)
    w_mat = w_mat * (1.0 / sigma)
    w_mat = jnp.pad(w_mat, ((0, 0), (0, cout_pad - cout)))
    return w_mat.astype(jnp.bfloat16)


def _im2col(x, kh, kw, stride, pad):
    # x: (N, H, W, C) bf16 -> (N, OH, OW, KH*KW*C); patch-major, channel-minor.
    if pad:
        x = jnp.pad(x, ((0, 0), (pad, pad), (pad, pad), (0, 0)))
    n, h, w, c = x.shape
    oh = (h - kh) // stride + 1
    ow = (w - kw) // stride + 1
    patches = [x[:, i:i + stride * oh:stride, j:j + stride * ow:stride, :]
               for i in range(kh) for j in range(kw)]
    cols = jnp.concatenate(patches, axis=-1)
    return cols, oh, ow


def _conv_act_layer(x, w, b, u, *, stride, pad, act):
    n = x.shape[0]
    cout, cin, kh, kw = w.shape
    cout_p = max(128, _round_up(cout, 128))        # lane-dense output
    w_mat = _prep_conv_weight(w, u, cout_p)
    b_pad = jnp.pad(b, (0, cout_p - cout)).reshape(1, cout_p).astype(jnp.float32)

    cols, oh, ow = _im2col(x, kh, kw, stride, pad)
    k = kh * kw * cin
    m = n * oh * ow
    a = cols.reshape(m, k)                         # bf16, K kept full-extent
    tm = _pick_tile(m)
    out_dtype = jnp.float32 if act == "sigmoid" else jnp.bfloat16

    y = pl.pallas_call(
        functools.partial(_mm_act_kernel, act=act, slope=LRELU_SLOPE),
        grid=(m // tm,),
        in_specs=[
            pl.BlockSpec((tm, k), lambda i: (i, 0)),
            pl.BlockSpec((k, cout_p), lambda i: (0, 0)),
            pl.BlockSpec((1, cout_p), lambda i: (0, 0)),
        ],
        out_specs=pl.BlockSpec((tm, cout_p), lambda i: (i, 0)),
        out_shape=jax.ShapeDtypeStruct((m, cout_p), out_dtype),
        compiler_params=pltpu.CompilerParams(
            dimension_semantics=("parallel",),
            vmem_limit_bytes=_VMEM_LIMIT),
    )(a, w_mat, b_pad)
    return y[:, :cout].reshape(n, oh, ow, cout)


def _fused_head(x, layer4, layer5):
    # Layers 4 (5x5 s2 p2 conv + LeakyReLU) and 5 (4x4 conv over the whole
    # remaining map + sigmoid) fused into one kernel, grid over batch.
    w4, b4, u4 = layer4
    w5, b5, u5 = layer5
    n = x.shape[0]
    c4out, c3, kh, kw = w4.shape
    c4p = max(128, _round_up(c4out, 128))
    w4_mat = _prep_conv_weight(w4, u4, c4p)
    b4_pad = jnp.pad(b4, (0, c4p - c4out)).reshape(1, c4p).astype(jnp.float32)

    cols, oh, ow = _im2col(x, kh, kw, 2, 2)
    k4 = kh * kw * c3
    s4 = oh * ow
    a4 = cols.reshape(n, s4, k4)                   # (N, 16, K4) bf16

    sigma5 = _sn_sigma(w5, u5)
    w5_mat = jnp.transpose(w5[0], (1, 2, 0)).reshape(s4, c4out) * (1.0 / sigma5)
    w5_mat = jnp.pad(w5_mat, ((0, 0), (0, c4p - c4out))).astype(jnp.float32)
    b5_arr = b5.reshape(1, 1).astype(jnp.float32)

    out = pl.pallas_call(
        functools.partial(_head_kernel, slope=LRELU_SLOPE),
        grid=(n,),
        in_specs=[
            pl.BlockSpec((1, s4, k4), lambda i: (i, 0, 0)),
            pl.BlockSpec((k4, c4p), lambda i: (0, 0)),
            pl.BlockSpec((1, c4p), lambda i: (0, 0)),
            pl.BlockSpec((s4, c4p), lambda i: (0, 0)),
            pl.BlockSpec((1, 1), lambda i: (0, 0)),
        ],
        out_specs=pl.BlockSpec((1, 1, 1), lambda i: (i, 0, 0)),
        out_shape=jax.ShapeDtypeStruct((n, 1, 1), jnp.float32),
        compiler_params=pltpu.CompilerParams(
            dimension_semantics=("parallel",),
            vmem_limit_bytes=_VMEM_LIMIT),
    )(a4, w4_mat, b4_pad, w5_mat, b5_arr)
    return out.reshape(-1)


def netd2_forward(x_nchw, params):
    # PyTorch forward of _netD2:
    #   SNConv2d(nc,ndf,5,2,2)+LReLU(0.2) -> SNConv2d(ndf,2ndf,5,2,2)+LReLU
    #   -> SNConv2d(2ndf,4ndf,5,2,2)+LReLU -> SNConv2d(4ndf,8ndf,5,2,2)+LReLU
    #   -> SNConv2d(8ndf,1,4)+Sigmoid -> view(-1,1).squeeze(1)
    x = jnp.transpose(x_nchw, (0, 2, 3, 1)).astype(jnp.bfloat16)   # NCHW->NHWC
    (w1, b1, u1), (w2, b2, u2), (w3, b3, u3), (w4, b4, u4), (w5, b5, u5) = params
    x = _conv_act_layer(x, w1, b1, u1, stride=2, pad=2, act="lrelu")
    x = _conv_act_layer(x, w2, b2, u2, stride=2, pad=2, act="lrelu")
    x = _conv_act_layer(x, w3, b3, u3, stride=2, pad=2, act="lrelu")

    h3 = x.shape[1]
    oh4 = (h3 + 2 * 2 - 5) // 2 + 1
    kh5, kw5 = w5.shape[2], w5.shape[3]
    if w5.shape[0] == 1 and (oh4, oh4) == (kh5, kw5):
        # canonical 64x64 input: the final conv consumes the whole map.
        return _fused_head(x, (w4, b4, u4), (w5, b5, u5))

    # generic (unfused) tail for non-canonical spatial sizes
    x = _conv_act_layer(x, w4, b4, u4, stride=2, pad=2, act="lrelu")
    x = _conv_act_layer(x, w5, b5, u5, stride=1, pad=0, act="sigmoid")
    return x.reshape(-1).astype(jnp.float32)


def init_params(key, nc, ndf):
    layer_shapes = [
        (ndf, nc, 5, 5),           # SNConv2d(nc,    ndf,   5, 2, 2)
        (ndf * 2, ndf, 5, 5),      # SNConv2d(ndf,   2ndf,  5, 2, 2)
        (ndf * 4, ndf * 2, 5, 5),  # SNConv2d(2ndf,  4ndf,  5, 2, 2)
        (ndf * 8, ndf * 4, 5, 5),  # SNConv2d(4ndf,  8ndf,  5, 2, 2)
        (1, ndf * 8, 4, 4),        # SNConv2d(8ndf,  1,     4)
    ]
    params = []
    for i, s in enumerate(layer_shapes):
        k_w, k_b, k_u = jax.random.split(jax.random.fold_in(key, i), 3)
        w = 0.02 * jax.random.normal(k_w, s, dtype=jnp.float32)
        b = 0.01 * jax.random.normal(k_b, (s[0],), dtype=jnp.float32)
        u = jax.random.normal(k_u, (1, s[0]), dtype=jnp.float32)
        params.append((w, b, u))
    return params


if __name__ == "__main__":
    nc, ndf = 3, 8
    batch, spatial = 2, 64   # 64x64 is the canonical DCGAN-style input size
    key = jax.random.PRNGKey(0)
    k_x, k_p = jax.random.split(key)
    x = jax.random.normal(k_x, (batch, nc, spatial, spatial), dtype=jnp.float32)
    params = init_params(k_p, nc, ndf)

    out = jax.jit(netd2_forward)(x, params)
    jax.block_until_ready(out)
    assert out.shape == (batch,), out.shape
    assert bool(jnp.all((out >= 0.0) & (out <= 1.0)))
    print("KERNEL_OK")
</pallas_src>

<mosaic_0001>
module attributes {stable_mosaic.version = 11 : i64} {
  func.func @_mm_act_kernel(%arg0: i32, %arg1: memref<1024x75xbf16, #tpu.memory_space<vmem>>, %arg2: memref<75x128xbf16, #tpu.memory_space<vmem>>, %arg3: memref<1x128xf32, #tpu.memory_space<vmem>>, %arg4: memref<1024x128xbf16, #tpu.memory_space<vmem>>) attributes {dimension_semantics = [#tpu.dimension_semantics<parallel>], iteration_bounds = array<i64: 2>, scalar_prefetch = 0 : i64, scratch_operands = 0 : i64, tpu.core_type = #tpu.core_type<tc>, window_params = [{transform_indices = @transform_0, window_bounds = array<i64: 1024, 75>}, {pipeline_mode = #tpu.pipeline_mode<synchronous>, transform_indices = @transform_1, window_bounds = array<i64: 75, 128>}, {pipeline_mode = #tpu.pipeline_mode<synchronous>, transform_indices = @transform_2, window_bounds = array<i64: 1, 128>}, {transform_indices = @transform_3, window_bounds = array<i64: 1024, 128>}]} {
    %c0 = arith.constant 0 : index
    %c0_0 = arith.constant 0 : index
    %0 = vector.load %arg1[%c0, %c0_0] : memref<1024x75xbf16, #tpu.memory_space<vmem>>, vector<1024x75xbf16>
    %c0_1 = arith.constant 0 : index
    %c0_2 = arith.constant 0 : index
    %1 = vector.load %arg2[%c0_1, %c0_2] : memref<75x128xbf16, #tpu.memory_space<vmem>>, vector<75x128xbf16>
    %cst = arith.constant dense<0.000000e+00> : vector<1024x128xf32>
    %2 = tpu.matmul %0, %1, %cst {dimension_numbers = #tpu.dot_dimension_numbers<[1], [0], [0], [1], [0, 0, 1, 1], [], []>} : vector<1024x75xbf16>, vector<75x128xbf16>, vector<1024x128xf32> -> vector<1024x128xf32>
    %c0_3 = arith.constant 0 : index
    %c0_4 = arith.constant 0 : index
    %3 = vector.load %arg3[%c0_3, %c0_4] : memref<1x128xf32, #tpu.memory_space<vmem>>, vector<1x128xf32>
    %4 = vector.broadcast %3 : vector<1x128xf32> to vector<1024x128xf32>
    %5 = arith.addf %2, %4 : vector<1024x128xf32>
    %cst_5 = arith.constant 2.000000e-01 : f32
    %6 = vector.broadcast %cst_5 : f32 to vector<1024x128xf32>
    %7 = arith.mulf %6, %5 : vector<1024x128xf32>
    %8 = arith.maximumf %5, %7 : vector<1024x128xf32>
    %9 = arith.truncf %8 : vector<1024x128xf32> to vector<1024x128xbf16>
    %c0_6 = arith.constant 0 : index
    %c0_7 = arith.constant 0 : index
    %10 = vector.load %arg4[%c0_6, %c0_7] : memref<1024x128xbf16, #tpu.memory_space<vmem>>, vector<1024x128xbf16>
    tpu.vector_store %arg4[%c0_6, %c0_7], %9 {strides = array<i32>} : memref<1024x128xbf16, #tpu.memory_space<vmem>>, vector<1024x128xbf16>,
    return
  }
  func.func @transform_0(%arg0: i32) -> (i32, i32) {
    %c0_i32 = arith.constant 0 : i32
    %c0_i32_0 = arith.constant 0 : i32
    return %arg0, %c0_i32 : i32, i32
  }
  func.func @transform_1(%arg0: i32) -> (i32, i32) {
    %c0_i32 = arith.constant 0 : i32
    %c0_i32_0 = arith.constant 0 : i32
    %c0_i32_1 = arith.constant 0 : i32
    return %c0_i32, %c0_i32_0 : i32, i32
  }
  func.func @transform_2(%arg0: i32) -> (i32, i32) {
    %c0_i32 = arith.constant 0 : i32
    %c0_i32_0 = arith.constant 0 : i32
    %c0_i32_1 = arith.constant 0 : i32
    return %c0_i32, %c0_i32_0 : i32, i32
  }
  func.func @transform_3(%arg0: i32) -> (i32, i32) {
    %c0_i32 = arith.constant 0 : i32
    %c0_i32_0 = arith.constant 0 : i32
    return %arg0, %c0_i32 : i32, i32
  }
}

module attributes {stable_mosaic.version = 11 : i64} {
  func.func @_mm_act_kernel(%arg0: i32, %arg1: memref<512x200xbf16, #tpu.memory_space<vmem>>, %arg2: memref<200x128xbf16, #tpu.memory_space<vmem>>, %arg3: memref<1x128xf32, #tpu.memory_space<vmem>>, %arg4: memref<512x128xbf16, #tpu.memory_space<vmem>>) attributes {dimension_semantics = [#tpu.dimension_semantics<parallel>], iteration_bounds = array<i64: 1>, scalar_prefetch = 0 : i64, scratch_operands = 0 : i64, tpu.core_type = #tpu.core_type<tc>, window_params = [{transform_indices = @transform_0, window_bounds = array<i64: 512, 200>}, {pipeline_mode = #tpu.pipeline_mode<synchronous>, transform_indices = @transform_1, window_bounds = array<i64: 200, 128>}, {pipeline_mode = #tpu.pipeline_mode<synchronous>, transform_indices = @transform_2, window_bounds = array<i64: 1, 128>}, {transform_indices = @transform_3, window_bounds = array<i64: 512, 128>}]} {
    %c0 = arith.constant 0 : index
    %c0_0 = arith.constant 0 : index
    %0 = vector.load %arg1[%c0, %c0_0] : memref<512x200xbf16, #tpu.memory_space<vmem>>, vector<512x200xbf16>
    %c0_1 = arith.constant 0 : index
    %c0_2 = arith.constant 0 : index
    %1 = vector.load %arg2[%c0_1, %c0_2] : memref<200x128xbf16, #tpu.memory_space<vmem>>, vector<200x128xbf16>
    %cst = arith.constant dense<0.000000e+00> : vector<512x128xf32>
    %2 = tpu.matmul %0, %1, %cst {dimension_numbers = #tpu.dot_dimension_numbers<[1], [0], [0], [1], [0, 0, 1, 1], [], []>} : vector<512x200xbf16>, vector<200x128xbf16>, vector<512x128xf32> -> vector<512x128xf32>
    %c0_3 = arith.constant 0 : index
    %c0_4 = arith.constant 0 : index
    %3 = vector.load %arg3[%c0_3, %c0_4] : memref<1x128xf32, #tpu.memory_space<vmem>>, vector<1x128xf32>
    %4 = vector.broadcast %3 : vector<1x128xf32> to vector<512x128xf32>
    %5 = arith.addf %2, %4 : vector<512x128xf32>
    %cst_5 = arith.constant 2.000000e-01 : f32
    %6 = vector.broadcast %cst_5 : f32 to vector<512x128xf32>
    %7 = arith.mulf %6, %5 : vector<512x128xf32>
    %8 = arith.maximumf %5, %7 : vector<512x128xf32>
    %9 = arith.truncf %8 : vector<512x128xf32> to vector<512x128xbf16>
    %c0_6 = arith.constant 0 : index
    %c0_7 = arith.constant 0 : index
    %10 = vector.load %arg4[%c0_6, %c0_7] : memref<512x128xbf16, #tpu.memory_space<vmem>>, vector<512x128xbf16>
    tpu.vector_store %arg4[%c0_6, %c0_7], %9 {strides = array<i32>} : memref<512x128xbf16, #tpu.memory_space<vmem>>, vector<512x128xbf16>,
    return
  }
  func.func @transform_0(%arg0: i32) -> (i32, i32) {
    %c0_i32 = arith.constant 0 : i32
    %c0_i32_0 = arith.constant 0 : i32
    return %arg0, %c0_i32 : i32, i32
  }
  func.func @transform_1(%arg0: i32) -> (i32, i32) {
    %c0_i32 = arith.constant 0 : i32
    %c0_i32_0 = arith.constant 0 : i32
    %c0_i32_1 = arith.constant 0 : i32
    return %c0_i32, %c0_i32_0 : i32, i32
  }
  func.func @transform_2(%arg0: i32) -> (i32, i32) {
    %c0_i32 = arith.constant 0 : i32
    %c0_i32_0 = arith.constant 0 : i32
    %c0_i32_1 = arith.constant 0 : i32
    return %c0_i32, %c0_i32_0 : i32, i32
  }
  func.func @transform_3(%arg0: i32) -> (i32, i32) {
    %c0_i32 = arith.constant 0 : i32
    %c0_i32_0 = arith.constant 0 : i32
    return %arg0, %c0_i32 : i32, i32
  }
}

module attributes {stable_mosaic.version = 11 : i64} {
  func.func @_mm_act_kernel(%arg0: i32, %arg1: memref<128x400xbf16, #tpu.memory_space<vmem>>, %arg2: memref<400x128xbf16, #tpu.memory_space<vmem>>, %arg3: memref<1x128xf32, #tpu.memory_space<vmem>>, %arg4: memref<128x128xbf16, #tpu.memory_space<vmem>>) attributes {dimension_semantics = [#tpu.dimension_semantics<parallel>], iteration_bounds = array<i64: 1>, scalar_prefetch = 0 : i64, scratch_operands = 0 : i64, tpu.core_type = #tpu.core_type<tc>, window_params = [{transform_indices = @transform_0, window_bounds = array<i64: 128, 400>}, {pipeline_mode = #tpu.pipeline_mode<synchronous>, transform_indices = @transform_1, window_bounds = array<i64: 400, 128>}, {pipeline_mode = #tpu.pipeline_mode<synchronous>, transform_indices = @transform_2, window_bounds = array<i64: 1, 128>}, {transform_indices = @transform_3, window_bounds = array<i64: 128, 128>}]} {
    %c0 = arith.constant 0 : index
    %c0_0 = arith.constant 0 : index
    %0 = vector.load %arg1[%c0, %c0_0] : memref<128x400xbf16, #tpu.memory_space<vmem>>, vector<128x400xbf16>
    %c0_1 = arith.constant 0 : index
    %c0_2 = arith.constant 0 : index
    %1 = vector.load %arg2[%c0_1, %c0_2] : memref<400x128xbf16, #tpu.memory_space<vmem>>, vector<400x128xbf16>
    %cst = arith.constant dense<0.000000e+00> : vector<128x128xf32>
    %2 = tpu.matmul %0, %1, %cst {dimension_numbers = #tpu.dot_dimension_numbers<[1], [0], [0], [1], [0, 0, 1, 1], [], []>} : vector<128x400xbf16>, vector<400x128xbf16>, vector<128x128xf32> -> vector<128x128xf32>
    %c0_3 = arith.constant 0 : index
    %c0_4 = arith.constant 0 : index
    %3 = vector.load %arg3[%c0_3, %c0_4] : memref<1x128xf32, #tpu.memory_space<vmem>>, vector<1x128xf32>
    %4 = vector.broadcast %3 : vector<1x128xf32> to vector<128x128xf32>
    %5 = arith.addf %2, %4 : vector<128x128xf32>
    %cst_5 = arith.constant 2.000000e-01 : f32
    %6 = vector.broadcast %cst_5 : f32 to vector<128x128xf32>
    %7 = arith.mulf %6, %5 : vector<128x128xf32>
    %8 = arith.maximumf %5, %7 : vector<128x128xf32>
    %9 = arith.truncf %8 : vector<128x128xf32> to vector<128x128xbf16>
    %c0_6 = arith.constant 0 : index
    %c0_7 = arith.constant 0 : index
    %10 = vector.load %arg4[%c0_6, %c0_7] : memref<128x128xbf16, #tpu.memory_space<vmem>>, vector<128x128xbf16>
    tpu.vector_store %arg4[%c0_6, %c0_7], %9 {strides = array<i32>} : memref<128x128xbf16, #tpu.memory_space<vmem>>, vector<128x128xbf16>,
    return
  }
  func.func @transform_0(%arg0: i32) -> (i32, i32) {
    %c0_i32 = arith.constant 0 : i32
    %c0_i32_0 = arith.constant 0 : i32
    return %arg0, %c0_i32 : i32, i32
  }
  func.func @transform_1(%arg0: i32) -> (i32, i32) {
    %c0_i32 = arith.constant 0 : i32
    %c0_i32_0 = arith.constant 0 : i32
    %c0_i32_1 = arith.constant 0 : i32
    return %c0_i32, %c0_i32_0 : i32, i32
  }
  func.func @transform_2(%arg0: i32) -> (i32, i32) {
    %c0_i32 = arith.constant 0 : i32
    %c0_i32_0 = arith.constant 0 : i32
    %c0_i32_1 = arith.constant 0 : i32
    return %c0_i32, %c0_i32_0 : i32, i32
  }
  func.func @transform_3(%arg0: i32) -> (i32, i32) {
    %c0_i32 = arith.constant 0 : i32
    %c0_i32_0 = arith.constant 0 : i32
    return %arg0, %c0_i32 : i32, i32
  }
}

module attributes {stable_mosaic.version = 11 : i64} {
  func.func @_head_kernel(%arg0: i32, %arg1: memref<1x16x800xbf16, #tpu.memory_space<vmem>>, %arg2: memref<800x128xbf16, #tpu.memory_space<vmem>>, %arg3: memref<1x128xf32, #tpu.memory_space<vmem>>, %arg4: memref<16x128xf32, #tpu.memory_space<vmem>>, %arg5: memref<1x1xf32, #tpu.memory_space<vmem>>, %arg6: memref<1x1x1xf32, #tpu.memory_space<vmem>>) attributes {dimension_semantics = [#tpu.dimension_semantics<parallel>], iteration_bounds = array<i64: 2>, scalar_prefetch = 0 : i64, scratch_operands = 0 : i64, tpu.core_type = #tpu.core_type<tc>, window_params = [{transform_indices = @transform_0, window_bounds = array<i64: 1, 16, 800>}, {pipeline_mode = #tpu.pipeline_mode<synchronous>, transform_indices = @transform_1, window_bounds = array<i64: 800, 128>}, {pipeline_mode = #tpu.pipeline_mode<synchronous>, transform_indices = @transform_2, window_bounds = array<i64: 1, 128>}, {pipeline_mode = #tpu.pipeline_mode<synchronous>, transform_indices = @transform_3, window_bounds = array<i64: 16, 128>}, {pipeline_mode = #tpu.pipeline_mode<synchronous>, transform_indices = @transform_4, window_bounds = array<i64: 1, 1>}, {transform_indices = @transform_5, window_bounds = array<i64: 1, 1, 1>}]} {
    %c0 = arith.constant 0 : index
    %c0_0 = arith.constant 0 : index
    %c0_1 = arith.constant 0 : index
    %0 = vector.load %arg1[%c0, %c0_0, %c0_1] : memref<1x16x800xbf16, #tpu.memory_space<vmem>>, vector<1x16x800xbf16>
    %1 = vector.shape_cast %0 : vector<1x16x800xbf16> to vector<16x800xbf16>
    %c0_2 = arith.constant 0 : index
    %c0_3 = arith.constant 0 : index
    %2 = vector.load %arg2[%c0_2, %c0_3] : memref<800x128xbf16, #tpu.memory_space<vmem>>, vector<800x128xbf16>
    %cst = arith.constant dense<0.000000e+00> : vector<16x128xf32>
    %3 = tpu.matmul %1, %2, %cst {dimension_numbers = #tpu.dot_dimension_numbers<[1], [0], [0], [1], [0, 0, 1, 1], [], []>} : vector<16x800xbf16>, vector<800x128xbf16>, vector<16x128xf32> -> vector<16x128xf32>
    %c0_4 = arith.constant 0 : index
    %c0_5 = arith.constant 0 : index
    %4 = vector.load %arg3[%c0_4, %c0_5] : memref<1x128xf32, #tpu.memory_space<vmem>>, vector<1x128xf32>
    %5 = vector.broadcast %4 : vector<1x128xf32> to vector<16x128xf32>
    %6 = arith.addf %3, %5 : vector<16x128xf32>
    %cst_6 = arith.constant 2.000000e-01 : f32
    %7 = vector.broadcast %cst_6 : f32 to vector<16x128xf32>
    %8 = arith.mulf %7, %6 : vector<16x128xf32>
    %9 = arith.maximumf %6, %8 : vector<16x128xf32>
    %c0_7 = arith.constant 0 : index
    %c0_8 = arith.constant 0 : index
    %10 = vector.load %arg4[%c0_7, %c0_8] : memref<16x128xf32, #tpu.memory_space<vmem>>, vector<16x128xf32>
    %11 = arith.mulf %9, %10 : vector<16x128xf32>
    %cst_9 = arith.constant dense<0.000000e+00> : vector<16xf32>
    %12 = vector.multi_reduction <add>, %11, %cst_9 [1] : vector<16x128xf32> to vector<16xf32>
    %13 = vector.shape_cast %12 : vector<16xf32> to vector<16x1xf32>
    %cst_10 = arith.constant dense<0.000000e+00> : vector<1xf32>
    %14 = vector.multi_reduction <add>, %13, %cst_10 [0] : vector<16x1xf32> to vector<1xf32>
    %15 = vector.shape_cast %14 : vector<1xf32> to vector<1x1xf32>
    %c0_11 = arith.constant 0 : index
    %c0_12 = arith.constant 0 : index
    %16 = vector.load %arg5[%c0_11, %c0_12] : memref<1x1xf32, #tpu.memory_space<vmem>>, vector<1x1xf32>
    %17 = arith.addf %15, %16 : vector<1x1xf32>
    %cst_13 = arith.constant 0.000000e+00 : f32
    %18 = vector.broadcast %cst_13 : f32 to vector<1x1xf32>
    %19 = arith.subf %18, %17 : vector<1x1xf32>
    %20 = math.exp %19 : vector<1x1xf32>
    %cst_14 = arith.constant 1.000000e+00 : f32
    %21 = vector.broadcast %cst_14 : f32 to vector<1x1xf32>
    %22 = arith.addf %21, %20 : vector<1x1xf32>
    %cst_15 = arith.constant 1.000000e+00 : f32
    %23 = vector.broadcast %cst_15 : f32 to vector<1x1xf32>
    %24 = arith.divf %23, %22 : vector<1x1xf32>
    %25 = vector.shape_cast %24 : vector<1x1xf32> to vector<1x1x1xf32>
    %c0_16 = arith.constant 0 : index
    %c0_17 = arith.constant 0 : index
    %c0_18 = arith.constant 0 : index
    %26 = vector.load %arg6[%c0_16, %c0_17, %c0_18] : memref<1x1x1xf32, #tpu.memory_space<vmem>>, vector<1x1x1xf32>
    tpu.vector_store %arg6[%c0_16, %c0_17, %c0_18], %25 {strides = array<i32>} : memref<1x1x1xf32, #tpu.memory_space<vmem>>, vector<1x1x1xf32>,
    return
  }
  func.func @transform_0(%arg0: i32) -> (i32, i32, i32) {
    %c0_i32 = arith.constant 0 : i32
    %c0_i32_0 = arith.constant 0 : i32
    %c0_i32_1 = arith.constant 0 : i32
    return %arg0, %c0_i32, %c0_i32_0 : i32, i32, i32
  }
  func.func @transform_1(%arg0: i32) -> (i32, i32) {
    %c0_i32 = arith.constant 0 : i32
    %c0_i32_0 = arith.constant 0 : i32
    %c0_i32_1 = arith.constant 0 : i32
    return %c0_i32, %c0_i32_0 : i32, i32
  }
  func.func @transform_2(%arg0: i32) -> (i32, i32) {
    %c0_i32 = arith.constant 0 : i32
    %c0_i32_0 = arith.constant 0 : i32
    %c0_i32_1 = arith.constant 0 : i32
    return %c0_i32, %c0_i32_0 : i32, i32
  }
  func.func @transform_3(%arg0: i32) -> (i32, i32) {
    %c0_i32 = arith.constant 0 : i32
    %c0_i32_0 = arith.constant 0 : i32
    %c0_i32_1 = arith.constant 0 : i32
    return %c0_i32, %c0_i32_0 : i32, i32
  }
  func.func @transform_4(%arg0: i32) -> (i32, i32) {
    %c0_i32 = arith.constant 0 : i32
    %c0_i32_0 = arith.constant 0 : i32
    %c0_i32_1 = arith.constant 0 : i32
    return %c0_i32, %c0_i32_0 : i32, i32
  }
  func.func @transform_5(%arg0: i32) -> (i32, i32, i32) {
    %c0_i32 = arith.constant 0 : i32
    %c0_i32_0 = arith.constant 0 : i32
    %c0_i32_1 = arith.constant 0 : i32
    return %arg0, %c0_i32, %c0_i32_0 : i32, i32, i32
  }
}

</mosaic_0001>

<llo_original>
// kernel: netd2_forward.4
$region0: #{netd2_forward.4}
  #allocation0 [shape = 'u32[]', space=smem, size = 0x4, offset = 0x4, fixed_abs, tag = 'smem constant byte address 0x4 - core index']
  #allocation1 [shape = 'u32[144,128]{1,0:T(1,128)}', space=vmem, size = 0x12000, scoped, tag = 'internal scratch']
  %s0 = inlined_call_operand.vmem [shape: bf16[2048,75], index: 0, kind: input, shape index: {}]
  %s1 = inlined_call_operand.vmem [shape: bf16[75,128], index: 1, kind: input, shape index: {}]
  %s2 = inlined_call_operand.vmem [shape: f32[1,128], index: 2, kind: input, shape index: {}]
  %s3 = inlined_call_operand.vmem [shape: bf16[2048,128], index: 3, kind: output, shape index: {}]
  %s4 = sld [smem:[#allocation0]]
  $region45: #{netd2_forward.4} parent=0
    _
  %s6 = ssub.s32 1, %s4
  %s7 = scalar_select 0, %s6, %s4
  loop: start=0, step=1, limit=4
  $region2: #{netd2_forward.4} parent=0 // loop_pre_header
    _
  $region3: #{netd2_forward.4} parent=0 // loop_header
    %s9 = sphi 0, %s13
    %p10 = scmp.ge.s32.totalorder %s9, 4
    %s19 = sphi 0, %s21
    %s22 = sphi 0, %s19
    %s23 = sphi 0, %s22
    %s39 = sphi 0, %s23
    %s43 = sphi 0, %s43
    %s45 = sphi 0, %s43
    %s46 = sphi 0, %s45
    %s60 = sphi 0, %s46
    %s64 = sphi 0, %s64
    %s66 = sphi 0, %s64
    %s67 = sphi 0, %s66
    %s81 = sphi 0, %s67
    %s87 = sphi 0, %s89
    %s90 = sphi 0, %s87
    %s91 = sphi 0, %s90
    %s107 = sphi 0, %s91
  $region4: #{netd2_forward.4} parent=0 // loop_header_branch
    %12 = sbr.rel (%p10) target = $region8
  $region5: #{netd2_forward.4} parent=0 // loop_body
    %s14 = ssub.s32 %s9, 1
    %s15 = ssub.s32 %s9, 2
    %s16 = sadd.s32 %s9, 1
    %s17 = ssub.s32 %s9, %s16
    %p18 = scmp.eq.s32.totalorder %s17, 0
    %s20 = sadd.s32 %s19, 1
    %s21 = scalar_select %p18, %s19, %s20
    %p24 = pneg %p18
    %p25 = scmp.eq.s32.totalorder %s9, 1
    %p26 = por %p24, %p25
    %p27 = scmp.ne.s32.totalorder %s19, %s22
    %p28 = scmp.eq.s32.totalorder %s9, 0
    %p29 = por %p27, %p28
    %p30 = scmp.ne.s32.totalorder %s19, %s22
    %p31 = scmp.eq.s32.totalorder %s14, 1
    %p32 = por %p30, %p31
    %p33 = scmp.ne.s32.totalorder %s22, %s23
    %p34 = scmp.eq.s32.totalorder %s14, 0
    %p35 = por %p33, %p34
    %p36 = scmp.ne.s32.totalorder %s22, %s23
    %p37 = scmp.eq.s32.totalorder %s15, 1
    %p38 = por %p36, %p37
    %p40 = scmp.ne.s32.totalorder %s23, %s39
    %p41 = scmp.eq.s32.totalorder %s15, 0
    %p42 = por %p40, %p41
    %s44 = sadd.s32 %s43, 1
    %p47 = scmp.eq.s32.totalorder %s9, 1
    %p48 = scmp.ne.s32.totalorder %s43, %s45
    %p49 = scmp.eq.s32.totalorder %s9, 0
    %p50 = por %p48, %p49
    %p51 = scmp.ne.s32.totalorder %s43, %s45
    %p52 = scmp.eq.s32.totalorder %s14, 1
    %p53 = por %p51, %p52
    %p54 = scmp.ne.s32.totalorder %s45, %s46
    %p55 = scmp.eq.s32.totalorder %s14, 0
    %p56 = por %p54, %p55
    %p57 = scmp.ne.s32.totalorder %s45, %s46
    %p58 = scmp.eq.s32.totalorder %s15, 1
    %p59 = por %p57, %p58
    %p61 = scmp.ne.s32.totalorder %s46, %s60
    %p62 = scmp.eq.s32.totalorder %s15, 0
    %p63 = por %p61, %p62
    %s65 = sadd.s32 %s64, 1
    %p68 = scmp.eq.s32.totalorder %s9, 1
    %p69 = scmp.ne.s32.totalorder %s64, %s66
    %p70 = scmp.eq.s32.totalorder %s9, 0
    %p71 = por %p69, %p70
    %p72 = scmp.ne.s32.totalorder %s64, %s66
    %p73 = scmp.eq.s32.totalorder %s14, 1
    %p74 = por %p72, %p73
    %p75 = scmp.ne.s32.totalorder %s66, %s67
    %p76 = scmp.eq.s32.totalorder %s14, 0
    %p77 = por %p75, %p76
    %p78 = scmp.ne.s32.totalorder %s66, %s67
    %p79 = scmp.eq.s32.totalorder %s15, 1
    %p80 = por %p78, %p79
    %p82 = scmp.ne.s32.totalorder %s67, %s81
    %p83 = scmp.eq.s32.totalorder %s15, 0
    %p84 = por %p82, %p83
    %s85 = ssub.s32 %s9, %s16
    %p86 = scmp.eq.s32.totalorder %s85, 0
    %s88 = sadd.s32 %s87, 1
    %s89 = scalar_select %p86, %s87, %s88
    %p92 = pneg %p86
    %p93 = scmp.eq.s32.totalorder %s9, 1
    %p94 = por %p92, %p93
    %p95 = scmp.ne.s32.totalorder %s87, %s90
    %p96 = scmp.eq.s32.totalorder %s9, 0
    %p97 = por %p95, %p96
    %p98 = scmp.ne.s32.totalorder %s87, %s90
    %p99 = scmp.eq.s32.totalorder %s14, 1
    %p100 = por %p98, %p99
    %p101 = scmp.ne.s32.totalorder %s90, %s91
    %p102 = scmp.eq.s32.totalorder %s14, 0
    %p103 = por %p101, %p102
    %p104 = scmp.ne.s32.totalorder %s90, %s91
    %p105 = scmp.eq.s32.totalorder %s15, 1
    %p106 = por %p104, %p105
    %p108 = scmp.ne.s32.totalorder %s91, %s107
    %p109 = scmp.eq.s32.totalorder %s15, 0
    %p110 = por %p108, %p109
    %p111 = scmp.le.s32.totalorder 1, %s9
    %p112 = scmp.lt.s32.totalorder %s9, 3
    %p113 = pnand %p111, %p112
    %p114 = pneg %p113
    // Predicated region
    $region9: #{netd2_forward.4} parent=5 // pred_check
      _
    $region10: #{netd2_forward.4} parent=5 // pred_check_branch
      %116 = sbr.rel (%p113) target = $region12
    $region11: #{netd2_forward.4} parent=5 // pred_region
      %s117 = ssub.s32 %s9, 1
      // Predicated region
      $region13: #{netd2_forward.4} parent=11 // pred_check
        %p118 = pneg %p56
      $region14: #{netd2_forward.4} parent=11 // pred_check_branch
        %120 = sbr.rel (%p118) target = $region16
      $region15: #{netd2_forward.4} parent=11 // pred_region
        _
      $region16: #{netd2_forward.4} parent=11 // pred_fallthru
        _
      // Predicated region
      $region17: #{netd2_forward.4} parent=11 // pred_check
        %p121 = pneg %p77
      $region18: #{netd2_forward.4} parent=11 // pred_check_branch
        %123 = sbr.rel (%p121) target = $region20
      $region19: #{netd2_forward.4} parent=11 // pred_region
        _
      $region20: #{netd2_forward.4} parent=11 // pred_fallthru
        _
    $region12: #{netd2_forward.4} parent=5 // pred_fallthru
      _
    %p124 = scmp.lt.s32.totalorder %s9, 2
    // Predicated region
    $region21: #{netd2_forward.4} parent=5 // pred_check
      %p125 = pneg %p124
    $region22: #{netd2_forward.4} parent=5 // pred_check_branch
      %127 = sbr.rel (%p125) target = $region24
    $region23: #{netd2_forward.4} parent=5 // pred_region
      // Predicated region
      $region25: #{netd2_forward.4} parent=23 // pred_check
        %p128 = pneg %p29
      $region26: #{netd2_forward.4} parent=23 // pred_check_branch
        %130 = sbr.rel (%p128) target = $region28
      $region27: #{netd2_forward.4} parent=23 // pred_region
        %s131 = smul.u32 128, %s9
        %p132 = scmp.lt.s32.totalorder %s131, 255
        %s133 = scalar_select %p132, %s131, 255
        %s134 = smul.addr %s133, 4
        %s135 = scalar_lea.vmem %s0, %s134
        %s136 = smul.u32 128, %s9
      $region28: #{netd2_forward.4} parent=23 // pred_fallthru
        _
    $region24: #{netd2_forward.4} parent=5 // pred_fallthru
      _
    %p137 = scmp.le.s32.totalorder 1, %s9
    %p138 = scmp.lt.s32.totalorder %s9, 3
    %p139 = pnand %p137, %p138
    %p140 = pneg %p139
    // Predicated region
    $region29: #{netd2_forward.4} parent=5 // pred_check
      _
    $region30: #{netd2_forward.4} parent=5 // pred_check_branch
      %142 = sbr.rel (%p139) target = $region32
    $region31: #{netd2_forward.4} parent=5 // pred_region
      %s143 = ssub.s32 %s9, 1
      %s144 = smul.u32 128, %s14
      %p145 = scmp.lt.s32.totalorder %s144, 255
      %s146 = scalar_select %p145, %s144, 255
      %s147 = smul.addr %s146, 4
      %s148 = scalar_lea.vmem %s0, %s147
      %p149 = pneg %p35
      %p150 = pneg %p32
      %p151 = pneg %p56
      %p152 = pneg %p53
      %p153 = pneg %p77
      %p154 = pneg %p74
      %p155 = pneg %p103
      %p156 = pneg %p100
      %s157 = smul.u32 128, %s14
      %p158 = scmp.lt.s32.totalorder %s157, 255
      %s159 = scalar_select %p158, %s157, 255
      %s160 = smul.addr %s159, 4
      %s161 = scalar_lea.vmem %s3, %s160
      %s162 = smul.u32 128, %s14
      %p163 = scmp.lt.s32.totalorder %s162, 255
      %s164 = scalar_select %p163, %s162, 255
      %s165 = smul.addr %s164, 4
      %s166 = scalar_lea.vmem %s0, %s165
      %s167 = smul.u32 128, %s14
      %s168 = smul.u32 128, %s14
      %p169 = scmp.lt.s32.totalorder %s168, 255
      %s170 = scalar_select %p169, %s168, 255
      %s171 = smul.addr %s170, 4
      %s172 = scalar_lea.vmem %s3, %s171
      %s173 = smul.u32 128, %s14
      %v175 = vld [vmem:[%s166] sm:$0xf]
      %v176 = vld [vmem:[%s166 + $0x4] sm:$0xf]
      %v177 = vld [vmem:[%s166 + $0x8] sm:$0xf]
      %v178 = vld [vmem:[%s166 + $0xc] sm:$0xf]
      %v179 = vld [vmem:[%s166 + $0x10] sm:$0xf]
      %v180 = vld [vmem:[%s166 + $0x14] sm:$0xf]
      %v181 = vld [vmem:[%s166 + $0x18] sm:$0xf]
      %v182 = vld [vmem:[%s166 + $0x1c] sm:$0xf]
      %v183 = vld [vmem:[%s166 + $0x20] sm:$0xf]
      %v184 = vld [vmem:[%s166 + $0x24] sm:$0xf]
      %v185 = vld [vmem:[%s166 + $0x28] sm:$0xf]
      %v186 = vld [vmem:[%s166 + $0x2c] sm:$0xf]
      %v187 = vld [vmem:[%s166 + $0x30] sm:$0xf]
      %v188 = vld [vmem:[%s166 + $0x34] sm:$0xf]
      %v189 = vld [vmem:[%s166 + $0x38] sm:$0xf]
      %v190 = vld [vmem:[%s166 + $0x3c] sm:$0xf]
      %v191 = vld [vmem:[%s166 + $0x40] sm:$0xf]
      %v192 = vld [vmem:[%s166 + $0x44] sm:$0xf]
      %v193 = vld [vmem:[%s166 + $0x48] sm:$0xf]
      %v194 = vld [vmem:[%s166 + $0x4c] sm:$0xf]
      %v195 = vld [vmem:[%s166 + $0x50] sm:$0xf]
      %v196 = vld [vmem:[%s166 + $0x54] sm:$0xf]
      %v197 = vld [vmem:[%s166 + $0x58] sm:$0xf]
      %v198 = vld [vmem:[%s166 + $0x5c] sm:$0xf]
      %v199 = vld [vmem:[%s166 + $0x60] sm:$0xf]
      %v200 = vld [vmem:[%s166 + $0x64] sm:$0xf]
      %v201 = vld [vmem:[%s166 + $0x68] sm:$0xf]
      %v202 = vld [vmem:[%s166 + $0x6c] sm:$0xf]
      %v203 = vld [vmem:[%s166 + $0x70] sm:$0xf]
      %v204 = vld [vmem:[%s166 + $0x74] sm:$0xf]
      %v205 = vld [vmem:[%s166 + $0x78] sm:$0xf]
      %v206 = vld [vmem:[%s166 + $0x7c] sm:$0xf]
      %v207 = vld [vmem:[%s166 + $0x80] sm:$0xf]
      %v208 = vld [vmem:[%s166 + $0x84] sm:$0xf]
      %v209 = vld [vmem:[%s166 + $0x88] sm:$0xf]
      %v210 = vld [vmem:[%s166 + $0x8c] sm:$0xf]
      %v211 = vld [vmem:[%s166 + $0x90] sm:$0xf]
      %v212 = vld [vmem:[%s166 + $0x94] sm:$0xf]
      %v213 = vld [vmem:[%s166 + $0x98] sm:$0xf]
      %v214 = vld [vmem:[%s166 + $0x9c] sm:$0xf]
      %v215 = vld [vmem:[%s166 + $0xa0] sm:$0xf]
      %v216 = vld [vmem:[%s166 + $0xa4] sm:$0xf]
      %v217 = vld [vmem:[%s166 + $0xa8] sm:$0xf]
      %v218 = vld [vmem:[%s166 + $0xac] sm:$0xf]
      %v219 = vld [vmem:[%s166 + $0xb0] sm:$0xf]
      %v220 = vld [vmem:[%s166 + $0xb4] sm:$0xf]
      %v221 = vld [vmem:[%s166 + $0xb8] sm:$0xf]
      %v222 = vld [vmem:[%s166 + $0xbc] sm:$0xf]
      %v223 = vld [vmem:[%s166 + $0xc0] sm:$0xf]
      %v224 = vld [vmem:[%s166 + $0xc4] sm:$0xf]
      %v225 = vld [vmem:[%s166 + $0xc8] sm:$0xf]
      %v226 = vld [vmem:[%s166 + $0xcc] sm:$0xf]
      %v227 = vld [vmem:[%s166 + $0xd0] sm:$0xf]
      %v228 = vld [vmem:[%s166 + $0xd4] sm:$0xf]
      %v229 = vld [vmem:[%s166 + $0xd8] sm:$0xf]
      %v230 = vld [vmem:[%s166 + $0xdc] sm:$0xf]
      %v231 = vld [vmem:[%s166 + $0xe0] sm:$0xf]
      %v232 = vld [vmem:[%s166 + $0xe4] sm:$0xf]
      %v233 = vld [vmem:[%s166 + $0xe8] sm:$0xf]
      %v234 = vld [vmem:[%s166 + $0xec] sm:$0xf]
      %v235 = vld [vmem:[%s166 + $0xf0] sm:$0xf]
      %v236 = vld [vmem:[%s166 + $0xf4] sm:$0xf]
      %v237 = vld [vmem:[%s166 + $0xf8] sm:$0xf]
      %v238 = vld [vmem:[%s166 + $0xfc] sm:$0xf]
      %v239 = vld [vmem:[%s166 + $0x100] sm:$0xf]
      %v240 = vld [vmem:[%s166 + $0x104] sm:$0xf]
      %v241 = vld [vmem:[%s166 + $0x108] sm:$0xf]
      %v242 = vld [vmem:[%s166 + $0x10c] sm:$0xf]
      %v243 = vld [vmem:[%s166 + $0x110] sm:$0xf]
      %v244 = vld [vmem:[%s166 + $0x114] sm:$0xf]
      %v245 = vld [vmem:[%s166 + $0x118] sm:$0xf]
      %v246 = vld [vmem:[%s166 + $0x11c] sm:$0xf]
      %v247 = vld [vmem:[%s166 + $0x120] sm:$0xf]
      %v248 = vld [vmem:[%s166 + $0x124] sm:$0xf]
      %v249 = vld [vmem:[%s166 + $0x128] sm:$0xf]
      %v250 = vld [vmem:[%s166 + $0x12c] sm:$0xf]
      %v251 = vld [vmem:[%s166 + $0x130] sm:$0xf]
      %v252 = vld [vmem:[%s166 + $0x134] sm:$0xf]
      %v253 = vld [vmem:[%s166 + $0x138] sm:$0xf]
      %v254 = vld [vmem:[%s166 + $0x13c] sm:$0xf]
      %v255 = vld [vmem:[%s166 + $0x140] sm:$0xf]
      %v256 = vld [vmem:[%s166 + $0x144] sm:$0xf]
      %v257 = vld [vmem:[%s166 + $0x148] sm:$0xf]
      %v258 = vld [vmem:[%s166 + $0x14c] sm:$0xf]
      %v259 = vld [vmem:[%s166 + $0x150] sm:$0xf]
      %v260 = vld [vmem:[%s166 + $0x154] sm:$0xf]
      %v261 = vld [vmem:[%s166 + $0x158] sm:$0xf]
      %v262 = vld [vmem:[%s166 + $0x15c] sm:$0xf]
      %v263 = vld [vmem:[%s166 + $0x160] sm:$0xf]
      %v264 = vld [vmem:[%s166 + $0x164] sm:$0xf]
      %v265 = vld [vmem:[%s166 + $0x168] sm:$0xf]
      %v266 = vld [vmem:[%s166 + $0x16c] sm:$0xf]
      %v267 = vld [vmem:[%s166 + $0x170] sm:$0xf]
      %v268 = vld [vmem:[%s166 + $0x174] sm:$0xf]
      %v269 = vld [vmem:[%s166 + $0x178] sm:$0xf]
      %v270 = vld [vmem:[%s166 + $0x17c] sm:$0xf]
      %v271 = vld [vmem:[%s166 + $0x180] sm:$0xf]
      %v272 = vld [vmem:[%s166 + $0x184] sm:$0xf]
      %v273 = vld [vmem:[%s166 + $0x188] sm:$0xf]
      %v274 = vld [vmem:[%s166 + $0x18c] sm:$0xf]
      %v275 = vld [vmem:[%s166 + $0x190] sm:$0xf]
      %v276 = vld [vmem:[%s166 + $0x194] sm:$0xf]
      %v277 = vld [vmem:[%s166 + $0x198] sm:$0xf]
      %v278 = vld [vmem:[%s166 + $0x19c] sm:$0xf]
      %v279 = vld [vmem:[%s166 + $0x1a0] sm:$0xf]
      %v280 = vld [vmem:[%s166 + $0x1a4] sm:$0xf]
      %v281 = vld [vmem:[%s166 + $0x1a8] sm:$0xf]
      %v282 = vld [vmem:[%s166 + $0x1ac] sm:$0xf]
      %v283 = vld [vmem:[%s166 + $0x1b0] sm:$0xf]
      %v284 = vld [vmem:[%s166 + $0x1b4] sm:$0xf]
      %v285 = vld [vmem:[%s166 + $0x1b8] sm:$0xf]
      %v286 = vld [vmem:[%s166 + $0x1bc] sm:$0xf]
      %v287 = vld [vmem:[%s166 + $0x1c0] sm:$0xf]
      %v288 = vld [vmem:[%s166 + $0x1c4] sm:$0xf]
      %v289 = vld [vmem:[%s166 + $0x1c8] sm:$0xf]
      %v290 = vld [vmem:[%s166 + $0x1cc] sm:$0xf]
      %v291 = vld [vmem:[%s166 + $0x1d0] sm:$0xf]
      %v292 = vld [vmem:[%s166 + $0x1d4] sm:$0xf]
      %v293 = vld [vmem:[%s166 + $0x1d8] sm:$0xf]
      %v294 = vld [vmem:[%s166 + $0x1dc] sm:$0xf]
      %v295 = vld [vmem:[%s166 + $0x1e0] sm:$0xf]
      %v296 = vld [vmem:[%s166 + $0x1e4] sm:$0xf]
      %v297 = vld [vmem:[%s166 + $0x1e8] sm:$0xf]
      %v298 = vld [vmem:[%s166 + $0x1ec] sm:$0xf]
      %v299 = vld [vmem:[%s166 + $0x1f0] sm:$0xf]
      %v300 = vld [vmem:[%s166 + $0x1f4] sm:$0xf]
      %v301 = vld [vmem:[%s166 + $0x1f8] sm:$0xf]
      %v302 = vld [vmem:[%s166 + $0x1fc] sm:$0xf]
      %v303 = vld [vmem:[%s1] sm:$0xf]
      %v304 = vld [vmem:[%s1 + $0x4] sm:$0xf]
      %v305 = vld [vmem:[%s1 + $0x8] sm:$0xf]
      %v306 = vld [vmem:[%s1 + $0xc] sm:$0xf]
      %v307 = vld [vmem:[%s1 + $0x10] sm:$0xf]
      %v308 = vld [vmem:[%s1 + $0x14] sm:$0xf]
      %v309 = vld [vmem:[%s1 + $0x18] sm:$0xf]
      %v310 = vld [vmem:[%s1 + $0x1c] sm:$0xf]
      %v311 = vld [vmem:[%s1 + $0x20] sm:$0xf]
      %v312 = vld [vmem:[%s1 + $0x24] sm:$0x3]
      %v313 = vld [vmem:[%s2] sm:$0x1]
      %v315 = vlaneseq
      %v316 = vshrl.u32 %v315, 7
      %v317 = vsub.s32 0, %v316
      %v318 = vrot.slane %v313, %v317
      %v448 = vunpack.c.l.b16 %v175
      %v449 = vunpack.c.l.b16 %v176
      %v450 = vunpack.c.l.b16 %v177
      %v451 = vunpack.c.l.b16 %v178
      %v452 = vunpack.c.l.b16 %v179
      %v453 = vunpack.c.l.b16 %v180
      %v454 = vunpack.c.l.b16 %v181
      %v455 = vunpack.c.l.b16 %v182
      %v456 = vunpack.c.l.b16 %v183
      %v457 = vunpack.c.l.b16 %v184
      %v458 = vunpack.c.l.b16 %v185
      %v459 = vunpack.c.l.b16 %v186
      %v460 = vunpack.c.l.b16 %v187
      %v461 = vunpack.c.l.b16 %v188
      %v462 = vunpack.c.l.b16 %v189
      %v463 = vunpack.c.l.b16 %v190
      %v464 = vunpack.c.l.b16 %v191
      %v465 = vunpack.c.l.b16 %v192
      %v466 = vunpack.c.l.b16 %v193
      %v467 = vunpack.c.l.b16 %v194
      %v468 = vunpack.c.l.b16 %v195
      %v469 = vunpack.c.l.b16 %v196
      %v470 = vunpack.c.l.b16 %v197
      %v471 = vunpack.c.l.b16 %v198
      %v472 = vunpack.c.l.b16 %v199
      %v473 = vunpack.c.l.b16 %v200
      %v474 = vunpack.c.l.b16 %v201
      %v475 = vunpack.c.l.b16 %v202
      %v476 = vunpack.c.l.b16 %v203
      %v477 = vunpack.c.l.b16 %v204
      %v478 = vunpack.c.l.b16 %v205
      %v479 = vunpack.c.l.b16 %v206
      %v480 = vunpack.c.l.b16 %v207
      %v481 = vunpack.c.l.b16 %v208
      %v482 = vunpack.c.l.b16 %v209
      %v483 = vunpack.c.l.b16 %v210
      %v484 = vunpack.c.l.b16 %v211
      %v485 = vunpack.c.l.b16 %v212
      %v486 = vunpack.c.l.b16 %v213
      %v487 = vunpack.c.l.b16 %v214
      %v488 = vunpack.c.l.b16 %v215
      %v489 = vunpack.c.l.b16 %v216
      %v490 = vunpack.c.l.b16 %v217
      %v491 = vunpack.c.l.b16 %v218
      %v492 = vunpack.c.l.b16 %v219
      %v493 = vunpack.c.l.b16 %v220
      %v494 = vunpack.c.l.b16 %v221
      %v495 = vunpack.c.l.b16 %v222
      %v496 = vunpack.c.l.b16 %v223
      %v497 = vunpack.c.l.b16 %v224
      %v498 = vunpack.c.l.b16 %v225
      %v499 = vunpack.c.l.b16 %v226
      %v500 = vunpack.c.l.b16 %v227
      %v501 = vunpack.c.l.b16 %v228
      %v502 = vunpack.c.l.b16 %v229
      %v503 = vunpack.c.l.b16 %v230
      %v504 = vunpack.c.l.b16 %v231
      %v505 = vunpack.c.l.b16 %v232
      %v506 = vunpack.c.l.b16 %v233
      %v507 = vunpack.c.l.b16 %v234
      %v508 = vunpack.c.l.b16 %v235
      %v509 = vunpack.c.l.b16 %v236
      %v510 = vunpack.c.l.b16 %v237
      %v511 = vunpack.c.l.b16 %v238
      %v512 = vunpack.c.l.b16 %v239
      %v513 = vunpack.c.l.b16 %v240
      %v514 = vunpack.c.l.b16 %v241
      %v515 = vunpack.c.l.b16 %v242
      %v516 = vunpack.c.l.b16 %v243
      %v517 = vunpack.c.l.b16 %v244
      %v518 = vunpack.c.l.b16 %v245
      %v519 = vunpack.c.l.b16 %v246
      %v520 = vunpack.c.l.b16 %v247
      %v521 = vunpack.c.l.b16 %v248
      %v522 = vunpack.c.l.b16 %v249
      %v523 = vunpack.c.l.b16 %v250
      %v524 = vunpack.c.l.b16 %v251
      %v525 = vunpack.c.l.b16 %v252
      %v526 = vunpack.c.l.b16 %v253
      %v527 = vunpack.c.l.b16 %v254
      %v528 = vunpack.c.l.b16 %v255
      %v529 = vunpack.c.l.b16 %v256
      %v530 = vunpack.c.l.b16 %v257
      %v531 = vunpack.c.l.b16 %v258
      %v532 = vunpack.c.l.b16 %v259
      %v533 = vunpack.c.l.b16 %v260
      %v534 = vunpack.c.l.b16 %v261
      %v535 = vunpack.c.l.b16 %v262
      %v536 = vunpack.c.l.b16 %v263
      %v537 = vunpack.c.l.b16 %v264
      %v538 = vunpack.c.l.b16 %v265
      %v539 = vunpack.c.l.b16 %v266
      %v540 = vunpack.c.l.b16 %v267
      %v541 = vunpack.c.l.b16 %v268
      %v542 = vunpack.c.l.b16 %v269
      %v543 = vunpack.c.l.b16 %v270
      %v544 = vunpack.c.l.b16 %v271
      %v545 = vunpack.c.l.b16 %v272
      %v546 = vunpack.c.l.b16 %v273
      %v547 = vunpack.c.l.b16 %v274
      %v548 = vunpack.c.l.b16 %v275
      %v549 = vunpack.c.l.b16 %v276
      %v550 = vunpack.c.l.b16 %v277
      %v551 = vunpack.c.l.b16 %v278
      %v552 = vunpack.c.l.b16 %v279
      %v553 = vunpack.c.l.b16 %v280
      %v554 = vunpack.c.l.b16 %v281
      %v555 = vunpack.c.l.b16 %v282
      %v556 = vunpack.c.l.b16 %v283
      %v557 = vunpack.c.l.b16 %v284
      %v558 = vunpack.c.l.b16 %v285
      %v559 = vunpack.c.l.b16 %v286
      %v560 = vunpack.c.l.b16 %v287
      %v561 = vunpack.c.l.b16 %v288
      %v562 = vunpack.c.l.b16 %v289
      %v563 = vunpack.c.l.b16 %v290
      %v564 = vunpack.c.l.b16 %v291
      %v565 = vunpack.c.l.b16 %v292
      %v566 = vunpack.c.l.b16 %v293
      %v567 = vunpack.c.l.b16 %v294
      %v568 = vunpack.c.l.b16 %v295
      %v569 = vunpack.c.l.b16 %v296
      %v570 = vunpack.c.l.b16 %v297
      %v571 = vunpack.c.l.b16 %v298
      %v572 = vunpack.c.l.b16 %v299
      %v573 = vunpack.c.l.b16 %v300
      %v574 = vunpack.c.l.b16 %v301
      %v575 = vunpack.c.l.b16 %v302
      %v576 = vpack.c.b16 %v449, %v448
      %v577 = vpack.c.b16 %v451, %v450
      %v578 = vpack.c.b16 %v453, %v452
      %v579 = vpack.c.b16 %v455, %v454
      %v580 = vpack.c.b16 %v457, %v456
      %v581 = vpack.c.b16 %v459, %v458
      %v582 = vpack.c.b16 %v461, %v460
      %v583 = vpack.c.b16 %v463, %v462
      %v584 = vpack.c.b16 %v465, %v464
      %v585 = vpack.c.b16 %v467, %v466
      %v586 = vpack.c.b16 %v469, %v468
      %v587 = vpack.c.b16 %v471, %v470
      %v588 = vpack.c.b16 %v473, %v472
      %v589 = vpack.c.b16 %v475, %v474
      %v590 = vpack.c.b16 %v477, %v476
      %v591 = vpack.c.b16 %v479, %v478
      %v592 = vpack.c.b16 %v481, %v480
      %v593 = vpack.c.b16 %v483, %v482
      %v594 = vpack.c.b16 %v485, %v484
      %v595 = vpack.c.b16 %v487, %v486
      %v596 = vpack.c.b16 %v489, %v488
      %v597 = vpack.c.b16 %v491, %v490
      %v598 = vpack.c.b16 %v493, %v492
      %v599 = vpack.c.b16 %v495, %v494
      %v600 = vpack.c.b16 %v497, %v496
      %v601 = vpack.c.b16 %v499, %v498
      %v602 = vpack.c.b16 %v501, %v500
      %v603 = vpack.c.b16 %v503, %v502
      %v604 = vpack.c.b16 %v505, %v504
      %v605 = vpack.c.b16 %v507, %v506
      %v606 = vpack.c.b16 %v509, %v508
      %v607 = vpack.c.b16 %v511, %v510
      %v608 = vpack.c.b16 %v513, %v512
      %v609 = vpack.c.b16 %v515, %v514
      %v610 = vpack.c.b16 %v517, %v516
      %v611 = vpack.c.b16 %v519, %v518
      %v612 = vpack.c.b16 %v521, %v520
      %v613 = vpack.c.b16 %v523, %v522
      %v614 = vpack.c.b16 %v525, %v524
      %v615 = vpack.c.b16 %v527, %v526
      %v616 = vpack.c.b16 %v529, %v528
      %v617 = vpack.c.b16 %v531, %v530
      %v618 = vpack.c.b16 %v533, %v532
      %v619 = vpack.c.b16 %v535, %v534
      %v620 = vpack.c.b16 %v537, %v536
      %v621 = vpack.c.b16 %v539, %v538
      %v622 = vpack.c.b16 %v541, %v540
      %v623 = vpack.c.b16 %v543, %v542
      %v624 = vpack.c.b16 %v545, %v544
      %v625 = vpack.c.b16 %v547, %v546
      %v626 = vpack.c.b16 %v549, %v548
      %v627 = vpack.c.b16 %v551, %v550
      %v628 = vpack.c.b16 %v553, %v552
      %v629 = vpack.c.b16 %v555, %v554
      %v630 = vpack.c.b16 %v557, %v556
      %v631 = vpack.c.b16 %v559, %v558
      %v632 = vpack.c.b16 %v561, %v560
      %v633 = vpack.c.b16 %v563, %v562
      %v634 = vpack.c.b16 %v565, %v564
      %v635 = vpack.c.b16 %v567, %v566
      %v636 = vpack.c.b16 %v569, %v568
      %v637 = vpack.c.b16 %v571, %v570
      %v638 = vpack.c.b16 %v573, %v572
      %v639 = vpack.c.b16 %v575, %v574
      %v650 = vunpack.c.l.b16 %v303
      %v651 = vunpack.c.l.b16 %v304
      %v652 = vunpack.c.l.b16 %v305
      %v653 = vunpack.c.l.b16 %v306
      %v654 = vunpack.c.l.b16 %v307
      %v655 = vunpack.c.l.b16 %v308
      %v656 = vunpack.c.l.b16 %v309
      %v657 = vunpack.c.l.b16 %v310
      %v658 = vunpack.c.l.b16 %v311
      %v659 = vunpack.c.l.b16 %v312
      %v660 = vpack.c.b16 %v651, %v650
      %v661 = vpack.c.b16 %v653, %v652
      %v662 = vpack.c.b16 %v655, %v654
      %v663 = vpack.c.b16 %v657, %v656
      %v664 = vpack.c.b16 %v659, %v658
      %vm669 = vcmask 613376
      %v671 = vsel %vm669, %v576, 0
      %v674 = vsel %vm669, %v577, 0
      %v677 = vsel %vm669, %v578, 0
      %v680 = vsel %vm669, %v579, 0
      %v683 = vsel %vm669, %v580, 0
      %v686 = vsel %vm669, %v581, 0
      %v689 = vsel %vm669, %v582, 0
      %v692 = vsel %vm669, %v583, 0
      %v695 = vsel %vm669, %v584, 0
      %v698 = vsel %vm669, %v585, 0
      %v701 = vsel %vm669, %v586, 0
      %v704 = vsel %vm669, %v587, 0
      %v707 = vsel %vm669, %v588, 0
      %v710 = vsel %vm669, %v589, 0
      %v713 = vsel %vm669, %v590, 0
      %v716 = vsel %vm669, %v591, 0
      %v719 = vsel %vm669, %v592, 0
      %v722 = vsel %vm669, %v593, 0
      %v725 = vsel %vm669, %v594, 0
      %v728 = vsel %vm669, %v595, 0
      %v731 = vsel %vm669, %v596, 0
      %v734 = vsel %vm669, %v597, 0
      %v737 = vsel %vm669, %v598, 0
      %v740 = vsel %vm669, %v599, 0
      %v743 = vsel %vm669, %v600, 0
      %v746 = vsel %vm669, %v601, 0
      %v749 = vsel %vm669, %v602, 0
      %v752 = vsel %vm669, %v603, 0
      %v755 = vsel %vm669, %v604, 0
      %v758 = vsel %vm669, %v605, 0
      %v761 = vsel %vm669, %v606, 0
      %v764 = vsel %vm669, %v607, 0
      %v767 = vsel %vm669, %v608, 0
      %v770 = vsel %vm669, %v609, 0
      %v773 = vsel %vm669, %v610, 0
      %v776 = vsel %vm669, %v611, 0
      %v779 = vsel %vm669, %v612, 0
      %v782 = vsel %vm669, %v613, 0
      %v785 = vsel %vm669, %v614, 0
      %v788 = vsel %vm669, %v615, 0
      %v791 = vsel %vm669, %v616, 0
      %v794 = vsel %vm669, %v617, 0
      %v797 = vsel %vm669, %v618, 0
      %v800 = vsel %vm669, %v619, 0
      %v803 = vsel %vm669, %v620, 0
      %v806 = vsel %vm669, %v621, 0
      %v809 = vsel %vm669, %v622, 0
      %v812 = vsel %vm669, %v623, 0
      %v815 = vsel %vm669, %v624, 0
      %v818 = vsel %vm669, %v625, 0
      %v821 = vsel %vm669, %v626, 0
      %v824 = vsel %vm669, %v627, 0
      %v827 = vsel %vm669, %v628, 0
      %v830 = vsel %vm669, %v629, 0
      %v833 = vsel %vm669, %v630, 0
      %v836 = vsel %vm669, %v631, 0
      %v839 = vsel %vm669, %v632, 0
      %v842 = vsel %vm669, %v633, 0
      %v845 = vsel %vm669, %v634, 0
      %v848 = vsel %vm669, %v635, 0
      %v851 = vsel %vm669, %v636, 0
      %v854 = vsel %vm669, %v637, 0
      %v857 = vsel %vm669, %v638, 0
      %v860 = vsel %vm669, %v639, 0
      %vm862 = vcmask 1044480
      %vm863 = vcmask 1045504
      %v864 = vsel %vm862, 4294967295, 65535
      %v865 = vsel %vm863, %v864, 0
      %v867 = vand.u32 %v664, %v865
      %869 = vmatprep.subr.bf16.mxu0 0
      %870 = vmatpush1.bf16.msra.mxu0 0
      %871 = vmatprep.subr.bf16.mxu0 0
      %872 = vmatpush1.bf16.msra.mxu0 0
      %873 = vmatprep.subr.bf16.mxu0 0
      %874 = vmatpush1.bf16.msra.mxu0 0
      %875 = vmatprep.subr.bf16.mxu0 0
      %876 = vmatpush1.bf16.msra.mxu0 %v867
      %877 = vmatprep.subr.bf16.mxu0 0
      %878 = vmatpush1.bf16.msra.mxu0 %v663
      %879 = vmatprep.subr.bf16.mxu0 0
      %880 = vmatpush1.bf16.msra.mxu0 %v662
      %881 = vmatprep.subr.bf16.mxu0 0
      %882 = vmatpush1.bf16.msra.mxu0 %v661
      %883 = vmatprep.subr.bf16.mxu0 0
      %884 = vmatpush1.bf16.msra.mxu0 %v660
      %885 = vmatprep.subr.bf16.mxu0 0
      %886 = vmatpush2.bf16.msra.mxu0 0
      %887 = vmatprep.subr.bf16.mxu0 0
      %888 = vmatpush2.bf16.msra.mxu0 0
      %889 = vmatprep.subr.bf16.mxu0 0
      %890 = vmatpush2.bf16.msra.mxu0 0
      %891 = vmatprep.subr.bf16.mxu0 0
      %892 = vmatpush2.bf16.msra.mxu0 0
      %893 = vmatprep.subr.bf16.mxu0 0
      %894 = vmatpush2.bf16.msra.mxu0 0
      %895 = vmatprep.subr.bf16.mxu0 0
      %896 = vmatpush2.bf16.msra.mxu0 0
      %897 = vmatprep.subr.bf16.mxu0 0
      %898 = vmatpush2.bf16.msra.mxu0 0
      %899 = vmatprep.subr.bf16.mxu0 0
      %900 = vmatpush2.bf16.msra.mxu0 0
      %901 = vmatprep.mubr.bf16.mxu0 0
      %902 = vmatmul.mubr.bf16.gmra.mxu0 %v671
      %v903 = vpop.f32.mrf.mxu0
      %v904 = vadd.f32 %v318, %v903
      %v905 = vpop.f32.mrf.mxu0
      %v906 = vpop.f32.mrf.mxu0
      %v907 = vadd.f32 %v318, %v906
      %v908 = vpop.f32.mrf.mxu0
      %909 = vmatprep.mubr.bf16.mxu0 0
      %910 = vmatmul.mubr.bf16.gmra.mxu0 %v674
      %v911 = vpop.f32.mrf.mxu0
      %v912 = vadd.f32 %v318, %v911
      %v913 = vpop.f32.mrf.mxu0
      %v914 = vpop.f32.mrf.mxu0
      %v915 = vadd.f32 %v318, %v914
      %v916 = vpop.f32.mrf.mxu0
      %917 = vmatprep.mubr.bf16.mxu0 0
      %918 = vmatmul.mubr.bf16.gmra.mxu0 %v677
      %v919 = vpop.f32.mrf.mxu0
      %v920 = vadd.f32 %v318, %v919
      %v921 = vpop.f32.mrf.mxu0
      %v922 = vpop.f32.mrf.mxu0
      %v923 = vadd.f32 %v318, %v922
      %v924 = vpop.f32.mrf.mxu0
      %925 = vmatprep.mubr.bf16.mxu0 0
      %926 = vmatmul.mubr.bf16.gmra.mxu0 %v680
      %v927 = vpop.f32.mrf.mxu0
      %v928 = vadd.f32 %v318, %v927
      %v929 = vpop.f32.mrf.mxu0
      %v930 = vpop.f32.mrf.mxu0
      %v931 = vadd.f32 %v318, %v930
      %v932 = vpop.f32.mrf.mxu0
      %933 = vmatprep.mubr.bf16.mxu0 0
      %934 = vmatmul.mubr.bf16.gmra.mxu0 %v683
      %v935 = vpop.f32.mrf.mxu0
      %v936 = vadd.f32 %v318, %v935
      %v937 = vpop.f32.mrf.mxu0
      %v938 = vpop.f32.mrf.mxu0
      %v939 = vadd.f32 %v318, %v938
      %v940 = vpop.f32.mrf.mxu0
      %941 = vmatprep.mubr.bf16.mxu0 0
      %942 = vmatmul.mubr.bf16.gmra.mxu0 %v686
      %v943 = vpop.f32.mrf.mxu0
      %v944 = vadd.f32 %v318, %v943
      %v945 = vpop.f32.mrf.mxu0
      %v946 = vpop.f32.mrf.mxu0
      %v947 = vadd.f32 %v318, %v946
      %v948 = vpop.f32.mrf.mxu0
      %949 = vmatprep.mubr.bf16.mxu0 0
      %950 = vmatmul.mubr.bf16.gmra.mxu0 %v689
      %v951 = vpop.f32.mrf.mxu0
      %v952 = vadd.f32 %v318, %v951
      %v953 = vpop.f32.mrf.mxu0
      %v954 = vpop.f32.mrf.mxu0
      %v955 = vadd.f32 %v318, %v954
      %v956 = vpop.f32.mrf.mxu0
      %957 = vmatprep.mubr.bf16.mxu0 0
      %958 = vmatmul.mubr.bf16.gmra.mxu0 %v692
      %v959 = vpop.f32.mrf.mxu0
      %v960 = vadd.f32 %v318, %v959
      %v961 = vpop.f32.mrf.mxu0
      %v962 = vpop.f32.mrf.mxu0
      %v963 = vadd.f32 %v318, %v962
      %v964 = vpop.f32.mrf.mxu0
      %965 = vmatprep.mubr.bf16.mxu0 0
      %966 = vmatmul.mubr.bf16.gmra.mxu0 %v695
      %v967 = vpop.f32.mrf.mxu0
      %v968 = vadd.f32 %v318, %v967
      %v969 = vpop.f32.mrf.mxu0
      %v970 = vpop.f32.mrf.mxu0
      %v971 = vadd.f32 %v318, %v970
      %v972 = vpop.f32.mrf.mxu0
      %973 = vmatprep.mubr.bf16.mxu0 0
      %974 = vmatmul.mubr.bf16.gmra.mxu0 %v698
      %v975 = vpop.f32.mrf.mxu0
      %v976 = vadd.f32 %v318, %v975
      %v977 = vpop.f32.mrf.mxu0
      %v978 = vpop.f32.mrf.mxu0
      %v979 = vadd.f32 %v318, %v978
      %v980 = vpop.f32.mrf.mxu0
      %981 = vmatprep.mubr.bf16.mxu0 0
      %982 = vmatmul.mubr.bf16.gmra.mxu0 %v701
      %v983 = vpop.f32.mrf.mxu0
      %v984 = vadd.f32 %v318, %v983
      %v985 = vpop.f32.mrf.mxu0
      %v986 = vpop.f32.mrf.mxu0
      %v987 = vadd.f32 %v318, %v986
      %v988 = vpop.f32.mrf.mxu0
      %989 = vmatprep.mubr.bf16.mxu0 0
      %990 = vmatmul.mubr.bf16.gmra.mxu0 %v704
      %v991 = vpop.f32.mrf.mxu0
      %v992 = vadd.f32 %v318, %v991
      %v993 = vpop.f32.mrf.mxu0
      %v994 = vpop.f32.mrf.mxu0
      %v995 = vadd.f32 %v318, %v994
      %v996 = vpop.f32.mrf.mxu0
      %997 = vmatprep.mubr.bf16.mxu0 0
      %998 = vmatmul.mubr.bf16.gmra.mxu0 %v707
      %v999 = vpop.f32.mrf.mxu0
      %v1000 = vadd.f32 %v318, %v999
      %v1001 = vpop.f32.mrf.mxu0
      %v1002 = vpop.f32.mrf.mxu0
      %v1003 = vadd.f32 %v318, %v1002
      %v1004 = vpop.f32.mrf.mxu0
      %1005 = vmatprep.mubr.bf16.mxu0 0
      %1006 = vmatmul.mubr.bf16.gmra.mxu0 %v710
      %v1007 = vpop.f32.mrf.mxu0
      %v1008 = vadd.f32 %v318, %v1007
      %v1009 = vpop.f32.mrf.mxu0
      %v1010 = vpop.f32.mrf.mxu0
      %v1011 = vadd.f32 %v318, %v1010
      %v1012 = vpop.f32.mrf.mxu0
      %1013 = vmatprep.mubr.bf16.mxu0 0
      %1014 = vmatmul.mubr.bf16.gmra.mxu0 %v713
      %v1015 = vpop.f32.mrf.mxu0
      %v1016 = vadd.f32 %v318, %v1015
      %v1017 = vpop.f32.mrf.mxu0
      %v1018 = vpop.f32.mrf.mxu0
      %v1019 = vadd.f32 %v318, %v1018
      %v1020 = vpop.f32.mrf.mxu0
      %1021 = vmatprep.mubr.bf16.mxu0 0
      %1022 = vmatmul.mubr.bf16.gmra.mxu0 %v716
      %v1023 = vpop.f32.mrf.mxu0
      %v1024 = vadd.f32 %v318, %v1023
      %v1025 = vpop.f32.mrf.mxu0
      %v1026 = vpop.f32.mrf.mxu0
      %v1027 = vadd.f32 %v318, %v1026
      %v1028 = vpop.f32.mrf.mxu0
      %1029 = vmatprep.mubr.bf16.mxu0 0
      %1030 = vmatmul.mubr.bf16.gmra.mxu0 %v719
      %v1031 = vpop.f32.mrf.mxu0
      %v1032 = vadd.f32 %v318, %v1031
      %v1033 = vpop.f32.mrf.mxu0
      %v1034 = vpop.f32.mrf.mxu0
      %v1035 = vadd.f32 %v318, %v1034
      %v1036 = vpop.f32.mrf.mxu0
      %1037 = vmatprep.mubr.bf16.mxu0 0
      %1038 = vmatmul.mubr.bf16.gmra.mxu0 %v722
      %v1039 = vpop.f32.mrf.mxu0
      %v1040 = vadd.f32 %v318, %v1039
      %v1041 = vpop.f32.mrf.mxu0
      %v1042 = vpop.f32.mrf.mxu0
      %v1043 = vadd.f32 %v318, %v1042
      %v1044 = vpop.f32.mrf.mxu0
      %1045 = vmatprep.mubr.bf16.mxu0 0
      %1046 = vmatmul.mubr.bf16.gmra.mxu0 %v725
      %v1047 = vpop.f32.mrf.mxu0
      %v1048 = vadd.f32 %v318, %v1047
      %v1049 = vpop.f32.mrf.mxu0
      %v1050 = vpop.f32.mrf.mxu0
      %v1051 = vadd.f32 %v318, %v1050
      %v1052 = vpop.f32.mrf.mxu0
      %1053 = vmatprep.mubr.bf16.mxu0 0
      %1054 = vmatmul.mubr.bf16.gmra.mxu0 %v728
      %v1055 = vpop.f32.mrf.mxu0
      %v1056 = vadd.f32 %v318, %v1055
      %v1057 = vpop.f32.mrf.mxu0
      %v1058 = vpop.f32.mrf.mxu0
      %v1059 = vadd.f32 %v318, %v1058
      %v1060 = vpop.f32.mrf.mxu0
      %1061 = vmatprep.mubr.bf16.mxu0 0
      %1062 = vmatmul.mubr.bf16.gmra.mxu0 %v731
      %v1063 = vpop.f32.mrf.mxu0
      %v1064 = vadd.f32 %v318, %v1063
      %v1065 = vpop.f32.mrf.mxu0
      %v1066 = vpop.f32.mrf.mxu0
      %v1067 = vadd.f32 %v318, %v1066
      %v1068 = vpop.f32.mrf.mxu0
      %1069 = vmatprep.mubr.bf16.mxu0 0
      %1070 = vmatmul.mubr.bf16.gmra.mxu0 %v734
      %v1071 = vpop.f32.mrf.mxu0
      %v1072 = vadd.f32 %v318, %v1071
      %v1073 = vpop.f32.mrf.mxu0
      %v1074 = vpop.f32.mrf.mxu0
      %v1075 = vadd.f32 %v318, %v1074
      %v1076 = vpop.f32.mrf.mxu0
      %1077 = vmatprep.mubr.bf16.mxu0 0
      %1078 = vmatmul.mubr.bf16.gmra.mxu0 %v737
      %v1079 = vpop.f32.mrf.mxu0
      %v1080 = vadd.f32 %v318, %v1079
      %v1081 = vpop.f32.mrf.mxu0
      %v1082 = vpop.f32.mrf.mxu0
      %v1083 = vadd.f32 %v318, %v1082
      %v1084 = vpop.f32.mrf.mxu0
      %1085 = vmatprep.mubr.bf16.mxu0 0
      %1086 = vmatmul.mubr.bf16.gmra.mxu0 %v740
      %v1087 = vpop.f32.mrf.mxu0
      %v1088 = vadd.f32 %v318, %v1087
      %v1089 = vpop.f32.mrf.mxu0
      %v1090 = vpop.f32.mrf.mxu0
      %v1091 = vadd.f32 %v318, %v1090
      %v1092 = vpop.f32.mrf.mxu0
      %1093 = vmatprep.mubr.bf16.mxu0 0
      %1094 = vmatmul.mubr.bf16.gmra.mxu0 %v743
      %v1095 = vpop.f32.mrf.mxu0
      %v1096 = vadd.f32 %v318, %v1095
      %v1097 = vpop.f32.mrf.mxu0
      %v1098 = vpop.f32.mrf.mxu0
      %v1099 = vadd.f32 %v318, %v1098
      %v1100 = vpop.f32.mrf.mxu0
      %1101 = vmatprep.mubr.bf16.mxu0 0
      %1102 = vmatmul.mubr.bf16.gmra.mxu0 %v746
      %v1103 = vpop.f32.mrf.mxu0
      %v1104 = vadd.f32 %v318, %v1103
      %v1105 = vpop.f32.mrf.mxu0
      %v1106 = vpop.f32.mrf.mxu0
      %v1107 = vadd.f32 %v318, %v1106
      %v1108 = vpop.f32.mrf.mxu0
      %1109 = vmatprep.mubr.bf16.mxu0 0
      %1110 = vmatmul.mubr.bf16.gmra.mxu0 %v749
      %v1111 = vpop.f32.mrf.mxu0
      %v1112 = vadd.f32 %v318, %v1111
      %v1113 = vpop.f32.mrf.mxu0
      %v1114 = vpop.f32.mrf.mxu0
      %v1115 = vadd.f32 %v318, %v1114
      %v1116 = vpop.f32.mrf.mxu0
      %1117 = vmatprep.mubr.bf16.mxu0 0
      %1118 = vmatmul.mubr.bf16.gmra.mxu0 %v752
      %v1119 = vpop.f32.mrf.mxu0
      %v1120 = vadd.f32 %v318, %v1119
      %v1121 = vpop.f32.mrf.mxu0
      %v1122 = vpop.f32.mrf.mxu0
      %v1123 = vadd.f32 %v318, %v1122
      %v1124 = vpop.f32.mrf.mxu0
      %1125 = vmatprep.mubr.bf16.mxu0 0
      %1126 = vmatmul.mubr.bf16.gmra.mxu0 %v755
      %v1127 = vpop.f32.mrf.mxu0
      %v1128 = vadd.f32 %v318, %v1127
      %v1129 = vpop.f32.mrf.mxu0
      %v1130 = vpop.f32.mrf.mxu0
      %v1131 = vadd.f32 %v318, %v1130
      %v1132 = vpop.f32.mrf.mxu0
      %1133 = vmatprep.mubr.bf16.mxu0 0
      %1134 = vmatmul.mubr.bf16.gmra.mxu0 %v758
      %v1135 = vpop.f32.mrf.mxu0
      %v1136 = vadd.f32 %v318, %v1135
      %v1137 = vpop.f32.mrf.mxu0
      %v1138 = vpop.f32.mrf.mxu0
      %v1139 = vadd.f32 %v318, %v1138
      %v1140 = vpop.f32.mrf.mxu0
      %1141 = vmatprep.mubr.bf16.mxu0 0
      %1142 = vmatmul.mubr.bf16.gmra.mxu0 %v761
      %v1143 = vpop.f32.mrf.mxu0
      %v1144 = vadd.f32 %v318, %v1143
      %v1145 = vpop.f32.mrf.mxu0
      %v1146 = vpop.f32.mrf.mxu0
      %v1147 = vadd.f32 %v318, %v1146
      %v1148 = vpop.f32.mrf.mxu0
      %1149 = vmatprep.mubr.bf16.mxu0 0
      %1150 = vmatmul.mubr.bf16.gmra.mxu0 %v764
      %v1151 = vpop.f32.mrf.mxu0
      %v1152 = vadd.f32 %v318, %v1151
      %v1153 = vpop.f32.mrf.mxu0
      %v1154 = vpop.f32.mrf.mxu0
      %v1155 = vadd.f32 %v318, %v1154
      %v1156 = vpop.f32.mrf.mxu0
      %1157 = vmatprep.mubr.bf16.mxu0 0
      %1158 = vmatmul.mubr.bf16.gmra.mxu0 %v767
      %v1159 = vpop.f32.mrf.mxu0
      %v1160 = vadd.f32 %v318, %v1159
      %v1161 = vpop.f32.mrf.mxu0
      %v1162 = vpop.f32.mrf.mxu0
      %v1163 = vadd.f32 %v318, %v1162
      %v1164 = vpop.f32.mrf.mxu0
      %1165 = vmatprep.mubr.bf16.mxu0 0
      %1166 = vmatmul.mubr.bf16.gmra.mxu0 %v770
      %v1167 = vpop.f32.mrf.mxu0
      %v1168 = vadd.f32 %v318, %v1167
      %v1169 = vpop.f32.mrf.mxu0
      %v1170 = vpop.f32.mrf.mxu0
      %v1171 = vadd.f32 %v318, %v1170
      %v1172 = vpop.f32.mrf.mxu0
      %1173 = vmatprep.mubr.bf16.mxu0 0
      %1174 = vmatmul.mubr.bf16.gmra.mxu0 %v773
      %v1175 = vpop.f32.mrf.mxu0
      %v1176 = vadd.f32 %v318, %v1175
      %v1177 = vpop.f32.mrf.mxu0
      %v1178 = vpop.f32.mrf.mxu0
      %v1179 = vadd.f32 %v318, %v1178
      %v1180 = vpop.f32.mrf.mxu0
      %1181 = vmatprep.mubr.bf16.mxu0 0
      %1182 = vmatmul.mubr.bf16.gmra.mxu0 %v776
      %v1183 = vpop.f32.mrf.mxu0
      %v1184 = vadd.f32 %v318, %v1183
      %v1185 = vpop.f32.mrf.mxu0
      %v1186 = vpop.f32.mrf.mxu0
      %v1187 = vadd.f32 %v318, %v1186
      %v1188 = vpop.f32.mrf.mxu0
      %1189 = vmatprep.mubr.bf16.mxu0 0
      %1190 = vmatmul.mubr.bf16.gmra.mxu0 %v779
      %v1191 = vpop.f32.mrf.mxu0
      %v1192 = vadd.f32 %v318, %v1191
      %v1193 = vpop.f32.mrf.mxu0
      %v1194 = vpop.f32.mrf.mxu0
      %v1195 = vadd.f32 %v318, %v1194
      %v1196 = vpop.f32.mrf.mxu0
      %1197 = vmatprep.mubr.bf16.mxu0 0
      %1198 = vmatmul.mubr.bf16.gmra.mxu0 %v782
      %v1199 = vpop.f32.mrf.mxu0
      %v1200 = vadd.f32 %v318, %v1199
      %v1201 = vpop.f32.mrf.mxu0
      %v1202 = vpop.f32.mrf.mxu0
      %v1203 = vadd.f32 %v318, %v1202
      %v1204 = vpop.f32.mrf.mxu0
      %1205 = vmatprep.mubr.bf16.mxu0 0
      %1206 = vmatmul.mubr.bf16.gmra.mxu0 %v785
      %v1207 = vpop.f32.mrf.mxu0
      %v1208 = vadd.f32 %v318, %v1207
      %v1209 = vpop.f32.mrf.mxu0
      %v1210 = vpop.f32.mrf.mxu0
      %v1211 = vadd.f32 %v318, %v1210
      %v1212 = vpop.f32.mrf.mxu0
      %1213 = vmatprep.mubr.bf16.mxu0 0
      %1214 = vmatmul.mubr.bf16.gmra.mxu0 %v788
      %v1215 = vpop.f32.mrf.mxu0
      %v1216 = vadd.f32 %v318, %v1215
      %v1217 = vpop.f32.mrf.mxu0
      %v1218 = vpop.f32.mrf.mxu0
      %v1219 = vadd.f32 %v318, %v1218
      %v1220 = vpop.f32.mrf.mxu0
      %1221 = vmatprep.mubr.bf16.mxu0 0
      %1222 = vmatmul.mubr.bf16.gmra.mxu0 %v791
      %v1223 = vpop.f32.mrf.mxu0
      %v1224 = vadd.f32 %v318, %v1223
      %v1225 = vpop.f32.mrf.mxu0
      %v1226 = vpop.f32.mrf.mxu0
      %v1227 = vadd.f32 %v318, %v1226
      %v1228 = vpop.f32.mrf.mxu0
      %1229 = vmatprep.mubr.bf16.mxu0 0
      %1230 = vmatmul.mubr.bf16.gmra.mxu0 %v794
      %v1231 = vpop.f32.mrf.mxu0
      %v1232 = vadd.f32 %v318, %v1231
      %v1233 = vpop.f32.mrf.mxu0
      %v1234 = vpop.f32.mrf.mxu0
      %v1235 = vadd.f32 %v318, %v1234
      %v1236 = vpop.f32.mrf.mxu0
      %1237 = vmatprep.mubr.bf16.mxu0 0
      %1238 = vmatmul.mubr.bf16.gmra.mxu0 %v797
      %v1239 = vpop.f32.mrf.mxu0
      %v1240 = vadd.f32 %v318, %v1239
      %v1241 = vpop.f32.mrf.mxu0
      %v1242 = vpop.f32.mrf.mxu0
      %v1243 = vadd.f32 %v318, %v1242
      %v1244 = vpop.f32.mrf.mxu0
      %1245 = vmatprep.mubr.bf16.mxu0 0
      %1246 = vmatmul.mubr.bf16.gmra.mxu0 %v800
      %v1247 = vpop.f32.mrf.mxu0
      %v1248 = vadd.f32 %v318, %v1247
      %v1249 = vpop.f32.mrf.mxu0
      %v1250 = vpop.f32.mrf.mxu0
      %v1251 = vadd.f32 %v318, %v1250
      %v1252 = vpop.f32.mrf.mxu0
      %1253 = vmatprep.mubr.bf16.mxu0 0
      %1254 = vmatmul.mubr.bf16.gmra.mxu0 %v803
      %v1255 = vpop.f32.mrf.mxu0
      %v1256 = vadd.f32 %v318, %v1255
      %v1257 = vpop.f32.mrf.mxu0
      %v1258 = vpop.f32.mrf.mxu0
      %v1259 = vadd.f32 %v318, %v1258
      %v1260 = vpop.f32.mrf.mxu0
      %1261 = vmatprep.mubr.bf16.mxu0 0
      %1262 = vmatmul.mubr.bf16.gmra.mxu0 %v806
      %v1263 = vpop.f32.mrf.mxu0
      %v1264 = vadd.f32 %v318, %v1263
      %v1265 = vpop.f32.mrf.mxu0
      %v1266 = vpop.f32.mrf.mxu0
      %v1267 = vadd.f32 %v318, %v1266
      %v1268 = vpop.f32.mrf.mxu0
      %1269 = vmatprep.mubr.bf16.mxu0 0
      %1270 = vmatmul.mubr.bf16.gmra.mxu0 %v809
      %v1271 = vpop.f32.mrf.mxu0
      %v1272 = vadd.f32 %v318, %v1271
      %v1273 = vpop.f32.mrf.mxu0
      %v1274 = vpop.f32.mrf.mxu0
      %v1275 = vadd.f32 %v318, %v1274
      %v1276 = vpop.f32.mrf.mxu0
      %1277 = vmatprep.mubr.bf16.mxu0 0
      %1278 = vmatmul.mubr.bf16.gmra.mxu0 %v812
      %v1279 = vpop.f32.mrf.mxu0
      %v1280 = vadd.f32 %v318, %v1279
      %v1281 = vpop.f32.mrf.mxu0
      %v1282 = vpop.f32.mrf.mxu0
      %v1283 = vadd.f32 %v318, %v1282
      %v1284 = vpop.f32.mrf.mxu0
      %1285 = vmatprep.mubr.bf16.mxu0 0
      %1286 = vmatmul.mubr.bf16.gmra.mxu0 %v815
      %v1287 = vpop.f32.mrf.mxu0
      %v1288 = vadd.f32 %v318, %v1287
      %v1289 = vpop.f32.mrf.mxu0
      %v1290 = vpop.f32.mrf.mxu0
      %v1291 = vadd.f32 %v318, %v1290
      %v1292 = vpop.f32.mrf.mxu0
      %1293 = vmatprep.mubr.bf16.mxu0 0
      %1294 = vmatmul.mubr.bf16.gmra.mxu0 %v818
      %v1295 = vpop.f32.mrf.mxu0
      %v1296 = vadd.f32 %v318, %v1295
      %v1297 = vpop.f32.mrf.mxu0
      %v1298 = vpop.f32.mrf.mxu0
      %v1299 = vadd.f32 %v318, %v1298
      %v1300 = vpop.f32.mrf.mxu0
      %1301 = vmatprep.mubr.bf16.mxu0 0
      %1302 = vmatmul.mubr.bf16.gmra.mxu0 %v821
      %v1303 = vpop.f32.mrf.mxu0
      %v1304 = vadd.f32 %v318, %v1303
      %v1305 = vpop.f32.mrf.mxu0
      %v1306 = vpop.f32.mrf.mxu0
      %v1307 = vadd.f32 %v318, %v1306
      %v1308 = vpop.f32.mrf.mxu0
      %1309 = vmatprep.mubr.bf16.mxu0 0
      %1310 = vmatmul.mubr.bf16.gmra.mxu0 %v824
      %v1311 = vpop.f32.mrf.mxu0
      %v1312 = vadd.f32 %v318, %v1311
      %v1313 = vpop.f32.mrf.mxu0
      %v1314 = vpop.f32.mrf.mxu0
      %v1315 = vadd.f32 %v318, %v1314
      %v1316 = vpop.f32.mrf.mxu0
      %1317 = vmatprep.mubr.bf16.mxu0 0
      %1318 = vmatmul.mubr.bf16.gmra.mxu0 %v827
      %v1319 = vpop.f32.mrf.mxu0
      %v1320 = vadd.f32 %v318, %v1319
      %v1321 = vpop.f32.mrf.mxu0
      %v1322 = vpop.f32.mrf.mxu0
      %v1323 = vadd.f32 %v318, %v1322
      %v1324 = vpop.f32.mrf.mxu0
      %1325 = vmatprep.mubr.bf16.mxu0 0
      %1326 = vmatmul.mubr.bf16.gmra.mxu0 %v830
      %v1327 = vpop.f32.mrf.mxu0
      %v1328 = vadd.f32 %v318, %v1327
      %v1329 = vpop.f32.mrf.mxu0
      %v1330 = vpop.f32.mrf.mxu0
      %v1331 = vadd.f32 %v318, %v1330
      %v1332 = vpop.f32.mrf.mxu0
      %1333 = vmatprep.mubr.bf16.mxu0 0
      %1334 = vmatmul.mubr.bf16.gmra.mxu0 %v833
      %v1335 = vpop.f32.mrf.mxu0
      %v1336 = vadd.f32 %v318, %v1335
      %v1337 = vpop.f32.mrf.mxu0
      %v1338 = vpop.f32.mrf.mxu0
      %v1339 = vadd.f32 %v318, %v1338
      %v1340 = vpop.f32.mrf.mxu0
      %1341 = vmatprep.mubr.bf16.mxu0 0
      %1342 = vmatmul.mubr.bf16.gmra.mxu0 %v836
      %v1343 = vpop.f32.mrf.mxu0
      %v1344 = vadd.f32 %v318, %v1343
      %v1345 = vpop.f32.mrf.mxu0
      %v1346 = vpop.f32.mrf.mxu0
      %v1347 = vadd.f32 %v318, %v1346
      %v1348 = vpop.f32.mrf.mxu0
      %1349 = vmatprep.mubr.bf16.mxu0 0
      %1350 = vmatmul.mubr.bf16.gmra.mxu0 %v839
      %v1351 = vpop.f32.mrf.mxu0
      %v1352 = vadd.f32 %v318, %v1351
      %v1353 = vpop.f32.mrf.mxu0
      %v1354 = vpop.f32.mrf.mxu0
      %v1355 = vadd.f32 %v318, %v1354
      %v1356 = vpop.f32.mrf.mxu0
      %1357 = vmatprep.mubr.bf16.mxu0 0
      %1358 = vmatmul.mubr.bf16.gmra.mxu0 %v842
      %v1359 = vpop.f32.mrf.mxu0
      %v1360 = vadd.f32 %v318, %v1359
      %v1361 = vpop.f32.mrf.mxu0
      %v1362 = vpop.f32.mrf.mxu0
      %v1363 = vadd.f32 %v318, %v1362
      %v1364 = vpop.f32.mrf.mxu0
      %1365 = vmatprep.mubr.bf16.mxu0 0
      %1366 = vmatmul.mubr.bf16.gmra.mxu0 %v845
      %v1367 = vpop.f32.mrf.mxu0
      %v1368 = vadd.f32 %v318, %v1367
      %v1369 = vpop.f32.mrf.mxu0
      %v1370 = vpop.f32.mrf.mxu0
      %v1371 = vadd.f32 %v318, %v1370
      %v1372 = vpop.f32.mrf.mxu0
      %1373 = vmatprep.mubr.bf16.mxu0 0
      %1374 = vmatmul.mubr.bf16.gmra.mxu0 %v848
      %v1375 = vpop.f32.mrf.mxu0
      %v1376 = vadd.f32 %v318, %v1375
      %v1377 = vpop.f32.mrf.mxu0
      %v1378 = vpop.f32.mrf.mxu0
      %v1379 = vadd.f32 %v318, %v1378
      %v1380 = vpop.f32.mrf.mxu0
      %1381 = vmatprep.mubr.bf16.mxu0 0
      %1382 = vmatmul.mubr.bf16.gmra.mxu0 %v851
      %v1383 = vpop.f32.mrf.mxu0
      %v1384 = vadd.f32 %v318, %v1383
      %v1385 = vpop.f32.mrf.mxu0
      %v1386 = vpop.f32.mrf.mxu0
      %v1387 = vadd.f32 %v318, %v1386
      %v1388 = vpop.f32.mrf.mxu0
      %1389 = vmatprep.mubr.bf16.mxu0 0
      %1390 = vmatmul.mubr.bf16.gmra.mxu0 %v854
      %v1391 = vpop.f32.mrf.mxu0
      %v1392 = vadd.f32 %v318, %v1391
      %v1393 = vpop.f32.mrf.mxu0
      %v1394 = vpop.f32.mrf.mxu0
      %v1395 = vadd.f32 %v318, %v1394
      %v1396 = vpop.f32.mrf.mxu0
      %1397 = vmatprep.mubr.bf16.mxu0 0
      %1398 = vmatmul.mubr.bf16.gmra.mxu0 %v857
      %v1399 = vpop.f32.mrf.mxu0
      %v1400 = vadd.f32 %v318, %v1399
      %v1401 = vpop.f32.mrf.mxu0
      %v1402 = vpop.f32.mrf.mxu0
      %v1403 = vadd.f32 %v318, %v1402
      %v1404 = vpop.f32.mrf.mxu0
      %1405 = vmatprep.mubr.bf16.mxu0 0
      %1406 = vmatmul.mubr.bf16.gmra.mxu0 %v860
      %v1407 = vpop.f32.mrf.mxu0
      %v1408 = vadd.f32 %v318, %v1407
      %v1409 = vpop.f32.mrf.mxu0
      %v1410 = vpop.f32.mrf.mxu0
      %v1411 = vadd.f32 %v318, %v1410
      %v1412 = vpop.f32.mrf.mxu0
      %1413 = vdwg.mxu0
      %v1414 = vmul.f32 %v904, 0.2
      %v1415 = vmul.f32 %v907, 0.2
      %v1416 = vmul.f32 %v912, 0.2
      %v1417 = vmul.f32 %v915, 0.2
      %v1418 = vmul.f32 %v920, 0.2
      %v1419 = vmul.f32 %v923, 0.2
      %v1420 = vmul.f32 %v928, 0.2
      %v1421 = vmul.f32 %v931, 0.2
      %v1422 = vmul.f32 %v936, 0.2
      %v1423 = vmul.f32 %v939, 0.2
      %v1424 = vmul.f32 %v944, 0.2
      %v1425 = vmul.f32 %v947, 0.2
      %v1426 = vmul.f32 %v952, 0.2
      %v1427 = vmul.f32 %v955, 0.2
      %v1428 = vmul.f32 %v960, 0.2
      %v1429 = vmul.f32 %v963, 0.2
      %v1430 = vmul.f32 %v968, 0.2
      %v1431 = vmul.f32 %v971, 0.2
      %v1432 = vmul.f32 %v976, 0.2
      %v1433 = vmul.f32 %v979, 0.2
      %v1434 = vmul.f32 %v984, 0.2
      %v1435 = vmul.f32 %v987, 0.2
      %v1436 = vmul.f32 %v992, 0.2
      %v1437 = vmul.f32 %v995, 0.2
      %v1438 = vmul.f32 %v1000, 0.2
      %v1439 = vmul.f32 %v1003, 0.2
      %v1440 = vmul.f32 %v1008, 0.2
      %v1441 = vmul.f32 %v1011, 0.2
      %v1442 = vmul.f32 %v1016, 0.2
      %v1443 = vmul.f32 %v1019, 0.2
      %v1444 = vmul.f32 %v1024, 0.2
      %v1445 = vmul.f32 %v1027, 0.2
      %v1446 = vmul.f32 %v1032, 0.2
      %v1447 = vmul.f32 %v1035, 0.2
      %v1448 = vmul.f32 %v1040, 0.2
      %v1449 = vmul.f32 %v1043, 0.2
      %v1450 = vmul.f32 %v1048, 0.2
      %v1451 = vmul.f32 %v1051, 0.2
      %v1452 = vmul.f32 %v1056, 0.2
      %v1453 = vmul.f32 %v1059, 0.2
      %v1454 = vmul.f32 %v1064, 0.2
      %v1455 = vmul.f32 %v1067, 0.2
      %v1456 = vmul.f32 %v1072, 0.2
      %v1457 = vmul.f32 %v1075, 0.2
      %v1458 = vmul.f32 %v1080, 0.2
      %v1459 = vmul.f32 %v1083, 0.2
      %v1460 = vmul.f32 %v1088, 0.2
      %v1461 = vmul.f32 %v1091, 0.2
      %v1462 = vmul.f32 %v1096, 0.2
      %v1463 = vmul.f32 %v1099, 0.2
      %v1464 = vmul.f32 %v1104, 0.2
      %v1465 = vmul.f32 %v1107, 0.2
      %v1466 = vmul.f32 %v1112, 0.2
      %v1467 = vmul.f32 %v1115, 0.2
      %v1468 = vmul.f32 %v1120, 0.2
      %v1469 = vmul.f32 %v1123, 0.2
      %v1470 = vmul.f32 %v1128, 0.2
      %v1471 = vmul.f32 %v1131, 0.2
      %v1472 = vmul.f32 %v1136, 0.2
      %v1473 = vmul.f32 %v1139, 0.2
      %v1474 = vmul.f32 %v1144, 0.2
      %v1475 = vmul.f32 %v1147, 0.2
      %v1476 = vmul.f32 %v1152, 0.2
      %v1477 = vmul.f32 %v1155, 0.2
      %v1478 = vmul.f32 %v1160, 0.2
      %v1479 = vmul.f32 %v1163, 0.2
      %v1480 = vmul.f32 %v1168, 0.2
      %v1481 = vmul.f32 %v1171, 0.2
      %v1482 = vmul.f32 %v1176, 0.2
      %v1483 = vmul.f32 %v1179, 0.2
      %v1484 = vmul.f32 %v1184, 0.2
      %v1485 = vmul.f32 %v1187, 0.2
      %v1486 = vmul.f32 %v1192, 0.2
      %v1487 = vmul.f32 %v1195, 0.2
      %v1488 = vmul.f32 %v1200, 0.2
      %v1489 = vmul.f32 %v1203, 0.2
      %v1490 = vmul.f32 %v1208, 0.2
      %v1491 = vmul.f32 %v1211, 0.2
      %v1492 = vmul.f32 %v1216, 0.2
      %v1493 = vmul.f32 %v1219, 0.2
      %v1494 = vmul.f32 %v1224, 0.2
      %v1495 = vmul.f32 %v1227, 0.2
      %v1496 = vmul.f32 %v1232, 0.2
      %v1497 = vmul.f32 %v1235, 0.2
      %v1498 = vmul.f32 %v1240, 0.2
      %v1499 = vmul.f32 %v1243, 0.2
      %v1500 = vmul.f32 %v1248, 0.2
      %v1501 = vmul.f32 %v1251, 0.2
      %v1502 = vmul.f32 %v1256, 0.2
      %v1503 = vmul.f32 %v1259, 0.2
      %v1504 = vmul.f32 %v1264, 0.2
      %v1505 = vmul.f32 %v1267, 0.2
      %v1506 = vmul.f32 %v1272, 0.2
      %v1507 = vmul.f32 %v1275, 0.2
      %v1508 = vmul.f32 %v1280, 0.2
      %v1509 = vmul.f32 %v1283, 0.2
      %v1510 = vmul.f32 %v1288, 0.2
      %v1511 = vmul.f32 %v1291, 0.2
      %v1512 = vmul.f32 %v1296, 0.2
      %v1513 = vmul.f32 %v1299, 0.2
      %v1514 = vmul.f32 %v1304, 0.2
      %v1515 = vmul.f32 %v1307, 0.2
      %v1516 = vmul.f32 %v1312, 0.2
      %v1517 = vmul.f32 %v1315, 0.2
      %v1518 = vmul.f32 %v1320, 0.2
      %v1519 = vmul.f32 %v1323, 0.2
      %v1520 = vmul.f32 %v1328, 0.2
      %v1521 = vmul.f32 %v1331, 0.2
      %v1522 = vmul.f32 %v1336, 0.2
      %v1523 = vmul.f32 %v1339, 0.2
      %v1524 = vmul.f32 %v1344, 0.2
      %v1525 = vmul.f32 %v1347, 0.2
      %v1526 = vmul.f32 %v1352, 0.2
      %v1527 = vmul.f32 %v1355, 0.2
      %v1528 = vmul.f32 %v1360, 0.2
      %v1529 = vmul.f32 %v1363, 0.2
      %v1530 = vmul.f32 %v1368, 0.2
      %v1531 = vmul.f32 %v1371, 0.2
      %v1532 = vmul.f32 %v1376, 0.2
      %v1533 = vmul.f32 %v1379, 0.2
      %v1534 = vmul.f32 %v1384, 0.2
      %v1535 = vmul.f32 %v1387, 0.2
      %v1536 = vmul.f32 %v1392, 0.2
      %v1537 = vmul.f32 %v1395, 0.2
      %v1538 = vmul.f32 %v1400, 0.2
      %v1539 = vmul.f32 %v1403, 0.2
      %v1540 = vmul.f32 %v1408, 0.2
      %v1541 = vmul.f32 %v1411, 0.2
      %v1542 = vmax.f32 %v904, %v1414
      %v1543 = vmax.f32 %v907, %v1415
      %v1544 = vmax.f32 %v912, %v1416
      %v1545 = vmax.f32 %v915, %v1417
      %v1546 = vmax.f32 %v920, %v1418
      %v1547 = vmax.f32 %v923, %v1419
      %v1548 = vmax.f32 %v928, %v1420
      %v1549 = vmax.f32 %v931, %v1421
      %v1550 = vmax.f32 %v936, %v1422
      %v1551 = vmax.f32 %v939, %v1423
      %v1552 = vmax.f32 %v944, %v1424
      %v1553 = vmax.f32 %v947, %v1425
      %v1554 = vmax.f32 %v952, %v1426
      %v1555 = vmax.f32 %v955, %v1427
      %v1556 = vmax.f32 %v960, %v1428
      %v1557 = vmax.f32 %v963, %v1429
      %v1558 = vmax.f32 %v968, %v1430
      %v1559 = vmax.f32 %v971, %v1431
      %v1560 = vmax.f32 %v976, %v1432
      %v1561 = vmax.f32 %v979, %v1433
      %v1562 = vmax.f32 %v984, %v1434
      %v1563 = vmax.f32 %v987, %v1435
      %v1564 = vmax.f32 %v992, %v1436
      %v1565 = vmax.f32 %v995, %v1437
      %v1566 = vmax.f32 %v1000, %v1438
      %v1567 = vmax.f32 %v1003, %v1439
      %v1568 = vmax.f32 %v1008, %v1440
      %v1569 = vmax.f32 %v1011, %v1441
      %v1570 = vmax.f32 %v1016, %v1442
      %v1571 = vmax.f32 %v1019, %v1443
      %v1572 = vmax.f32 %v1024, %v1444
      %v1573 = vmax.f32 %v1027, %v1445
      %v1574 = vmax.f32 %v1032, %v1446
      %v1575 = vmax.f32 %v1035, %v1447
      %v1576 = vmax.f32 %v1040, %v1448
      %v1577 = vmax.f32 %v1043, %v1449
      %v1578 = vmax.f32 %v1048, %v1450
      %v1579 = vmax.f32 %v1051, %v1451
      %v1580 = vmax.f32 %v1056, %v1452
      %v1581 = vmax.f32 %v1059, %v1453
      %v1582 = vmax.f32 %v1064, %v1454
      %v1583 = vmax.f32 %v1067, %v1455
      %v1584 = vmax.f32 %v1072, %v1456
      %v1585 = vmax.f32 %v1075, %v1457
      %v1586 = vmax.f32 %v1080, %v1458
      %v1587 = vmax.f32 %v1083, %v1459
      %v1588 = vmax.f32 %v1088, %v1460
      %v1589 = vmax.f32 %v1091, %v1461
      %v1590 = vmax.f32 %v1096, %v1462
      %v1591 = vmax.f32 %v1099, %v1463
      %v1592 = vmax.f32 %v1104, %v1464
      %v1593 = vmax.f32 %v1107, %v1465
      %v1594 = vmax.f32 %v1112, %v1466
      %v1595 = vmax.f32 %v1115, %v1467
      %v1596 = vmax.f32 %v1120, %v1468
      %v1597 = vmax.f32 %v1123, %v1469
      %v1598 = vmax.f32 %v1128, %v1470
      %v1599 = vmax.f32 %v1131, %v1471
      %v1600 = vmax.f32 %v1136, %v1472
      %v1601 = vmax.f32 %v1139, %v1473
      %v1602 = vmax.f32 %v1144, %v1474
      %v1603 = vmax.f32 %v1147, %v1475
      %v1604 = vmax.f32 %v1152, %v1476
      %v1605 = vmax.f32 %v1155, %v1477
      %v1606 = vmax.f32 %v1160, %v1478
      %v1607 = vmax.f32 %v1163, %v1479
      %v1608 = vmax.f32 %v1168, %v1480
      %v1609 = vmax.f32 %v1171, %v1481
      %v1610 = vmax.f32 %v1176, %v1482
      %v1611 = vmax.f32 %v1179, %v1483
      %v1612 = vmax.f32 %v1184, %v1484
      %v1613 = vmax.f32 %v1187, %v1485
      %v1614 = vmax.f32 %v1192, %v1486
      %v1615 = vmax.f32 %v1195, %v1487
      %v1616 = vmax.f32 %v1200, %v1488
      %v1617 = vmax.f32 %v1203, %v1489
      %v1618 = vmax.f32 %v1208, %v1490
      %v1619 = vmax.f32 %v1211, %v1491
      %v1620 = vmax.f32 %v1216, %v1492
      %v1621 = vmax.f32 %v1219, %v1493
      %v1622 = vmax.f32 %v1224, %v1494
      %v1623 = vmax.f32 %v1227, %v1495
      %v1624 = vmax.f32 %v1232, %v1496
      %v1625 = vmax.f32 %v1235, %v1497
      %v1626 = vmax.f32 %v1240, %v1498
      %v1627 = vmax.f32 %v1243, %v1499
      %v1628 = vmax.f32 %v1248, %v1500
      %v1629 = vmax.f32 %v1251, %v1501
      %v1630 = vmax.f32 %v1256, %v1502
      %v1631 = vmax.f32 %v1259, %v1503
      %v1632 = vmax.f32 %v1264, %v1504
      %v1633 = vmax.f32 %v1267, %v1505
      %v1634 = vmax.f32 %v1272, %v1506
      %v1635 = vmax.f32 %v1275, %v1507
      %v1636 = vmax.f32 %v1280, %v1508
      %v1637 = vmax.f32 %v1283, %v1509
      %v1638 = vmax.f32 %v1288, %v1510
      %v1639 = vmax.f32 %v1291, %v1511
      %v1640 = vmax.f32 %v1296, %v1512
      %v1641 = vmax.f32 %v1299, %v1513
      %v1642 = vmax.f32 %v1304, %v1514
      %v1643 = vmax.f32 %v1307, %v1515
      %v1644 = vmax.f32 %v1312, %v1516
      %v1645 = vmax.f32 %v1315, %v1517
      %v1646 = vmax.f32 %v1320, %v1518
      %v1647 = vmax.f32 %v1323, %v1519
      %v1648 = vmax.f32 %v1328, %v1520
      %v1649 = vmax.f32 %v1331, %v1521
      %v1650 = vmax.f32 %v1336, %v1522
      %v1651 = vmax.f32 %v1339, %v1523
      %v1652 = vmax.f32 %v1344, %v1524
      %v1653 = vmax.f32 %v1347, %v1525
      %v1654 = vmax.f32 %v1352, %v1526
      %v1655 = vmax.f32 %v1355, %v1527
      %v1656 = vmax.f32 %v1360, %v1528
      %v1657 = vmax.f32 %v1363, %v1529
      %v1658 = vmax.f32 %v1368, %v1530
      %v1659 = vmax.f32 %v1371, %v1531
      %v1660 = vmax.f32 %v1376, %v1532
      %v1661 = vmax.f32 %v1379, %v1533
      %v1662 = vmax.f32 %v1384, %v1534
      %v1663 = vmax.f32 %v1387, %v1535
      %v1664 = vmax.f32 %v1392, %v1536
      %v1665 = vmax.f32 %v1395, %v1537
      %v1666 = vmax.f32 %v1400, %v1538
      %v1667 = vmax.f32 %v1403, %v1539
      %v1668 = vmax.f32 %v1408, %v1540
      %v1669 = vmax.f32 %v1411, %v1541
      %v1670 = vpack.c.bf16 %v1543, %v1542
      %v1671 = vpack.c.bf16 %v1545, %v1544
      %v1672 = vpack.c.bf16 %v1547, %v1546
      %v1673 = vpack.c.bf16 %v1549, %v1548
      %v1674 = vpack.c.bf16 %v1551, %v1550
      %v1675 = vpack.c.bf16 %v1553, %v1552
      %v1676 = vpack.c.bf16 %v1555, %v1554
      %v1677 = vpack.c.bf16 %v1557, %v1556
      %v1678 = vpack.c.bf16 %v1559, %v1558
      %v1679 = vpack.c.bf16 %v1561, %v1560
      %v1680 = vpack.c.bf16 %v1563, %v1562
      %v1681 = vpack.c.bf16 %v1565, %v1564
      %v1682 = vpack.c.bf16 %v1567, %v1566
      %v1683 = vpack.c.bf16 %v1569, %v1568
      %v1684 = vpack.c.bf16 %v1571, %v1570
      %v1685 = vpack.c.bf16 %v1573, %v1572
      %v1686 = vpack.c.bf16 %v1575, %v1574
      %v1687 = vpack.c.bf16 %v1577, %v1576
      %v1688 = vpack.c.bf16 %v1579, %v1578
      %v1689 = vpack.c.bf16 %v1581, %v1580
      %v1690 = vpack.c.bf16 %v1583, %v1582
      %v1691 = vpack.c.bf16 %v1585, %v1584
      %v1692 = vpack.c.bf16 %v1587, %v1586
      %v1693 = vpack.c.bf16 %v1589, %v1588
      %v1694 = vpack.c.bf16 %v1591, %v1590
      %v1695 = vpack.c.bf16 %v1593, %v1592
      %v1696 = vpack.c.bf16 %v1595, %v1594
      %v1697 = vpack.c.bf16 %v1597, %v1596
      %v1698 = vpack.c.bf16 %v1599, %v1598
      %v1699 = vpack.c.bf16 %v1601, %v1600
      %v1700 = vpack.c.bf16 %v1603, %v1602
      %v1701 = vpack.c.bf16 %v1605, %v1604
      %v1702 = vpack.c.bf16 %v1607, %v1606
      %v1703 = vpack.c.bf16 %v1609, %v1608
      %v1704 = vpack.c.bf16 %v1611, %v1610
      %v1705 = vpack.c.bf16 %v1613, %v1612
      %v1706 = vpack.c.bf16 %v1615, %v1614
      %v1707 = vpack.c.bf16 %v1617, %v1616
      %v1708 = vpack.c.bf16 %v1619, %v1618
      %v1709 = vpack.c.bf16 %v1621, %v1620
      %v1710 = vpack.c.bf16 %v1623, %v1622
      %v1711 = vpack.c.bf16 %v1625, %v1624
      %v1712 = vpack.c.bf16 %v1627, %v1626
      %v1713 = vpack.c.bf16 %v1629, %v1628
      %v1714 = vpack.c.bf16 %v1631, %v1630
      %v1715 = vpack.c.bf16 %v1633, %v1632
      %v1716 = vpack.c.bf16 %v1635, %v1634
      %v1717 = vpack.c.bf16 %v1637, %v1636
      %v1718 = vpack.c.bf16 %v1639, %v1638
      %v1719 = vpack.c.bf16 %v1641, %v1640
      %v1720 = vpack.c.bf16 %v1643, %v1642
      %v1721 = vpack.c.bf16 %v1645, %v1644
      %v1722 = vpack.c.bf16 %v1647, %v1646
      %v1723 = vpack.c.bf16 %v1649, %v1648
      %v1724 = vpack.c.bf16 %v1651, %v1650
      %v1725 = vpack.c.bf16 %v1653, %v1652
      %v1726 = vpack.c.bf16 %v1655, %v1654
      %v1727 = vpack.c.bf16 %v1657, %v1656
      %v1728 = vpack.c.bf16 %v1659, %v1658
      %v1729 = vpack.c.bf16 %v1661, %v1660
      %v1730 = vpack.c.bf16 %v1663, %v1662
      %v1731 = vpack.c.bf16 %v1665, %v1664
      %v1732 = vpack.c.bf16 %v1667, %v1666
      %v1733 = vpack.c.bf16 %v1669, %v1668
      %v1798 = vunpack.c.l.b16 %v1670
      %v1799 = vunpack.c.h.b16 %v1670
      %v1800 = vunpack.c.l.b16 %v1671
      %v1801 = vunpack.c.h.b16 %v1671
      %v1802 = vunpack.c.l.b16 %v1672
      %v1803 = vunpack.c.h.b16 %v1672
      %v1804 = vunpack.c.l.b16 %v1673
      %v1805 = vunpack.c.h.b16 %v1673
      %v1806 = vunpack.c.l.b16 %v1674
      %v1807 = vunpack.c.h.b16 %v1674
      %v1808 = vunpack.c.l.b16 %v1675
      %v1809 = vunpack.c.h.b16 %v1675
      %v1810 = vunpack.c.l.b16 %v1676
      %v1811 = vunpack.c.h.b16 %v1676
      %v1812 = vunpack.c.l.b16 %v1677
      %v1813 = vunpack.c.h.b16 %v1677
      %v1814 = vunpack.c.l.b16 %v1678
      %v1815 = vunpack.c.h.b16 %v1678
      %v1816 = vunpack.c.l.b16 %v1679
      %v1817 = vunpack.c.h.b16 %v1679
      %v1818 = vunpack.c.l.b16 %v1680
      %v1819 = vunpack.c.h.b16 %v1680
      %v1820 = vunpack.c.l.b16 %v1681
      %v1821 = vunpack.c.h.b16 %v1681
      %v1822 = vunpack.c.l.b16 %v1682
      %v1823 = vunpack.c.h.b16 %v1682
      %v1824 = vunpack.c.l.b16 %v1683
      %v1825 = vunpack.c.h.b16 %v1683
      %v1826 = vunpack.c.l.b16 %v1684
      %v1827 = vunpack.c.h.b16 %v1684
      %v1828 = vunpack.c.l.b16 %v1685
      %v1829 = vunpack.c.h.b16 %v1685
      %v1830 = vunpack.c.l.b16 %v1686
      %v1831 = vunpack.c.h.b16 %v1686
      %v1832 = vunpack.c.l.b16 %v1687
      %v1833 = vunpack.c.h.b16 %v1687
      %v1834 = vunpack.c.l.b16 %v1688
      %v1835 = vunpack.c.h.b16 %v1688
      %v1836 = vunpack.c.l.b16 %v1689
      %v1837 = vunpack.c.h.b16 %v1689
      %v1838 = vunpack.c.l.b16 %v1690
      %v1839 = vunpack.c.h.b16 %v1690
      %v1840 = vunpack.c.l.b16 %v1691
      %v1841 = vunpack.c.h.b16 %v1691
      %v1842 = vunpack.c.l.b16 %v1692
      %v1843 = vunpack.c.h.b16 %v1692
      %v1844 = vunpack.c.l.b16 %v1693
      %v1845 = vunpack.c.h.b16 %v1693
      %v1846 = vunpack.c.l.b16 %v1694
      %v1847 = vunpack.c.h.b16 %v1694
      %v1848 = vunpack.c.l.b16 %v1695
      %v1849 = vunpack.c.h.b16 %v1695
      %v1850 = vunpack.c.l.b16 %v1696
      %v1851 = vunpack.c.h.b16 %v1696
      %v1852 = vunpack.c.l.b16 %v1697
      %v1853 = vunpack.c.h.b16 %v1697
      %v1854 = vunpack.c.l.b16 %v1698
      %v1855 = vunpack.c.h.b16 %v1698
      %v1856 = vunpack.c.l.b16 %v1699
      %v1857 = vunpack.c.h.b16 %v1699
      %v1858 = vunpack.c.l.b16 %v1700
      %v1859 = vunpack.c.h.b16 %v1700
      %v1860 = vunpack.c.l.b16 %v1701
      %v1861 = vunpack.c.h.b16 %v1701
      %v1862 = vunpack.c.l.b16 %v1702
      %v1863 = vunpack.c.h.b16 %v1702
      %v1864 = vunpack.c.l.b16 %v1703
      %v1865 = vunpack.c.h.b16 %v1703
      %v1866 = vunpack.c.l.b16 %v1704
      %v1867 = vunpack.c.h.b16 %v1704
      %v1868 = vunpack.c.l.b16 %v1705
      %v1869 = vunpack.c.h.b16 %v1705
      %v1870 = vunpack.c.l.b16 %v1706
      %v1871 = vunpack.c.h.b16 %v1706
      %v1872 = vunpack.c.l.b16 %v1707
      %v1873 = vunpack.c.h.b16 %v1707
      %v1874 = vunpack.c.l.b16 %v1708
      %v1875 = vunpack.c.h.b16 %v1708
      %v1876 = vunpack.c.l.b16 %v1709
      %v1877 = vunpack.c.h.b16 %v1709
      %v1878 = vunpack.c.l.b16 %v1710
      %v1879 = vunpack.c.h.b16 %v1710
      %v1880 = vunpack.c.l.b16 %v1711
      %v1881 = vunpack.c.h.b16 %v1711
      %v1882 = vunpack.c.l.b16 %v1712
      %v1883 = vunpack.c.h.b16 %v1712
      %v1884 = vunpack.c.l.b16 %v1713
      %v1885 = vunpack.c.h.b16 %v1713
      %v1886 = vunpack.c.l.b16 %v1714
      %v1887 = vunpack.c.h.b16 %v1714
      %v1888 = vunpack.c.l.b16 %v1715
      %v1889 = vunpack.c.h.b16 %v1715
      %v1890 = vunpack.c.l.b16 %v1716
      %v1891 = vunpack.c.h.b16 %v1716
      %v1892 = vunpack.c.l.b16 %v1717
      %v1893 = vunpack.c.h.b16 %v1717
      %v1894 = vunpack.c.l.b16 %v1718
      %v1895 = vunpack.c.h.b16 %v1718
      %v1896 = vunpack.c.l.b16 %v1719
      %v1897 = vunpack.c.h.b16 %v1719
      %v1898 = vunpack.c.l.b16 %v1720
      %v1899 = vunpack.c.h.b16 %v1720
      %v1900 = vunpack.c.l.b16 %v1721
      %v1901 = vunpack.c.h.b16 %v1721
      %v1902 = vunpack.c.l.b16 %v1722
      %v1903 = vunpack.c.h.b16 %v1722
      %v1904 = vunpack.c.l.b16 %v1723
      %v1905 = vunpack.c.h.b16 %v1723
      %v1906 = vunpack.c.l.b16 %v1724
      %v1907 = vunpack.c.h.b16 %v1724
      %v1908 = vunpack.c.l.b16 %v1725
      %v1909 = vunpack.c.h.b16 %v1725
      %v1910 = vunpack.c.l.b16 %v1726
      %v1911 = vunpack.c.h.b16 %v1726
      %v1912 = vunpack.c.l.b16 %v1727
      %v1913 = vunpack.c.h.b16 %v1727
      %v1914 = vunpack.c.l.b16 %v1728
      %v1915 = vunpack.c.h.b16 %v1728
      %v1916 = vunpack.c.l.b16 %v1729
      %v1917 = vunpack.c.h.b16 %v1729
      %v1918 = vunpack.c.l.b16 %v1730
      %v1919 = vunpack.c.h.b16 %v1730
      %v1920 = vunpack.c.l.b16 %v1731
      %v1921 = vunpack.c.h.b16 %v1731
      %v1922 = vunpack.c.l.b16 %v1732
      %v1923 = vunpack.c.h.b16 %v1732
      %v1924 = vunpack.c.l.b16 %v1733
      %v1925 = vunpack.c.h.b16 %v1733
      %v1926 = vpack.c.b16 %v1798, %v1798
      %v1927 = vpack.c.b16 %v1799, %v1799
      %v1928 = vpack.c.b16 %v1800, %v1800
      %v1929 = vpack.c.b16 %v1801, %v1801
      %v1930 = vpack.c.b16 %v1802, %v1802
      %v1931 = vpack.c.b16 %v1803, %v1803
      %v1932 = vpack.c.b16 %v1804, %v1804
      %v1933 = vpack.c.b16 %v1805, %v1805
      %v1934 = vpack.c.b16 %v1806, %v1806
      %v1935 = vpack.c.b16 %v1807, %v1807
      %v1936 = vpack.c.b16 %v1808, %v1808
      %v1937 = vpack.c.b16 %v1809, %v1809
      %v1938 = vpack.c.b16 %v1810, %v1810
      %v1939 = vpack.c.b16 %v1811, %v1811
      %v1940 = vpack.c.b16 %v1812, %v1812
      %v1941 = vpack.c.b16 %v1813, %v1813
      %v1942 = vpack.c.b16 %v1814, %v1814
      %v1943 = vpack.c.b16 %v1815, %v1815
      %v1944 = vpack.c.b16 %v1816, %v1816
      %v1945 = vpack.c.b16 %v1817, %v1817
      %v1946 = vpack.c.b16 %v1818, %v1818
      %v1947 = vpack.c.b16 %v1819, %v1819
      %v1948 = vpack.c.b16 %v1820, %v1820
      %v1949 = vpack.c.b16 %v1821, %v1821
      %v1950 = vpack.c.b16 %v1822, %v1822
      %v1951 = vpack.c.b16 %v1823, %v1823
      %v1952 = vpack.c.b16 %v1824, %v1824
      %v1953 = vpack.c.b16 %v1825, %v1825
      %v1954 = vpack.c.b16 %v1826, %v1826
      %v1955 = vpack.c.b16 %v1827, %v1827
      %v1956 = vpack.c.b16 %v1828, %v1828
      %v1957 = vpack.c.b16 %v1829, %v1829
      %v1958 = vpack.c.b16 %v1830, %v1830
      %v1959 = vpack.c.b16 %v1831, %v1831
      %v1960 = vpack.c.b16 %v1832, %v1832
      %v1961 = vpack.c.b16 %v1833, %v1833
      %v1962 = vpack.c.b16 %v1834, %v1834
      %v1963 = vpack.c.b16 %v1835, %v1835
      %v1964 = vpack.c.b16 %v1836, %v1836
      %v1965 = vpack.c.b16 %v1837, %v1837
      %v1966 = vpack.c.b16 %v1838, %v1838
      %v1967 = vpack.c.b16 %v1839, %v1839
      %v1968 = vpack.c.b16 %v1840, %v1840
      %v1969 = vpack.c.b16 %v1841, %v1841
      %v1970 = vpack.c.b16 %v1842, %v1842
      %v1971 = vpack.c.b16 %v1843, %v1843
      %v1972 = vpack.c.b16 %v1844, %v1844
      %v1973 = vpack.c.b16 %v1845, %v1845
      %v1974 = vpack.c.b16 %v1846, %v1846
      %v1975 = vpack.c.b16 %v1847, %v1847
      %v1976 = vpack.c.b16 %v1848, %v1848
      %v1977 = vpack.c.b16 %v1849, %v1849
      %v1978 = vpack.c.b16 %v1850, %v1850
      %v1979 = vpack.c.b16 %v1851, %v1851
      %v1980 = vpack.c.b16 %v1852, %v1852
      %v1981 = vpack.c.b16 %v1853, %v1853
      %v1982 = vpack.c.b16 %v1854, %v1854
      %v1983 = vpack.c.b16 %v1855, %v1855
      %v1984 = vpack.c.b16 %v1856, %v1856
      %v1985 = vpack.c.b16 %v1857, %v1857
      %v1986 = vpack.c.b16 %v1858, %v1858
      %v1987 = vpack.c.b16 %v1859, %v1859
      %v1988 = vpack.c.b16 %v1860, %v1860
      %v1989 = vpack.c.b16 %v1861, %v1861
      %v1990 = vpack.c.b16 %v1862, %v1862
      %v1991 = vpack.c.b16 %v1863, %v1863
      %v1992 = vpack.c.b16 %v1864, %v1864
      %v1993 = vpack.c.b16 %v1865, %v1865
      %v1994 = vpack.c.b16 %v1866, %v1866
      %v1995 = vpack.c.b16 %v1867, %v1867
      %v1996 = vpack.c.b16 %v1868, %v1868
      %v1997 = vpack.c.b16 %v1869, %v1869
      %v1998 = vpack.c.b16 %v1870, %v1870
      %v1999 = vpack.c.b16 %v1871, %v1871
      %v2000 = vpack.c.b16 %v1872, %v1872
      %v2001 = vpack.c.b16 %v1873, %v1873
      %v2002 = vpack.c.b16 %v1874, %v1874
      %v2003 = vpack.c.b16 %v1875, %v1875
      %v2004 = vpack.c.b16 %v1876, %v1876
      %v2005 = vpack.c.b16 %v1877, %v1877
      %v2006 = vpack.c.b16 %v1878, %v1878
      %v2007 = vpack.c.b16 %v1879, %v1879
      %v2008 = vpack.c.b16 %v1880, %v1880
      %v2009 = vpack.c.b16 %v1881, %v1881
      %v2010 = vpack.c.b16 %v1882, %v1882
      %v2011 = vpack.c.b16 %v1883, %v1883
      %v2012 = vpack.c.b16 %v1884, %v1884
      %v2013 = vpack.c.b16 %v1885, %v1885
      %v2014 = vpack.c.b16 %v1886, %v1886
      %v2015 = vpack.c.b16 %v1887, %v1887
      %v2016 = vpack.c.b16 %v1888, %v1888
      %v2017 = vpack.c.b16 %v1889, %v1889
      %v2018 = vpack.c.b16 %v1890, %v1890
      %v2019 = vpack.c.b16 %v1891, %v1891
      %v2020 = vpack.c.b16 %v1892, %v1892
      %v2021 = vpack.c.b16 %v1893, %v1893
      %v2022 = vpack.c.b16 %v1894, %v1894
      %v2023 = vpack.c.b16 %v1895, %v1895
      %v2024 = vpack.c.b16 %v1896, %v1896
      %v2025 = vpack.c.b16 %v1897, %v1897
      %v2026 = vpack.c.b16 %v1898, %v1898
      %v2027 = vpack.c.b16 %v1899, %v1899
      %v2028 = vpack.c.b16 %v1900, %v1900
      %v2029 = vpack.c.b16 %v1901, %v1901
      %v2030 = vpack.c.b16 %v1902, %v1902
      %v2031 = vpack.c.b16 %v1903, %v1903
      %v2032 = vpack.c.b16 %v1904, %v1904
      %v2033 = vpack.c.b16 %v1905, %v1905
      %v2034 = vpack.c.b16 %v1906, %v1906
      %v2035 = vpack.c.b16 %v1907, %v1907
      %v2036 = vpack.c.b16 %v1908, %v1908
      %v2037 = vpack.c.b16 %v1909, %v1909
      %v2038 = vpack.c.b16 %v1910, %v1910
      %v2039 = vpack.c.b16 %v1911, %v1911
      %v2040 = vpack.c.b16 %v1912, %v1912
      %v2041 = vpack.c.b16 %v1913, %v1913
      %v2042 = vpack.c.b16 %v1914, %v1914
      %v2043 = vpack.c.b16 %v1915, %v1915
      %v2044 = vpack.c.b16 %v1916, %v1916
      %v2045 = vpack.c.b16 %v1917, %v1917
      %v2046 = vpack.c.b16 %v1918, %v1918
      %v2047 = vpack.c.b16 %v1919, %v1919
      %v2048 = vpack.c.b16 %v1920, %v1920
      %v2049 = vpack.c.b16 %v1921, %v1921
      %v2050 = vpack.c.b16 %v1922, %v1922
      %v2051 = vpack.c.b16 %v1923, %v1923
      %v2052 = vpack.c.b16 %v1924, %v1924
      %v2053 = vpack.c.b16 %v1925, %v1925
      %2182 = vst [vmem:[%s172] sm:$0xf] %v1926
      %2183 = vst [vmem:[%s172 + $0x4] sm:$0xf] %v1927
      %2184 = vst [vmem:[%s172 + $0x8] sm:$0xf] %v1928
      %2185 = vst [vmem:[%s172 + $0xc] sm:$0xf] %v1929
      %2186 = vst [vmem:[%s172 + $0x10] sm:$0xf] %v1930
      %2187 = vst [vmem:[%s172 + $0x14] sm:$0xf] %v1931
      %2188 = vst [vmem:[%s172 + $0x18] sm:$0xf] %v1932
      %2189 = vst [vmem:[%s172 + $0x1c] sm:$0xf] %v1933
      %2190 = vst [vmem:[%s172 + $0x20] sm:$0xf] %v1934
      %2191 = vst [vmem:[%s172 + $0x24] sm:$0xf] %v1935
      %2192 = vst [vmem:[%s172 + $0x28] sm:$0xf] %v1936
      %2193 = vst [vmem:[%s172 + $0x2c] sm:$0xf] %v1937
      %2194 = vst [vmem:[%s172 + $0x30] sm:$0xf] %v1938
      %2195 = vst [vmem:[%s172 + $0x34] sm:$0xf] %v1939
      %2196 = vst [vmem:[%s172 + $0x38] sm:$0xf] %v1940
      %2197 = vst [vmem:[%s172 + $0x3c] sm:$0xf] %v1941
      %2198 = vst [vmem:[%s172 + $0x40] sm:$0xf] %v1942
      %2199 = vst [vmem:[%s172 + $0x44] sm:$0xf] %v1943
      %2200 = vst [vmem:[%s172 + $0x48] sm:$0xf] %v1944
      %2201 = vst [vmem:[%s172 + $0x4c] sm:$0xf] %v1945
      %2202 = vst [vmem:[%s172 + $0x50] sm:$0xf] %v1946
      %2203 = vst [vmem:[%s172 + $0x54] sm:$0xf] %v1947
      %2204 = vst [vmem:[%s172 + $0x58] sm:$0xf] %v1948
      %2205 = vst [vmem:[%s172 + $0x5c] sm:$0xf] %v1949
      %2206 = vst [vmem:[%s172 + $0x60] sm:$0xf] %v1950
      %2207 = vst [vmem:[%s172 + $0x64] sm:$0xf] %v1951
      %2208 = vst [vmem:[%s172 + $0x68] sm:$0xf] %v1952
      %2209 = vst [vmem:[%s172 + $0x6c] sm:$0xf] %v1953
      %2210 = vst [vmem:[%s172 + $0x70] sm:$0xf] %v1954
      %2211 = vst [vmem:[%s172 + $0x74] sm:$0xf] %v1955
      %2212 = vst [vmem:[%s172 + $0x78] sm:$0xf] %v1956
      %2213 = vst [vmem:[%s172 + $0x7c] sm:$0xf] %v1957
      %2214 = vst [vmem:[%s172 + $0x80] sm:$0xf] %v1958
      %2215 = vst [vmem:[%s172 + $0x84] sm:$0xf] %v1959
      %2216 = vst [vmem:[%s172 + $0x88] sm:$0xf] %v1960
      %2217 = vst [vmem:[%s172 + $0x8c] sm:$0xf] %v1961
      %2218 = vst [vmem:[%s172 + $0x90] sm:$0xf] %v1962
      %2219 = vst [vmem:[%s172 + $0x94] sm:$0xf] %v1963
      %2220 = vst [vmem:[%s172 + $0x98] sm:$0xf] %v1964
      %2221 = vst [vmem:[%s172 + $0x9c] sm:$0xf] %v1965
      %2222 = vst [vmem:[%s172 + $0xa0] sm:$0xf] %v1966
      %2223 = vst [vmem:[%s172 + $0xa4] sm:$0xf] %v1967
      %2224 = vst [vmem:[%s172 + $0xa8] sm:$0xf] %v1968
      %2225 = vst [vmem:[%s172 + $0xac] sm:$0xf] %v1969
      %2226 = vst [vmem:[%s172 + $0xb0] sm:$0xf] %v1970
      %2227 = vst [vmem:[%s172 + $0xb4] sm:$0xf] %v1971
      %2228 = vst [vmem:[%s172 + $0xb8] sm:$0xf] %v1972
      %2229 = vst [vmem:[%s172 + $0xbc] sm:$0xf] %v1973
      %2230 = vst [vmem:[%s172 + $0xc0] sm:$0xf] %v1974
      %2231 = vst [vmem:[%s172 + $0xc4] sm:$0xf] %v1975
      %2232 = vst [vmem:[%s172 + $0xc8] sm:$0xf] %v1976
      %2233 = vst [vmem:[%s172 + $0xcc] sm:$0xf] %v1977
      %2234 = vst [vmem:[%s172 + $0xd0] sm:$0xf] %v1978
      %2235 = vst [vmem:[%s172 + $0xd4] sm:$0xf] %v1979
      %2236 = vst [vmem:[%s172 + $0xd8] sm:$0xf] %v1980
      %2237 = vst [vmem:[%s172 + $0xdc] sm:$0xf] %v1981
      %2238 = vst [vmem:[%s172 + $0xe0] sm:$0xf] %v1982
      %2239 = vst [vmem:[%s172 + $0xe4] sm:$0xf] %v1983
      %2240 = vst [vmem:[%s172 + $0xe8] sm:$0xf] %v1984
      %2241 = vst [vmem:[%s172 + $0xec] sm:$0xf] %v1985
      %2242 = vst [vmem:[%s172 + $0xf0] sm:$0xf] %v1986
      %2243 = vst [vmem:[%s172 + $0xf4] sm:$0xf] %v1987
      %2244 = vst [vmem:[%s172 + $0xf8] sm:$0xf] %v1988
      %2245 = vst [vmem:[%s172 + $0xfc] sm:$0xf] %v1989
      %2246 = vst [vmem:[%s172 + $0x100] sm:$0xf] %v1990
      %2247 = vst [vmem:[%s172 + $0x104] sm:$0xf] %v1991
      %2248 = vst [vmem:[%s172 + $0x108] sm:$0xf] %v1992
      %2249 = vst [vmem:[%s172 + $0x10c] sm:$0xf] %v1993
      %2250 = vst [vmem:[%s172 + $0x110] sm:$0xf] %v1994
      %2251 = vst [vmem:[%s172 + $0x114] sm:$0xf] %v1995
      %2252 = vst [vmem:[%s172 + $0x118] sm:$0xf] %v1996
      %2253 = vst [vmem:[%s172 + $0x11c] sm:$0xf] %v1997
      %2254 = vst [vmem:[%s172 + $0x120] sm:$0xf] %v1998
      %2255 = vst [vmem:[%s172 + $0x124] sm:$0xf] %v1999
      %2256 = vst [vmem:[%s172 + $0x128] sm:$0xf] %v2000
      %2257 = vst [vmem:[%s172 + $0x12c] sm:$0xf] %v2001
      %2258 = vst [vmem:[%s172 + $0x130] sm:$0xf] %v2002
      %2259 = vst [vmem:[%s172 + $0x134] sm:$0xf] %v2003
      %2260 = vst [vmem:[%s172 + $0x138] sm:$0xf] %v2004
      %2261 = vst [vmem:[%s172 + $0x13c] sm:$0xf] %v2005
      %2262 = vst [vmem:[%s172 + $0x140] sm:$0xf] %v2006
      %2263 = vst [vmem:[%s172 + $0x144] sm:$0xf] %v2007
      %2264 = vst [vmem:[%s172 + $0x148] sm:$0xf] %v2008
      %2265 = vst [vmem:[%s172 + $0x14c] sm:$0xf] %v2009
      %2266 = vst [vmem:[%s172 + $0x150] sm:$0xf] %v2010
      %2267 = vst [vmem:[%s172 + $0x154] sm:$0xf] %v2011
      %2268 = vst [vmem:[%s172 + $0x158] sm:$0xf] %v2012
      %2269 = vst [vmem:[%s172 + $0x15c] sm:$0xf] %v2013
      %2270 = vst [vmem:[%s172 + $0x160] sm:$0xf] %v2014
      %2271 = vst [vmem:[%s172 + $0x164] sm:$0xf] %v2015
      %2272 = vst [vmem:[%s172 + $0x168] sm:$0xf] %v2016
      %2273 = vst [vmem:[%s172 + $0x16c] sm:$0xf] %v2017
      %2274 = vst [vmem:[%s172 + $0x170] sm:$0xf] %v2018
      %2275 = vst [vmem:[%s172 + $0x174] sm:$0xf] %v2019
      %2276 = vst [vmem:[%s172 + $0x178] sm:$0xf] %v2020
      %2277 = vst [vmem:[%s172 + $0x17c] sm:$0xf] %v2021
      %2278 = vst [vmem:[%s172 + $0x180] sm:$0xf] %v2022
      %2279 = vst [vmem:[%s172 + $0x184] sm:$0xf] %v2023
      %2280 = vst [vmem:[%s172 + $0x188] sm:$0xf] %v2024
      %2281 = vst [vmem:[%s172 + $0x18c] sm:$0xf] %v2025
      %2282 = vst [vmem:[%s172 + $0x190] sm:$0xf] %v2026
      %2283 = vst [vmem:[%s172 + $0x194] sm:$0xf] %v2027
      %2284 = vst [vmem:[%s172 + $0x198] sm:$0xf] %v2028
      %2285 = vst [vmem:[%s172 + $0x19c] sm:$0xf] %v2029
      %2286 = vst [vmem:[%s172 + $0x1a0] sm:$0xf] %v2030
      %2287 = vst [vmem:[%s172 + $0x1a4] sm:$0xf] %v2031
      %2288 = vst [vmem:[%s172 + $0x1a8] sm:$0xf] %v2032
      %2289 = vst [vmem:[%s172 + $0x1ac] sm:$0xf] %v2033
      %2290 = vst [vmem:[%s172 + $0x1b0] sm:$0xf] %v2034
      %2291 = vst [vmem:[%s172 + $0x1b4] sm:$0xf] %v2035
      %2292 = vst [vmem:[%s172 + $0x1b8] sm:$0xf] %v2036
      %2293 = vst [vmem:[%s172 + $0x1bc] sm:$0xf] %v2037
      %2294 = vst [vmem:[%s172 + $0x1c0] sm:$0xf] %v2038
      %2295 = vst [vmem:[%s172 + $0x1c4] sm:$0xf] %v2039
      %2296 = vst [vmem:[%s172 + $0x1c8] sm:$0xf] %v2040
      %2297 = vst [vmem:[%s172 + $0x1cc] sm:$0xf] %v2041
      %2298 = vst [vmem:[%s172 + $0x1d0] sm:$0xf] %v2042
      %2299 = vst [vmem:[%s172 + $0x1d4] sm:$0xf] %v2043
      %2300 = vst [vmem:[%s172 + $0x1d8] sm:$0xf] %v2044
      %2301 = vst [vmem:[%s172 + $0x1dc] sm:$0xf] %v2045
      %2302 = vst [vmem:[%s172 + $0x1e0] sm:$0xf] %v2046
      %2303 = vst [vmem:[%s172 + $0x1e4] sm:$0xf] %v2047
      %2304 = vst [vmem:[%s172 + $0x1e8] sm:$0xf] %v2048
      %2305 = vst [vmem:[%s172 + $0x1ec] sm:$0xf] %v2049
      %2306 = vst [vmem:[%s172 + $0x1f0] sm:$0xf] %v2050
      %2307 = vst [vmem:[%s172 + $0x1f4] sm:$0xf] %v2051
      %2308 = vst [vmem:[%s172 + $0x1f8] sm:$0xf] %v2052
      %2309 = vst [vmem:[%s172 + $0x1fc] sm:$0xf] %v2053
      %s2310 = smul.u32 128, %s14
      %p2311 = scmp.lt.s32.totalorder %s2310, 255
      %s2312 = scalar_select %p2311, %s2310, 255
      %s2313 = smul.addr %s2312, 4
      %s2314 = scalar_lea.vmem %s3, %s2313
      // Predicated region
      $region33: #{netd2_forward.4} parent=31 // pred_check
        %p2315 = pneg %p100
      $region34: #{netd2_forward.4} parent=31 // pred_check_branch
        %2317 = sbr.rel (%p2315) target = $region36
      $region35: #{netd2_forward.4} parent=31 // pred_region
        %s2318 = smul.u32 128, %s14
      $region36: #{netd2_forward.4} parent=31 // pred_fallthru
        _
    $region32: #{netd2_forward.4} parent=5 // pred_fallthru
      _
    %p2319 = scmp.le.s32.totalorder 2, %s9
    // Predicated region
    $region37: #{netd2_forward.4} parent=5 // pred_check
      %p2320 = pneg %p2319
    $region38: #{netd2_forward.4} parent=5 // pred_check_branch
      %2322 = sbr.rel (%p2320) target = $region40
    $region39: #{netd2_forward.4} parent=5 // pred_region
      %s2323 = ssub.s32 %s9, 2
      // Predicated region
      $region41: #{netd2_forward.4} parent=39 // pred_check
        %p2324 = pneg %p106
      $region42: #{netd2_forward.4} parent=39 // pred_check_branch
        %2326 = sbr.rel (%p2324) target = $region44
      $region43: #{netd2_forward.4} parent=39 // pred_region
        %s2327 = smul.u32 128, %s15
        %p2328 = scmp.lt.s32.totalorder %s2327, 255
        %s2329 = scalar_select %p2328, %s2327, 255
        %s2330 = smul.addr %s2329, 4
        %s2331 = scalar_lea.vmem %s3, %s2330
      $region44: #{netd2_forward.4} parent=39 // pred_fallthru
        _
    $region40: #{netd2_forward.4} parent=5 // pred_fallthru
      _
  $region6: #{netd2_forward.4} parent=0 // loop_footer
    %s13 = sadd.s32 1, %s9
  $region7: #{netd2_forward.4} parent=0 // loop_footer_branch
    %8 = sbr.rel target = $region3
  $region8: #{netd2_forward.4} parent=0 // loop_exit
    _

// kernel: netd2_forward.5
$region0: #{netd2_forward.5}
  #allocation0 [shape = 'u32[]', space=smem, size = 0x4, offset = 0x4, fixed_abs, tag = 'smem constant byte address 0x4 - core index']
  #allocation1 [shape = 'u32[144,128]{1,0:T(1,128)}', space=vmem, size = 0x12000, scoped, tag = 'internal scratch']
  %s0 = inlined_call_operand.vmem [shape: bf16[512,200], index: 0, kind: input, shape index: {}]
  %s1 = inlined_call_operand.vmem [shape: bf16[200,128], index: 1, kind: input, shape index: {}]
  %s2 = inlined_call_operand.vmem [shape: f32[1,128], index: 2, kind: input, shape index: {}]
  %s3 = inlined_call_operand.vmem [shape: bf16[512,128], index: 3, kind: output, shape index: {}]
  %s4 = sld [smem:[#allocation0]]
  $region22: #{netd2_forward.5} parent=0
    _
  %s6 = ssub.s32 1, %s4
  %s7 = scalar_select 0, %s6, %s4
  // Predicated region
  $region2: #{netd2_forward.5} parent=0 // pred_check
    _
  $region3: #{netd2_forward.5} parent=0 // pred_check_branch
    %9 = sbr.rel (0) target = $region5
  $region4: #{netd2_forward.5} parent=0 // pred_region
    _
  $region5: #{netd2_forward.5} parent=0 // pred_fallthru
    _
  // Predicated region
  $region6: #{netd2_forward.5} parent=0 // pred_check
    _
  $region7: #{netd2_forward.5} parent=0 // pred_check_branch
    %11 = sbr.rel (0) target = $region9
  $region8: #{netd2_forward.5} parent=0 // pred_region
    _
  $region9: #{netd2_forward.5} parent=0 // pred_fallthru
    _
  // Predicated region
  $region10: #{netd2_forward.5} parent=0 // pred_check
    _
  $region11: #{netd2_forward.5} parent=0 // pred_check_branch
    %13 = sbr.rel (0) target = $region13
  $region12: #{netd2_forward.5} parent=0 // pred_region
    _
  $region13: #{netd2_forward.5} parent=0 // pred_fallthru
    _
  %v15 = vld [vmem:[%s0] sm:$0xff]
  %v16 = vld [vmem:[%s0 + $0x8] sm:$0xff]
  %v17 = vld [vmem:[%s0 + $0x10] sm:$0xff]
  %v18 = vld [vmem:[%s0 + $0x18] sm:$0xff]
  %v19 = vld [vmem:[%s0 + $0x20] sm:$0xff]
  %v20 = vld [vmem:[%s0 + $0x28] sm:$0xff]
  %v21 = vld [vmem:[%s0 + $0x30] sm:$0xff]
  %v22 = vld [vmem:[%s0 + $0x38] sm:$0xff]
  %v23 = vld [vmem:[%s0 + $0x40] sm:$0xff]
  %v24 = vld [vmem:[%s0 + $0x48] sm:$0xff]
  %v25 = vld [vmem:[%s0 + $0x50] sm:$0xff]
  %v26 = vld [vmem:[%s0 + $0x58] sm:$0xff]
  %v27 = vld [vmem:[%s0 + $0x60] sm:$0xff]
  %v28 = vld [vmem:[%s0 + $0x68] sm:$0xff]
  %v29 = vld [vmem:[%s0 + $0x70] sm:$0xff]
  %v30 = vld [vmem:[%s0 + $0x78] sm:$0xff]
  %v31 = vld [vmem:[%s0 + $0x80] sm:$0xff]
  %v32 = vld [vmem:[%s0 + $0x88] sm:$0xff]
  %v33 = vld [vmem:[%s0 + $0x90] sm:$0xff]
  %v34 = vld [vmem:[%s0 + $0x98] sm:$0xff]
  %v35 = vld [vmem:[%s0 + $0xa0] sm:$0xff]
  %v36 = vld [vmem:[%s0 + $0xa8] sm:$0xff]
  %v37 = vld [vmem:[%s0 + $0xb0] sm:$0xff]
  %v38 = vld [vmem:[%s0 + $0xb8] sm:$0xff]
  %v39 = vld [vmem:[%s0 + $0xc0] sm:$0xff]
  %v40 = vld [vmem:[%s0 + $0xc8] sm:$0xff]
  %v41 = vld [vmem:[%s0 + $0xd0] sm:$0xff]
  %v42 = vld [vmem:[%s0 + $0xd8] sm:$0xff]
  %v43 = vld [vmem:[%s0 + $0xe0] sm:$0xff]
  %v44 = vld [vmem:[%s0 + $0xe8] sm:$0xff]
  %v45 = vld [vmem:[%s0 + $0xf0] sm:$0xff]
  %v46 = vld [vmem:[%s0 + $0xf8] sm:$0xff]
  %v47 = vld [vmem:[%s0 + $0x100] sm:$0xff]
  %v48 = vld [vmem:[%s0 + $0x108] sm:$0xff]
  %v49 = vld [vmem:[%s0 + $0x110] sm:$0xff]
  %v50 = vld [vmem:[%s0 + $0x118] sm:$0xff]
  %v51 = vld [vmem:[%s0 + $0x120] sm:$0xff]
  %v52 = vld [vmem:[%s0 + $0x128] sm:$0xff]
  %v53 = vld [vmem:[%s0 + $0x130] sm:$0xff]
  %v54 = vld [vmem:[%s0 + $0x138] sm:$0xff]
  %v55 = vld [vmem:[%s0 + $0x140] sm:$0xff]
  %v56 = vld [vmem:[%s0 + $0x148] sm:$0xff]
  %v57 = vld [vmem:[%s0 + $0x150] sm:$0xff]
  %v58 = vld [vmem:[%s0 + $0x158] sm:$0xff]
  %v59 = vld [vmem:[%s0 + $0x160] sm:$0xff]
  %v60 = vld [vmem:[%s0 + $0x168] sm:$0xff]
  %v61 = vld [vmem:[%s0 + $0x170] sm:$0xff]
  %v62 = vld [vmem:[%s0 + $0x178] sm:$0xff]
  %v63 = vld [vmem:[%s0 + $0x180] sm:$0xff]
  %v64 = vld [vmem:[%s0 + $0x188] sm:$0xff]
  %v65 = vld [vmem:[%s0 + $0x190] sm:$0xff]
  %v66 = vld [vmem:[%s0 + $0x198] sm:$0xff]
  %v67 = vld [vmem:[%s0 + $0x1a0] sm:$0xff]
  %v68 = vld [vmem:[%s0 + $0x1a8] sm:$0xff]
  %v69 = vld [vmem:[%s0 + $0x1b0] sm:$0xff]
  %v70 = vld [vmem:[%s0 + $0x1b8] sm:$0xff]
  %v71 = vld [vmem:[%s0 + $0x1c0] sm:$0xff]
  %v72 = vld [vmem:[%s0 + $0x1c8] sm:$0xff]
  %v73 = vld [vmem:[%s0 + $0x1d0] sm:$0xff]
  %v74 = vld [vmem:[%s0 + $0x1d8] sm:$0xff]
  %v75 = vld [vmem:[%s0 + $0x1e0] sm:$0xff]
  %v76 = vld [vmem:[%s0 + $0x1e8] sm:$0xff]
  %v77 = vld [vmem:[%s0 + $0x1f0] sm:$0xff]
  %v78 = vld [vmem:[%s0 + $0x1f8] sm:$0xff]
  %v79 = vld [vmem:[%s1] sm:$0xf]
  %v80 = vld [vmem:[%s1 + $0x4] sm:$0xf]
  %v81 = vld [vmem:[%s1 + $0x8] sm:$0xf]
  %v82 = vld [vmem:[%s1 + $0xc] sm:$0xf]
  %v83 = vld [vmem:[%s1 + $0x10] sm:$0xf]
  %v84 = vld [vmem:[%s1 + $0x14] sm:$0xf]
  %v85 = vld [vmem:[%s1 + $0x18] sm:$0xf]
  %v86 = vld [vmem:[%s1 + $0x1c] sm:$0xf]
  %v87 = vld [vmem:[%s1 + $0x20] sm:$0xf]
  %v88 = vld [vmem:[%s1 + $0x24] sm:$0xf]
  %v89 = vld [vmem:[%s1 + $0x28] sm:$0xf]
  %v90 = vld [vmem:[%s1 + $0x2c] sm:$0xf]
  %v91 = vld [vmem:[%s1 + $0x30] sm:$0xf]
  %v92 = vld [vmem:[%s1 + $0x34] sm:$0xf]
  %v93 = vld [vmem:[%s1 + $0x38] sm:$0xf]
  %v94 = vld [vmem:[%s1 + $0x3c] sm:$0xf]
  %v95 = vld [vmem:[%s1 + $0x40] sm:$0xf]
  %v96 = vld [vmem:[%s1 + $0x44] sm:$0xf]
  %v97 = vld [vmem:[%s1 + $0x48] sm:$0xf]
  %v98 = vld [vmem:[%s1 + $0x4c] sm:$0xf]
  %v99 = vld [vmem:[%s1 + $0x50] sm:$0xf]
  %v100 = vld [vmem:[%s1 + $0x54] sm:$0xf]
  %v101 = vld [vmem:[%s1 + $0x58] sm:$0xf]
  %v102 = vld [vmem:[%s1 + $0x5c] sm:$0xf]
  %v103 = vld [vmem:[%s1 + $0x60] sm:$0xf]
  %v104 = vld [vmem:[%s2] sm:$0x1]
  %v106 = vlaneseq
  %v107 = vshrl.u32 %v106, 7
  %v108 = vsub.s32 0, %v107
  %v109 = vrot.slane %v104, %v108
  %v175 = vunpack.c.l.b16 %v15
  %v176 = vunpack.c.h.b16 %v15
  %v177 = vunpack.c.l.b16 %v16
  %v178 = vunpack.c.h.b16 %v16
  %v179 = vunpack.c.l.b16 %v17
  %v180 = vunpack.c.h.b16 %v17
  %v181 = vunpack.c.l.b16 %v18
  %v182 = vunpack.c.h.b16 %v18
  %v183 = vunpack.c.l.b16 %v19
  %v184 = vunpack.c.h.b16 %v19
  %v185 = vunpack.c.l.b16 %v20
  %v186 = vunpack.c.h.b16 %v20
  %v187 = vunpack.c.l.b16 %v21
  %v188 = vunpack.c.h.b16 %v21
  %v189 = vunpack.c.l.b16 %v22
  %v190 = vunpack.c.h.b16 %v22
  %v191 = vunpack.c.l.b16 %v23
  %v192 = vunpack.c.h.b16 %v23
  %v193 = vunpack.c.l.b16 %v24
  %v194 = vunpack.c.h.b16 %v24
  %v195 = vunpack.c.l.b16 %v25
  %v196 = vunpack.c.h.b16 %v25
  %v197 = vunpack.c.l.b16 %v26
  %v198 = vunpack.c.h.b16 %v26
  %v199 = vunpack.c.l.b16 %v27
  %v200 = vunpack.c.h.b16 %v27
  %v201 = vunpack.c.l.b16 %v28
  %v202 = vunpack.c.h.b16 %v28
  %v203 = vunpack.c.l.b16 %v29
  %v204 = vunpack.c.h.b16 %v29
  %v205 = vunpack.c.l.b16 %v30
  %v206 = vunpack.c.h.b16 %v30
  %v207 = vunpack.c.l.b16 %v31
  %v208 = vunpack.c.h.b16 %v31
  %v209 = vunpack.c.l.b16 %v32
  %v210 = vunpack.c.h.b16 %v32
  %v211 = vunpack.c.l.b16 %v33
  %v212 = vunpack.c.h.b16 %v33
  %v213 = vunpack.c.l.b16 %v34
  %v214 = vunpack.c.h.b16 %v34
  %v215 = vunpack.c.l.b16 %v35
  %v216 = vunpack.c.h.b16 %v35
  %v217 = vunpack.c.l.b16 %v36
  %v218 = vunpack.c.h.b16 %v36
  %v219 = vunpack.c.l.b16 %v37
  %v220 = vunpack.c.h.b16 %v37
  %v221 = vunpack.c.l.b16 %v38
  %v222 = vunpack.c.h.b16 %v38
  %v223 = vunpack.c.l.b16 %v39
  %v224 = vunpack.c.h.b16 %v39
  %v225 = vunpack.c.l.b16 %v40
  %v226 = vunpack.c.h.b16 %v40
  %v227 = vunpack.c.l.b16 %v41
  %v228 = vunpack.c.h.b16 %v41
  %v229 = vunpack.c.l.b16 %v42
  %v230 = vunpack.c.h.b16 %v42
  %v231 = vunpack.c.l.b16 %v43
  %v232 = vunpack.c.h.b16 %v43
  %v233 = vunpack.c.l.b16 %v44
  %v234 = vunpack.c.h.b16 %v44
  %v235 = vunpack.c.l.b16 %v45
  %v236 = vunpack.c.h.b16 %v45
  %v237 = vunpack.c.l.b16 %v46
  %v238 = vunpack.c.h.b16 %v46
  %v239 = vunpack.c.l.b16 %v47
  %v240 = vunpack.c.h.b16 %v47
  %v241 = vunpack.c.l.b16 %v48
  %v242 = vunpack.c.h.b16 %v48
  %v243 = vunpack.c.l.b16 %v49
  %v244 = vunpack.c.h.b16 %v49
  %v245 = vunpack.c.l.b16 %v50
  %v246 = vunpack.c.h.b16 %v50
  %v247 = vunpack.c.l.b16 %v51
  %v248 = vunpack.c.h.b16 %v51
  %v249 = vunpack.c.l.b16 %v52
  %v250 = vunpack.c.h.b16 %v52
  %v251 = vunpack.c.l.b16 %v53
  %v252 = vunpack.c.h.b16 %v53
  %v253 = vunpack.c.l.b16 %v54
  %v254 = vunpack.c.h.b16 %v54
  %v255 = vunpack.c.l.b16 %v55
  %v256 = vunpack.c.h.b16 %v55
  %v257 = vunpack.c.l.b16 %v56
  %v258 = vunpack.c.h.b16 %v56
  %v259 = vunpack.c.l.b16 %v57
  %v260 = vunpack.c.h.b16 %v57
  %v261 = vunpack.c.l.b16 %v58
  %v262 = vunpack.c.h.b16 %v58
  %v263 = vunpack.c.l.b16 %v59
  %v264 = vunpack.c.h.b16 %v59
  %v265 = vunpack.c.l.b16 %v60
  %v266 = vunpack.c.h.b16 %v60
  %v267 = vunpack.c.l.b16 %v61
  %v268 = vunpack.c.h.b16 %v61
  %v269 = vunpack.c.l.b16 %v62
  %v270 = vunpack.c.h.b16 %v62
  %v271 = vunpack.c.l.b16 %v63
  %v272 = vunpack.c.h.b16 %v63
  %v273 = vunpack.c.l.b16 %v64
  %v274 = vunpack.c.h.b16 %v64
  %v275 = vunpack.c.l.b16 %v65
  %v276 = vunpack.c.h.b16 %v65
  %v277 = vunpack.c.l.b16 %v66
  %v278 = vunpack.c.h.b16 %v66
  %v279 = vunpack.c.l.b16 %v67
  %v280 = vunpack.c.h.b16 %v67
  %v281 = vunpack.c.l.b16 %v68
  %v282 = vunpack.c.h.b16 %v68
  %v283 = vunpack.c.l.b16 %v69
  %v284 = vunpack.c.h.b16 %v69
  %v285 = vunpack.c.l.b16 %v70
  %v286 = vunpack.c.h.b16 %v70
  %v287 = vunpack.c.l.b16 %v71
  %v288 = vunpack.c.h.b16 %v71
  %v289 = vunpack.c.l.b16 %v72
  %v290 = vunpack.c.h.b16 %v72
  %v291 = vunpack.c.l.b16 %v73
  %v292 = vunpack.c.h.b16 %v73
  %v293 = vunpack.c.l.b16 %v74
  %v294 = vunpack.c.h.b16 %v74
  %v295 = vunpack.c.l.b16 %v75
  %v296 = vunpack.c.h.b16 %v75
  %v297 = vunpack.c.l.b16 %v76
  %v298 = vunpack.c.h.b16 %v76
  %v299 = vunpack.c.l.b16 %v77
  %v300 = vunpack.c.h.b16 %v77
  %v301 = vunpack.c.l.b16 %v78
  %v302 = vunpack.c.h.b16 %v78
  %v303 = vpack.c.b16 %v177, %v175
  %v304 = vpack.c.b16 %v178, %v176
  %v305 = vpack.c.b16 %v181, %v179
  %v306 = vpack.c.b16 %v182, %v180
  %v307 = vpack.c.b16 %v185, %v183
  %v308 = vpack.c.b16 %v186, %v184
  %v309 = vpack.c.b16 %v189, %v187
  %v310 = vpack.c.b16 %v190, %v188
  %v311 = vpack.c.b16 %v193, %v191
  %v312 = vpack.c.b16 %v194, %v192
  %v313 = vpack.c.b16 %v197, %v195
  %v314 = vpack.c.b16 %v198, %v196
  %v315 = vpack.c.b16 %v201, %v199
  %v316 = vpack.c.b16 %v202, %v200
  %v317 = vpack.c.b16 %v205, %v203
  %v318 = vpack.c.b16 %v206, %v204
  %v319 = vpack.c.b16 %v209, %v207
  %v320 = vpack.c.b16 %v210, %v208
  %v321 = vpack.c.b16 %v213, %v211
  %v322 = vpack.c.b16 %v214, %v212
  %v323 = vpack.c.b16 %v217, %v215
  %v324 = vpack.c.b16 %v218, %v216
  %v325 = vpack.c.b16 %v221, %v219
  %v326 = vpack.c.b16 %v222, %v220
  %v327 = vpack.c.b16 %v225, %v223
  %v328 = vpack.c.b16 %v226, %v224
  %v329 = vpack.c.b16 %v229, %v227
  %v330 = vpack.c.b16 %v230, %v228
  %v331 = vpack.c.b16 %v233, %v231
  %v332 = vpack.c.b16 %v234, %v232
  %v333 = vpack.c.b16 %v237, %v235
  %v334 = vpack.c.b16 %v238, %v236
  %v335 = vpack.c.b16 %v241, %v239
  %v336 = vpack.c.b16 %v242, %v240
  %v337 = vpack.c.b16 %v245, %v243
  %v338 = vpack.c.b16 %v246, %v244
  %v339 = vpack.c.b16 %v249, %v247
  %v340 = vpack.c.b16 %v250, %v248
  %v341 = vpack.c.b16 %v253, %v251
  %v342 = vpack.c.b16 %v254, %v252
  %v343 = vpack.c.b16 %v257, %v255
  %v344 = vpack.c.b16 %v258, %v256
  %v345 = vpack.c.b16 %v261, %v259
  %v346 = vpack.c.b16 %v262, %v260
  %v347 = vpack.c.b16 %v265, %v263
  %v348 = vpack.c.b16 %v266, %v264
  %v349 = vpack.c.b16 %v269, %v267
  %v350 = vpack.c.b16 %v270, %v268
  %v351 = vpack.c.b16 %v273, %v271
  %v352 = vpack.c.b16 %v274, %v272
  %v353 = vpack.c.b16 %v277, %v275
  %v354 = vpack.c.b16 %v278, %v276
  %v355 = vpack.c.b16 %v281, %v279
  %v356 = vpack.c.b16 %v282, %v280
  %v357 = vpack.c.b16 %v285, %v283
  %v358 = vpack.c.b16 %v286, %v284
  %v359 = vpack.c.b16 %v289, %v287
  %v360 = vpack.c.b16 %v290, %v288
  %v361 = vpack.c.b16 %v293, %v291
  %v362 = vpack.c.b16 %v294, %v292
  %v363 = vpack.c.b16 %v297, %v295
  %v364 = vpack.c.b16 %v298, %v296
  %v365 = vpack.c.b16 %v301, %v299
  %v366 = vpack.c.b16 %v302, %v300
  %v424 = vunpack.c.l.b16 %v79
  %v425 = vunpack.c.l.b16 %v80
  %v426 = vunpack.c.l.b16 %v81
  %v427 = vunpack.c.l.b16 %v82
  %v428 = vunpack.c.l.b16 %v83
  %v429 = vunpack.c.l.b16 %v84
  %v430 = vunpack.c.l.b16 %v85
  %v431 = vunpack.c.l.b16 %v86
  %v432 = vunpack.c.l.b16 %v87
  %v433 = vunpack.c.l.b16 %v88
  %v434 = vunpack.c.l.b16 %v89
  %v435 = vunpack.c.l.b16 %v90
  %v436 = vunpack.c.l.b16 %v91
  %v437 = vunpack.c.l.b16 %v92
  %v438 = vunpack.c.l.b16 %v93
  %v439 = vunpack.c.l.b16 %v94
  %v440 = vunpack.c.l.b16 %v95
  %v441 = vunpack.c.l.b16 %v96
  %v442 = vunpack.c.l.b16 %v97
  %v443 = vunpack.c.l.b16 %v98
  %v444 = vunpack.c.l.b16 %v99
  %v445 = vunpack.c.l.b16 %v100
  %v446 = vunpack.c.l.b16 %v101
  %v447 = vunpack.c.l.b16 %v102
  %v448 = vunpack.c.l.b16 %v103
  %v449 = vpack.c.b16 %v425, %v424
  %v450 = vpack.c.b16 %v427, %v426
  %v451 = vpack.c.b16 %v429, %v428
  %v452 = vpack.c.b16 %v431, %v430
  %v453 = vpack.c.b16 %v433, %v432
  %v454 = vpack.c.b16 %v435, %v434
  %v455 = vpack.c.b16 %v437, %v436
  %v456 = vpack.c.b16 %v439, %v438
  %v457 = vpack.c.b16 %v441, %v440
  %v458 = vpack.c.b16 %v443, %v442
  %v459 = vpack.c.b16 %v445, %v444
  %v460 = vpack.c.b16 %v447, %v446
  %v461 = vpack.c.b16 %v448, %v448
  %vm474 = vcmask 588800
  %v476 = vsel %vm474, %v304, 0
  %v479 = vsel %vm474, %v306, 0
  %v482 = vsel %vm474, %v308, 0
  %v485 = vsel %vm474, %v310, 0
  %v488 = vsel %vm474, %v312, 0
  %v491 = vsel %vm474, %v314, 0
  %v494 = vsel %vm474, %v316, 0
  %v497 = vsel %vm474, %v318, 0
  %v500 = vsel %vm474, %v320, 0
  %v503 = vsel %vm474, %v322, 0
  %v506 = vsel %vm474, %v324, 0
  %v509 = vsel %vm474, %v326, 0
  %v512 = vsel %vm474, %v328, 0
  %v515 = vsel %vm474, %v330, 0
  %v518 = vsel %vm474, %v332, 0
  %v521 = vsel %vm474, %v334, 0
  %v524 = vsel %vm474, %v336, 0
  %v527 = vsel %vm474, %v338, 0
  %v530 = vsel %vm474, %v340, 0
  %v533 = vsel %vm474, %v342, 0
  %v536 = vsel %vm474, %v344, 0
  %v539 = vsel %vm474, %v346, 0
  %v542 = vsel %vm474, %v348, 0
  %v545 = vsel %vm474, %v350, 0
  %v548 = vsel %vm474, %v352, 0
  %v551 = vsel %vm474, %v354, 0
  %v554 = vsel %vm474, %v356, 0
  %v557 = vsel %vm474, %v358, 0
  %v560 = vsel %vm474, %v360, 0
  %v563 = vsel %vm474, %v362, 0
  %v566 = vsel %vm474, %v364, 0
  %v569 = vsel %vm474, %v366, 0
  %vm571 = vcmask 1043456
  %v573 = vsel %vm571, %v461, 0
  %575 = vmatprep.subr.bf16.mxu0 0
  %576 = vmatpush1.bf16.msra.mxu0 %v456
  %577 = vmatprep.subr.bf16.mxu0 0
  %578 = vmatpush1.bf16.msra.mxu0 %v455
  %579 = vmatprep.subr.bf16.mxu0 0
  %580 = vmatpush1.bf16.msra.mxu0 %v454
  %581 = vmatprep.subr.bf16.mxu0 0
  %582 = vmatpush1.bf16.msra.mxu0 %v453
  %583 = vmatprep.subr.bf16.mxu0 0
  %584 = vmatpush1.bf16.msra.mxu0 %v452
  %585 = vmatprep.subr.bf16.mxu0 0
  %586 = vmatpush1.bf16.msra.mxu0 %v451
  %587 = vmatprep.subr.bf16.mxu0 0
  %588 = vmatpush1.bf16.msra.mxu0 %v450
  %589 = vmatprep.subr.bf16.mxu0 0
  %590 = vmatpush1.bf16.msra.mxu0 %v449
  %591 = vmatprep.subr.bf16.mxu0 0
  %592 = vmatpush2.bf16.msra.mxu0 0
  %593 = vmatprep.subr.bf16.mxu0 0
  %594 = vmatpush2.bf16.msra.mxu0 0
  %595 = vmatprep.subr.bf16.mxu0 0
  %596 = vmatpush2.bf16.msra.mxu0 0
  %597 = vmatprep.subr.bf16.mxu0 0
  %598 = vmatpush2.bf16.msra.mxu0 %v573
  %599 = vmatprep.subr.bf16.mxu0 0
  %600 = vmatpush2.bf16.msra.mxu0 %v460
  %601 = vmatprep.subr.bf16.mxu0 0
  %602 = vmatpush2.bf16.msra.mxu0 %v459
  %603 = vmatprep.subr.bf16.mxu0 0
  %604 = vmatpush2.bf16.msra.mxu0 %v458
  %605 = vmatprep.subr.bf16.mxu0 0
  %606 = vmatpush2.bf16.msra.mxu0 %v457
  %607 = vmatprep.mubr.bf16.mxu0 %v476
  %608 = vmatmul.mubr.bf16.gmra.mxu0 %v303
  %v609 = vpop.f32.mrf.mxu0
  %v610 = vadd.f32 %v109, %v609
  %v611 = vpop.f32.mrf.mxu0
  %v612 = vpop.f32.mrf.mxu0
  %v613 = vadd.f32 %v109, %v612
  %v614 = vpop.f32.mrf.mxu0
  %615 = vmatprep.mubr.bf16.mxu0 %v479
  %616 = vmatmul.mubr.bf16.gmra.mxu0 %v305
  %v617 = vpop.f32.mrf.mxu0
  %v618 = vadd.f32 %v109, %v617
  %v619 = vpop.f32.mrf.mxu0
  %v620 = vpop.f32.mrf.mxu0
  %v621 = vadd.f32 %v109, %v620
  %v622 = vpop.f32.mrf.mxu0
  %623 = vmatprep.mubr.bf16.mxu0 %v482
  %624 = vmatmul.mubr.bf16.gmra.mxu0 %v307
  %v625 = vpop.f32.mrf.mxu0
  %v626 = vadd.f32 %v109, %v625
  %v627 = vpop.f32.mrf.mxu0
  %v628 = vpop.f32.mrf.mxu0
  %v629 = vadd.f32 %v109, %v628
  %v630 = vpop.f32.mrf.mxu0
  %631 = vmatprep.mubr.bf16.mxu0 %v485
  %632 = vmatmul.mubr.bf16.gmra.mxu0 %v309
  %v633 = vpop.f32.mrf.mxu0
  %v634 = vadd.f32 %v109, %v633
  %v635 = vpop.f32.mrf.mxu0
  %v636 = vpop.f32.mrf.mxu0
  %v637 = vadd.f32 %v109, %v636
  %v638 = vpop.f32.mrf.mxu0
  %639 = vmatprep.mubr.bf16.mxu0 %v488
  %640 = vmatmul.mubr.bf16.gmra.mxu0 %v311
  %v641 = vpop.f32.mrf.mxu0
  %v642 = vadd.f32 %v109, %v641
  %v643 = vpop.f32.mrf.mxu0
  %v644 = vpop.f32.mrf.mxu0
  %v645 = vadd.f32 %v109, %v644
  %v646 = vpop.f32.mrf.mxu0
  %647 = vmatprep.mubr.bf16.mxu0 %v491
  %648 = vmatmul.mubr.bf16.gmra.mxu0 %v313
  %v649 = vpop.f32.mrf.mxu0
  %v650 = vadd.f32 %v109, %v649
  %v651 = vpop.f32.mrf.mxu0
  %v652 = vpop.f32.mrf.mxu0
  %v653 = vadd.f32 %v109, %v652
  %v654 = vpop.f32.mrf.mxu0
  %655 = vmatprep.mubr.bf16.mxu0 %v494
  %656 = vmatmul.mubr.bf16.gmra.mxu0 %v315
  %v657 = vpop.f32.mrf.mxu0
  %v658 = vadd.f32 %v109, %v657
  %v659 = vpop.f32.mrf.mxu0
  %v660 = vpop.f32.mrf.mxu0
  %v661 = vadd.f32 %v109, %v660
  %v662 = vpop.f32.mrf.mxu0
  %663 = vmatprep.mubr.bf16.mxu0 %v497
  %664 = vmatmul.mubr.bf16.gmra.mxu0 %v317
  %v665 = vpop.f32.mrf.mxu0
  %v666 = vadd.f32 %v109, %v665
  %v667 = vpop.f32.mrf.mxu0
  %v668 = vpop.f32.mrf.mxu0
  %v669 = vadd.f32 %v109, %v668
  %v670 = vpop.f32.mrf.mxu0
  %671 = vmatprep.mubr.bf16.mxu0 %v500
  %672 = vmatmul.mubr.bf16.gmra.mxu0 %v319
  %v673 = vpop.f32.mrf.mxu0
  %v674 = vadd.f32 %v109, %v673
  %v675 = vpop.f32.mrf.mxu0
  %v676 = vpop.f32.mrf.mxu0
  %v677 = vadd.f32 %v109, %v676
  %v678 = vpop.f32.mrf.mxu0
  %679 = vmatprep.mubr.bf16.mxu0 %v503
  %680 = vmatmul.mubr.bf16.gmra.mxu0 %v321
  %v681 = vpop.f32.mrf.mxu0
  %v682 = vadd.f32 %v109, %v681
  %v683 = vpop.f32.mrf.mxu0
  %v684 = vpop.f32.mrf.mxu0
  %v685 = vadd.f32 %v109, %v684
  %v686 = vpop.f32.mrf.mxu0
  %687 = vmatprep.mubr.bf16.mxu0 %v506
  %688 = vmatmul.mubr.bf16.gmra.mxu0 %v323
  %v689 = vpop.f32.mrf.mxu0
  %v690 = vadd.f32 %v109, %v689
  %v691 = vpop.f32.mrf.mxu0
  %v692 = vpop.f32.mrf.mxu0
  %v693 = vadd.f32 %v109, %v692
  %v694 = vpop.f32.mrf.mxu0
  %695 = vmatprep.mubr.bf16.mxu0 %v509
  %696 = vmatmul.mubr.bf16.gmra.mxu0 %v325
  %v697 = vpop.f32.mrf.mxu0
  %v698 = vadd.f32 %v109, %v697
  %v699 = vpop.f32.mrf.mxu0
  %v700 = vpop.f32.mrf.mxu0
  %v701 = vadd.f32 %v109, %v700
  %v702 = vpop.f32.mrf.mxu0
  %703 = vmatprep.mubr.bf16.mxu0 %v512
  %704 = vmatmul.mubr.bf16.gmra.mxu0 %v327
  %v705 = vpop.f32.mrf.mxu0
  %v706 = vadd.f32 %v109, %v705
  %v707 = vpop.f32.mrf.mxu0
  %v708 = vpop.f32.mrf.mxu0
  %v709 = vadd.f32 %v109, %v708
  %v710 = vpop.f32.mrf.mxu0
  %711 = vmatprep.mubr.bf16.mxu0 %v515
  %712 = vmatmul.mubr.bf16.gmra.mxu0 %v329
  %v713 = vpop.f32.mrf.mxu0
  %v714 = vadd.f32 %v109, %v713
  %v715 = vpop.f32.mrf.mxu0
  %v716 = vpop.f32.mrf.mxu0
  %v717 = vadd.f32 %v109, %v716
  %v718 = vpop.f32.mrf.mxu0
  %719 = vmatprep.mubr.bf16.mxu0 %v518
  %720 = vmatmul.mubr.bf16.gmra.mxu0 %v331
  %v721 = vpop.f32.mrf.mxu0
  %v722 = vadd.f32 %v109, %v721
  %v723 = vpop.f32.mrf.mxu0
  %v724 = vpop.f32.mrf.mxu0
  %v725 = vadd.f32 %v109, %v724
  %v726 = vpop.f32.mrf.mxu0
  %727 = vmatprep.mubr.bf16.mxu0 %v521
  %728 = vmatmul.mubr.bf16.gmra.mxu0 %v333
  %v729 = vpop.f32.mrf.mxu0
  %v730 = vadd.f32 %v109, %v729
  %v731 = vpop.f32.mrf.mxu0
  %v732 = vpop.f32.mrf.mxu0
  %v733 = vadd.f32 %v109, %v732
  %v734 = vpop.f32.mrf.mxu0
  %735 = vmatprep.mubr.bf16.mxu0 %v524
  %736 = vmatmul.mubr.bf16.gmra.mxu0 %v335
  %v737 = vpop.f32.mrf.mxu0
  %v738 = vadd.f32 %v109, %v737
  %v739 = vpop.f32.mrf.mxu0
  %v740 = vpop.f32.mrf.mxu0
  %v741 = vadd.f32 %v109, %v740
  %v742 = vpop.f32.mrf.mxu0
  %743 = vmatprep.mubr.bf16.mxu0 %v527
  %744 = vmatmul.mubr.bf16.gmra.mxu0 %v337
  %v745 = vpop.f32.mrf.mxu0
  %v746 = vadd.f32 %v109, %v745
  %v747 = vpop.f32.mrf.mxu0
  %v748 = vpop.f32.mrf.mxu0
  %v749 = vadd.f32 %v109, %v748
  %v750 = vpop.f32.mrf.mxu0
  %751 = vmatprep.mubr.bf16.mxu0 %v530
  %752 = vmatmul.mubr.bf16.gmra.mxu0 %v339
  %v753 = vpop.f32.mrf.mxu0
  %v754 = vadd.f32 %v109, %v753
  %v755 = vpop.f32.mrf.mxu0
  %v756 = vpop.f32.mrf.mxu0
  %v757 = vadd.f32 %v109, %v756
  %v758 = vpop.f32.mrf.mxu0
  %759 = vmatprep.mubr.bf16.mxu0 %v533
  %760 = vmatmul.mubr.bf16.gmra.mxu0 %v341
  %v761 = vpop.f32.mrf.mxu0
  %v762 = vadd.f32 %v109, %v761
  %v763 = vpop.f32.mrf.mxu0
  %v764 = vpop.f32.mrf.mxu0
  %v765 = vadd.f32 %v109, %v764
  %v766 = vpop.f32.mrf.mxu0
  %767 = vmatprep.mubr.bf16.mxu0 %v536
  %768 = vmatmul.mubr.bf16.gmra.mxu0 %v343
  %v769 = vpop.f32.mrf.mxu0
  %v770 = vadd.f32 %v109, %v769
  %v771 = vpop.f32.mrf.mxu0
  %v772 = vpop.f32.mrf.mxu0
  %v773 = vadd.f32 %v109, %v772
  %v774 = vpop.f32.mrf.mxu0
  %775 = vmatprep.mubr.bf16.mxu0 %v539
  %776 = vmatmul.mubr.bf16.gmra.mxu0 %v345
  %v777 = vpop.f32.mrf.mxu0
  %v778 = vadd.f32 %v109, %v777
  %v779 = vpop.f32.mrf.mxu0
  %v780 = vpop.f32.mrf.mxu0
  %v781 = vadd.f32 %v109, %v780
  %v782 = vpop.f32.mrf.mxu0
  %783 = vmatprep.mubr.bf16.mxu0 %v542
  %784 = vmatmul.mubr.bf16.gmra.mxu0 %v347
  %v785 = vpop.f32.mrf.mxu0
  %v786 = vadd.f32 %v109, %v785
  %v787 = vpop.f32.mrf.mxu0
  %v788 = vpop.f32.mrf.mxu0
  %v789 = vadd.f32 %v109, %v788
  %v790 = vpop.f32.mrf.mxu0
  %791 = vmatprep.mubr.bf16.mxu0 %v545
  %792 = vmatmul.mubr.bf16.gmra.mxu0 %v349
  %v793 = vpop.f32.mrf.mxu0
  %v794 = vadd.f32 %v109, %v793
  %v795 = vpop.f32.mrf.mxu0
  %v796 = vpop.f32.mrf.mxu0
  %v797 = vadd.f32 %v109, %v796
  %v798 = vpop.f32.mrf.mxu0
  %799 = vmatprep.mubr.bf16.mxu0 %v548
  %800 = vmatmul.mubr.bf16.gmra.mxu0 %v351
  %v801 = vpop.f32.mrf.mxu0
  %v802 = vadd.f32 %v109, %v801
  %v803 = vpop.f32.mrf.mxu0
  %v804 = vpop.f32.mrf.mxu0
  %v805 = vadd.f32 %v109, %v804
  %v806 = vpop.f32.mrf.mxu0
  %807 = vmatprep.mubr.bf16.mxu0 %v551
  %808 = vmatmul.mubr.bf16.gmra.mxu0 %v353
  %v809 = vpop.f32.mrf.mxu0
  %v810 = vadd.f32 %v109, %v809
  %v811 = vpop.f32.mrf.mxu0
  %v812 = vpop.f32.mrf.mxu0
  %v813 = vadd.f32 %v109, %v812
  %v814 = vpop.f32.mrf.mxu0
  %815 = vmatprep.mubr.bf16.mxu0 %v554
  %816 = vmatmul.mubr.bf16.gmra.mxu0 %v355
  %v817 = vpop.f32.mrf.mxu0
  %v818 = vadd.f32 %v109, %v817
  %v819 = vpop.f32.mrf.mxu0
  %v820 = vpop.f32.mrf.mxu0
  %v821 = vadd.f32 %v109, %v820
  %v822 = vpop.f32.mrf.mxu0
  %823 = vmatprep.mubr.bf16.mxu0 %v557
  %824 = vmatmul.mubr.bf16.gmra.mxu0 %v357
  %v825 = vpop.f32.mrf.mxu0
  %v826 = vadd.f32 %v109, %v825
  %v827 = vpop.f32.mrf.mxu0
  %v828 = vpop.f32.mrf.mxu0
  %v829 = vadd.f32 %v109, %v828
  %v830 = vpop.f32.mrf.mxu0
  %831 = vmatprep.mubr.bf16.mxu0 %v560
  %832 = vmatmul.mubr.bf16.gmra.mxu0 %v359
  %v833 = vpop.f32.mrf.mxu0
  %v834 = vadd.f32 %v109, %v833
  %v835 = vpop.f32.mrf.mxu0
  %v836 = vpop.f32.mrf.mxu0
  %v837 = vadd.f32 %v109, %v836
  %v838 = vpop.f32.mrf.mxu0
  %839 = vmatprep.mubr.bf16.mxu0 %v563
  %840 = vmatmul.mubr.bf16.gmra.mxu0 %v361
  %v841 = vpop.f32.mrf.mxu0
  %v842 = vadd.f32 %v109, %v841
  %v843 = vpop.f32.mrf.mxu0
  %v844 = vpop.f32.mrf.mxu0
  %v845 = vadd.f32 %v109, %v844
  %v846 = vpop.f32.mrf.mxu0
  %847 = vmatprep.mubr.bf16.mxu0 %v566
  %848 = vmatmul.mubr.bf16.gmra.mxu0 %v363
  %v849 = vpop.f32.mrf.mxu0
  %v850 = vadd.f32 %v109, %v849
  %v851 = vpop.f32.mrf.mxu0
  %v852 = vpop.f32.mrf.mxu0
  %v853 = vadd.f32 %v109, %v852
  %v854 = vpop.f32.mrf.mxu0
  %855 = vmatprep.mubr.bf16.mxu0 %v569
  %856 = vmatmul.mubr.bf16.gmra.mxu0 %v365
  %v857 = vpop.f32.mrf.mxu0
  %v858 = vadd.f32 %v109, %v857
  %v859 = vpop.f32.mrf.mxu0
  %v860 = vpop.f32.mrf.mxu0
  %v861 = vadd.f32 %v109, %v860
  %v862 = vpop.f32.mrf.mxu0
  %863 = vdwg.mxu0
  %v864 = vmul.f32 %v610, 0.2
  %v865 = vmul.f32 %v613, 0.2
  %v866 = vmul.f32 %v618, 0.2
  %v867 = vmul.f32 %v621, 0.2
  %v868 = vmul.f32 %v626, 0.2
  %v869 = vmul.f32 %v629, 0.2
  %v870 = vmul.f32 %v634, 0.2
  %v871 = vmul.f32 %v637, 0.2
  %v872 = vmul.f32 %v642, 0.2
  %v873 = vmul.f32 %v645, 0.2
  %v874 = vmul.f32 %v650, 0.2
  %v875 = vmul.f32 %v653, 0.2
  %v876 = vmul.f32 %v658, 0.2
  %v877 = vmul.f32 %v661, 0.2
  %v878 = vmul.f32 %v666, 0.2
  %v879 = vmul.f32 %v669, 0.2
  %v880 = vmul.f32 %v674, 0.2
  %v881 = vmul.f32 %v677, 0.2
  %v882 = vmul.f32 %v682, 0.2
  %v883 = vmul.f32 %v685, 0.2
  %v884 = vmul.f32 %v690, 0.2
  %v885 = vmul.f32 %v693, 0.2
  %v886 = vmul.f32 %v698, 0.2
  %v887 = vmul.f32 %v701, 0.2
  %v888 = vmul.f32 %v706, 0.2
  %v889 = vmul.f32 %v709, 0.2
  %v890 = vmul.f32 %v714, 0.2
  %v891 = vmul.f32 %v717, 0.2
  %v892 = vmul.f32 %v722, 0.2
  %v893 = vmul.f32 %v725, 0.2
  %v894 = vmul.f32 %v730, 0.2
  %v895 = vmul.f32 %v733, 0.2
  %v896 = vmul.f32 %v738, 0.2
  %v897 = vmul.f32 %v741, 0.2
  %v898 = vmul.f32 %v746, 0.2
  %v899 = vmul.f32 %v749, 0.2
  %v900 = vmul.f32 %v754, 0.2
  %v901 = vmul.f32 %v757, 0.2
  %v902 = vmul.f32 %v762, 0.2
  %v903 = vmul.f32 %v765, 0.2
  %v904 = vmul.f32 %v770, 0.2
  %v905 = vmul.f32 %v773, 0.2
  %v906 = vmul.f32 %v778, 0.2
  %v907 = vmul.f32 %v781, 0.2
  %v908 = vmul.f32 %v786, 0.2
  %v909 = vmul.f32 %v789, 0.2
  %v910 = vmul.f32 %v794, 0.2
  %v911 = vmul.f32 %v797, 0.2
  %v912 = vmul.f32 %v802, 0.2
  %v913 = vmul.f32 %v805, 0.2
  %v914 = vmul.f32 %v810, 0.2
  %v915 = vmul.f32 %v813, 0.2
  %v916 = vmul.f32 %v818, 0.2
  %v917 = vmul.f32 %v821, 0.2
  %v918 = vmul.f32 %v826, 0.2
  %v919 = vmul.f32 %v829, 0.2
  %v920 = vmul.f32 %v834, 0.2
  %v921 = vmul.f32 %v837, 0.2
  %v922 = vmul.f32 %v842, 0.2
  %v923 = vmul.f32 %v845, 0.2
  %v924 = vmul.f32 %v850, 0.2
  %v925 = vmul.f32 %v853, 0.2
  %v926 = vmul.f32 %v858, 0.2
  %v927 = vmul.f32 %v861, 0.2
  %v928 = vmax.f32 %v610, %v864
  %v929 = vmax.f32 %v613, %v865
  %v930 = vmax.f32 %v618, %v866
  %v931 = vmax.f32 %v621, %v867
  %v932 = vmax.f32 %v626, %v868
  %v933 = vmax.f32 %v629, %v869
  %v934 = vmax.f32 %v634, %v870
  %v935 = vmax.f32 %v637, %v871
  %v936 = vmax.f32 %v642, %v872
  %v937 = vmax.f32 %v645, %v873
  %v938 = vmax.f32 %v650, %v874
  %v939 = vmax.f32 %v653, %v875
  %v940 = vmax.f32 %v658, %v876
  %v941 = vmax.f32 %v661, %v877
  %v942 = vmax.f32 %v666, %v878
  %v943 = vmax.f32 %v669, %v879
  %v944 = vmax.f32 %v674, %v880
  %v945 = vmax.f32 %v677, %v881
  %v946 = vmax.f32 %v682, %v882
  %v947 = vmax.f32 %v685, %v883
  %v948 = vmax.f32 %v690, %v884
  %v949 = vmax.f32 %v693, %v885
  %v950 = vmax.f32 %v698, %v886
  %v951 = vmax.f32 %v701, %v887
  %v952 = vmax.f32 %v706, %v888
  %v953 = vmax.f32 %v709, %v889
  %v954 = vmax.f32 %v714, %v890
  %v955 = vmax.f32 %v717, %v891
  %v956 = vmax.f32 %v722, %v892
  %v957 = vmax.f32 %v725, %v893
  %v958 = vmax.f32 %v730, %v894
  %v959 = vmax.f32 %v733, %v895
  %v960 = vmax.f32 %v738, %v896
  %v961 = vmax.f32 %v741, %v897
  %v962 = vmax.f32 %v746, %v898
  %v963 = vmax.f32 %v749, %v899
  %v964 = vmax.f32 %v754, %v900
  %v965 = vmax.f32 %v757, %v901
  %v966 = vmax.f32 %v762, %v902
  %v967 = vmax.f32 %v765, %v903
  %v968 = vmax.f32 %v770, %v904
  %v969 = vmax.f32 %v773, %v905
  %v970 = vmax.f32 %v778, %v906
  %v971 = vmax.f32 %v781, %v907
  %v972 = vmax.f32 %v786, %v908
  %v973 = vmax.f32 %v789, %v909
  %v974 = vmax.f32 %v794, %v910
  %v975 = vmax.f32 %v797, %v911
  %v976 = vmax.f32 %v802, %v912
  %v977 = vmax.f32 %v805, %v913
  %v978 = vmax.f32 %v810, %v914
  %v979 = vmax.f32 %v813, %v915
  %v980 = vmax.f32 %v818, %v916
  %v981 = vmax.f32 %v821, %v917
  %v982 = vmax.f32 %v826, %v918
  %v983 = vmax.f32 %v829, %v919
  %v984 = vmax.f32 %v834, %v920
  %v985 = vmax.f32 %v837, %v921
  %v986 = vmax.f32 %v842, %v922
  %v987 = vmax.f32 %v845, %v923
  %v988 = vmax.f32 %v850, %v924
  %v989 = vmax.f32 %v853, %v925
  %v990 = vmax.f32 %v858, %v926
  %v991 = vmax.f32 %v861, %v927
  %v992 = vpack.c.bf16 %v929, %v928
  %v993 = vpack.c.bf16 %v931, %v930
  %v994 = vpack.c.bf16 %v933, %v932
  %v995 = vpack.c.bf16 %v935, %v934
  %v996 = vpack.c.bf16 %v937, %v936
  %v997 = vpack.c.bf16 %v939, %v938
  %v998 = vpack.c.bf16 %v941, %v940
  %v999 = vpack.c.bf16 %v943, %v942
  %v1000 = vpack.c.bf16 %v945, %v944
  %v1001 = vpack.c.bf16 %v947, %v946
  %v1002 = vpack.c.bf16 %v949, %v948
  %v1003 = vpack.c.bf16 %v951, %v950
  %v1004 = vpack.c.bf16 %v953, %v952
  %v1005 = vpack.c.bf16 %v955, %v954
  %v1006 = vpack.c.bf16 %v957, %v956
  %v1007 = vpack.c.bf16 %v959, %v958
  %v1008 = vpack.c.bf16 %v961, %v960
  %v1009 = vpack.c.bf16 %v963, %v962
  %v1010 = vpack.c.bf16 %v965, %v964
  %v1011 = vpack.c.bf16 %v967, %v966
  %v1012 = vpack.c.bf16 %v969, %v968
  %v1013 = vpack.c.bf16 %v971, %v970
  %v1014 = vpack.c.bf16 %v973, %v972
  %v1015 = vpack.c.bf16 %v975, %v974
  %v1016 = vpack.c.bf16 %v977, %v976
  %v1017 = vpack.c.bf16 %v979, %v978
  %v1018 = vpack.c.bf16 %v981, %v980
  %v1019 = vpack.c.bf16 %v983, %v982
  %v1020 = vpack.c.bf16 %v985, %v984
  %v1021 = vpack.c.bf16 %v987, %v986
  %v1022 = vpack.c.bf16 %v989, %v988
  %v1023 = vpack.c.bf16 %v991, %v990
  %v1056 = vunpack.c.l.b16 %v992
  %v1057 = vunpack.c.h.b16 %v992
  %v1058 = vunpack.c.l.b16 %v993
  %v1059 = vunpack.c.h.b16 %v993
  %v1060 = vunpack.c.l.b16 %v994
  %v1061 = vunpack.c.h.b16 %v994
  %v1062 = vunpack.c.l.b16 %v995
  %v1063 = vunpack.c.h.b16 %v995
  %v1064 = vunpack.c.l.b16 %v996
  %v1065 = vunpack.c.h.b16 %v996
  %v1066 = vunpack.c.l.b16 %v997
  %v1067 = vunpack.c.h.b16 %v997
  %v1068 = vunpack.c.l.b16 %v998
  %v1069 = vunpack.c.h.b16 %v998
  %v1070 = vunpack.c.l.b16 %v999
  %v1071 = vunpack.c.h.b16 %v999
  %v1072 = vunpack.c.l.b16 %v1000
  %v1073 = vunpack.c.h.b16 %v1000
  %v1074 = vunpack.c.l.b16 %v1001
  %v1075 = vunpack.c.h.b16 %v1001
  %v1076 = vunpack.c.l.b16 %v1002
  %v1077 = vunpack.c.h.b16 %v1002
  %v1078 = vunpack.c.l.b16 %v1003
  %v1079 = vunpack.c.h.b16 %v1003
  %v1080 = vunpack.c.l.b16 %v1004
  %v1081 = vunpack.c.h.b16 %v1004
  %v1082 = vunpack.c.l.b16 %v1005
  %v1083 = vunpack.c.h.b16 %v1005
  %v1084 = vunpack.c.l.b16 %v1006
  %v1085 = vunpack.c.h.b16 %v1006
  %v1086 = vunpack.c.l.b16 %v1007
  %v1087 = vunpack.c.h.b16 %v1007
  %v1088 = vunpack.c.l.b16 %v1008
  %v1089 = vunpack.c.h.b16 %v1008
  %v1090 = vunpack.c.l.b16 %v1009
  %v1091 = vunpack.c.h.b16 %v1009
  %v1092 = vunpack.c.l.b16 %v1010
  %v1093 = vunpack.c.h.b16 %v1010
  %v1094 = vunpack.c.l.b16 %v1011
  %v1095 = vunpack.c.h.b16 %v1011
  %v1096 = vunpack.c.l.b16 %v1012
  %v1097 = vunpack.c.h.b16 %v1012
  %v1098 = vunpack.c.l.b16 %v1013
  %v1099 = vunpack.c.h.b16 %v1013
  %v1100 = vunpack.c.l.b16 %v1014
  %v1101 = vunpack.c.h.b16 %v1014
  %v1102 = vunpack.c.l.b16 %v1015
  %v1103 = vunpack.c.h.b16 %v1015
  %v1104 = vunpack.c.l.b16 %v1016
  %v1105 = vunpack.c.h.b16 %v1016
  %v1106 = vunpack.c.l.b16 %v1017
  %v1107 = vunpack.c.h.b16 %v1017
  %v1108 = vunpack.c.l.b16 %v1018
  %v1109 = vunpack.c.h.b16 %v1018
  %v1110 = vunpack.c.l.b16 %v1019
  %v1111 = vunpack.c.h.b16 %v1019
  %v1112 = vunpack.c.l.b16 %v1020
  %v1113 = vunpack.c.h.b16 %v1020
  %v1114 = vunpack.c.l.b16 %v1021
  %v1115 = vunpack.c.h.b16 %v1021
  %v1116 = vunpack.c.l.b16 %v1022
  %v1117 = vunpack.c.h.b16 %v1022
  %v1118 = vunpack.c.l.b16 %v1023
  %v1119 = vunpack.c.h.b16 %v1023
  %v1120 = vpack.c.b16 %v1056, %v1056
  %v1121 = vpack.c.b16 %v1057, %v1057
  %v1122 = vpack.c.b16 %v1058, %v1058
  %v1123 = vpack.c.b16 %v1059, %v1059
  %v1124 = vpack.c.b16 %v1060, %v1060
  %v1125 = vpack.c.b16 %v1061, %v1061
  %v1126 = vpack.c.b16 %v1062, %v1062
  %v1127 = vpack.c.b16 %v1063, %v1063
  %v1128 = vpack.c.b16 %v1064, %v1064
  %v1129 = vpack.c.b16 %v1065, %v1065
  %v1130 = vpack.c.b16 %v1066, %v1066
  %v1131 = vpack.c.b16 %v1067, %v1067
  %v1132 = vpack.c.b16 %v1068, %v1068
  %v1133 = vpack.c.b16 %v1069, %v1069
  %v1134 = vpack.c.b16 %v1070, %v1070
  %v1135 = vpack.c.b16 %v1071, %v1071
  %v1136 = vpack.c.b16 %v1072, %v1072
  %v1137 = vpack.c.b16 %v1073, %v1073
  %v1138 = vpack.c.b16 %v1074, %v1074
  %v1139 = vpack.c.b16 %v1075, %v1075
  %v1140 = vpack.c.b16 %v1076, %v1076
  %v1141 = vpack.c.b16 %v1077, %v1077
  %v1142 = vpack.c.b16 %v1078, %v1078
  %v1143 = vpack.c.b16 %v1079, %v1079
  %v1144 = vpack.c.b16 %v1080, %v1080
  %v1145 = vpack.c.b16 %v1081, %v1081
  %v1146 = vpack.c.b16 %v1082, %v1082
  %v1147 = vpack.c.b16 %v1083, %v1083
  %v1148 = vpack.c.b16 %v1084, %v1084
  %v1149 = vpack.c.b16 %v1085, %v1085
  %v1150 = vpack.c.b16 %v1086, %v1086
  %v1151 = vpack.c.b16 %v1087, %v1087
  %v1152 = vpack.c.b16 %v1088, %v1088
  %v1153 = vpack.c.b16 %v1089, %v1089
  %v1154 = vpack.c.b16 %v1090, %v1090
  %v1155 = vpack.c.b16 %v1091, %v1091
  %v1156 = vpack.c.b16 %v1092, %v1092
  %v1157 = vpack.c.b16 %v1093, %v1093
  %v1158 = vpack.c.b16 %v1094, %v1094
  %v1159 = vpack.c.b16 %v1095, %v1095
  %v1160 = vpack.c.b16 %v1096, %v1096
  %v1161 = vpack.c.b16 %v1097, %v1097
  %v1162 = vpack.c.b16 %v1098, %v1098
  %v1163 = vpack.c.b16 %v1099, %v1099
  %v1164 = vpack.c.b16 %v1100, %v1100
  %v1165 = vpack.c.b16 %v1101, %v1101
  %v1166 = vpack.c.b16 %v1102, %v1102
  %v1167 = vpack.c.b16 %v1103, %v1103
  %v1168 = vpack.c.b16 %v1104, %v1104
  %v1169 = vpack.c.b16 %v1105, %v1105
  %v1170 = vpack.c.b16 %v1106, %v1106
  %v1171 = vpack.c.b16 %v1107, %v1107
  %v1172 = vpack.c.b16 %v1108, %v1108
  %v1173 = vpack.c.b16 %v1109, %v1109
  %v1174 = vpack.c.b16 %v1110, %v1110
  %v1175 = vpack.c.b16 %v1111, %v1111
  %v1176 = vpack.c.b16 %v1112, %v1112
  %v1177 = vpack.c.b16 %v1113, %v1113
  %v1178 = vpack.c.b16 %v1114, %v1114
  %v1179 = vpack.c.b16 %v1115, %v1115
  %v1180 = vpack.c.b16 %v1116, %v1116
  %v1181 = vpack.c.b16 %v1117, %v1117
  %v1182 = vpack.c.b16 %v1118, %v1118
  %v1183 = vpack.c.b16 %v1119, %v1119
  %1248 = vst [vmem:[%s3] sm:$0xf] %v1120
  %1249 = vst [vmem:[%s3 + $0x4] sm:$0xf] %v1121
  %1250 = vst [vmem:[%s3 + $0x8] sm:$0xf] %v1122
  %1251 = vst [vmem:[%s3 + $0xc] sm:$0xf] %v1123
  %1252 = vst [vmem:[%s3 + $0x10] sm:$0xf] %v1124
  %1253 = vst [vmem:[%s3 + $0x14] sm:$0xf] %v1125
  %1254 = vst [vmem:[%s3 + $0x18] sm:$0xf] %v1126
  %1255 = vst [vmem:[%s3 + $0x1c] sm:$0xf] %v1127
  %1256 = vst [vmem:[%s3 + $0x20] sm:$0xf] %v1128
  %1257 = vst [vmem:[%s3 + $0x24] sm:$0xf] %v1129
  %1258 = vst [vmem:[%s3 + $0x28] sm:$0xf] %v1130
  %1259 = vst [vmem:[%s3 + $0x2c] sm:$0xf] %v1131
  %1260 = vst [vmem:[%s3 + $0x30] sm:$0xf] %v1132
  %1261 = vst [vmem:[%s3 + $0x34] sm:$0xf] %v1133
  %1262 = vst [vmem:[%s3 + $0x38] sm:$0xf] %v1134
  %1263 = vst [vmem:[%s3 + $0x3c] sm:$0xf] %v1135
  %1264 = vst [vmem:[%s3 + $0x40] sm:$0xf] %v1136
  %1265 = vst [vmem:[%s3 + $0x44] sm:$0xf] %v1137
  %1266 = vst [vmem:[%s3 + $0x48] sm:$0xf] %v1138
  %1267 = vst [vmem:[%s3 + $0x4c] sm:$0xf] %v1139
  %1268 = vst [vmem:[%s3 + $0x50] sm:$0xf] %v1140
  %1269 = vst [vmem:[%s3 + $0x54] sm:$0xf] %v1141
  %1270 = vst [vmem:[%s3 + $0x58] sm:$0xf] %v1142
  %1271 = vst [vmem:[%s3 + $0x5c] sm:$0xf] %v1143
  %1272 = vst [vmem:[%s3 + $0x60] sm:$0xf] %v1144
  %1273 = vst [vmem:[%s3 + $0x64] sm:$0xf] %v1145
  %1274 = vst [vmem:[%s3 + $0x68] sm:$0xf] %v1146
  %1275 = vst [vmem:[%s3 + $0x6c] sm:$0xf] %v1147
  %1276 = vst [vmem:[%s3 + $0x70] sm:$0xf] %v1148
  %1277 = vst [vmem:[%s3 + $0x74] sm:$0xf] %v1149
  %1278 = vst [vmem:[%s3 + $0x78] sm:$0xf] %v1150
  %1279 = vst [vmem:[%s3 + $0x7c] sm:$0xf] %v1151
  %1280 = vst [vmem:[%s3 + $0x80] sm:$0xf] %v1152
  %1281 = vst [vmem:[%s3 + $0x84] sm:$0xf] %v1153
  %1282 = vst [vmem:[%s3 + $0x88] sm:$0xf] %v1154
  %1283 = vst [vmem:[%s3 + $0x8c] sm:$0xf] %v1155
  %1284 = vst [vmem:[%s3 + $0x90] sm:$0xf] %v1156
  %1285 = vst [vmem:[%s3 + $0x94] sm:$0xf] %v1157
  %1286 = vst [vmem:[%s3 + $0x98] sm:$0xf] %v1158
  %1287 = vst [vmem:[%s3 + $0x9c] sm:$0xf] %v1159
  %1288 = vst [vmem:[%s3 + $0xa0] sm:$0xf] %v1160
  %1289 = vst [vmem:[%s3 + $0xa4] sm:$0xf] %v1161
  %1290 = vst [vmem:[%s3 + $0xa8] sm:$0xf] %v1162
  %1291 = vst [vmem:[%s3 + $0xac] sm:$0xf] %v1163
  %1292 = vst [vmem:[%s3 + $0xb0] sm:$0xf] %v1164
  %1293 = vst [vmem:[%s3 + $0xb4] sm:$0xf] %v1165
  %1294 = vst [vmem:[%s3 + $0xb8] sm:$0xf] %v1166
  %1295 = vst [vmem:[%s3 + $0xbc] sm:$0xf] %v1167
  %1296 = vst [vmem:[%s3 + $0xc0] sm:$0xf] %v1168
  %1297 = vst [vmem:[%s3 + $0xc4] sm:$0xf] %v1169
  %1298 = vst [vmem:[%s3 + $0xc8] sm:$0xf] %v1170
  %1299 = vst [vmem:[%s3 + $0xcc] sm:$0xf] %v1171
  %1300 = vst [vmem:[%s3 + $0xd0] sm:$0xf] %v1172
  %1301 = vst [vmem:[%s3 + $0xd4] sm:$0xf] %v1173
  %1302 = vst [vmem:[%s3 + $0xd8] sm:$0xf] %v1174
  %1303 = vst [vmem:[%s3 + $0xdc] sm:$0xf] %v1175
  %1304 = vst [vmem:[%s3 + $0xe0] sm:$0xf] %v1176
  %1305 = vst [vmem:[%s3 + $0xe4] sm:$0xf] %v1177
  %1306 = vst [vmem:[%s3 + $0xe8] sm:$0xf] %v1178
  %1307 = vst [vmem:[%s3 + $0xec] sm:$0xf] %v1179
  %1308 = vst [vmem:[%s3 + $0xf0] sm:$0xf] %v1180
  %1309 = vst [vmem:[%s3 + $0xf4] sm:$0xf] %v1181
  %1310 = vst [vmem:[%s3 + $0xf8] sm:$0xf] %v1182
  %1311 = vst [vmem:[%s3 + $0xfc] sm:$0xf] %v1183
  // Predicated region
  $region14: #{netd2_forward.5} parent=0 // pred_check
    _
  $region15: #{netd2_forward.5} parent=0 // pred_check_branch
    %1313 = sbr.rel (0) target = $region17
  $region16: #{netd2_forward.5} parent=0 // pred_region
    _
  $region17: #{netd2_forward.5} parent=0 // pred_fallthru
    _
  // Predicated region
  $region18: #{netd2_forward.5} parent=0 // pred_check
    _
  $region19: #{netd2_forward.5} parent=0 // pred_check_branch
    %1315 = sbr.rel (0) target = $region21
  $region20: #{netd2_forward.5} parent=0 // pred_region
    _
  $region21: #{netd2_forward.5} parent=0 // pred_fallthru
    _

// kernel: netd2_forward.6
$region0: #{netd2_forward.6}
  #allocation0 [shape = 'u32[]', space=smem, size = 0x4, offset = 0x4, fixed_abs, tag = 'smem constant byte address 0x4 - core index']
  #allocation1 [shape = 'u32[144,128]{1,0:T(1,128)}', space=vmem, size = 0x12000, scoped, tag = 'internal scratch']
  %s0 = inlined_call_operand.vmem [shape: bf16[128,400], index: 0, kind: input, shape index: {}]
  %s1 = inlined_call_operand.vmem [shape: bf16[400,128], index: 1, kind: input, shape index: {}]
  %s2 = inlined_call_operand.vmem [shape: f32[1,128], index: 2, kind: input, shape index: {}]
  %s3 = inlined_call_operand.vmem [shape: bf16[128,128], index: 3, kind: output, shape index: {}]
  %s4 = sld [smem:[#allocation0]]
  $region22: #{netd2_forward.6} parent=0
    _
  %s6 = ssub.s32 1, %s4
  %s7 = scalar_select 0, %s6, %s4
  // Predicated region
  $region2: #{netd2_forward.6} parent=0 // pred_check
    _
  $region3: #{netd2_forward.6} parent=0 // pred_check_branch
    %9 = sbr.rel (0) target = $region5
  $region4: #{netd2_forward.6} parent=0 // pred_region
    _
  $region5: #{netd2_forward.6} parent=0 // pred_fallthru
    _
  // Predicated region
  $region6: #{netd2_forward.6} parent=0 // pred_check
    _
  $region7: #{netd2_forward.6} parent=0 // pred_check_branch
    %11 = sbr.rel (0) target = $region9
  $region8: #{netd2_forward.6} parent=0 // pred_region
    _
  $region9: #{netd2_forward.6} parent=0 // pred_fallthru
    _
  // Predicated region
  $region10: #{netd2_forward.6} parent=0 // pred_check
    _
  $region11: #{netd2_forward.6} parent=0 // pred_check_branch
    %13 = sbr.rel (0) target = $region13
  $region12: #{netd2_forward.6} parent=0 // pred_region
    _
  $region13: #{netd2_forward.6} parent=0 // pred_fallthru
    _
  %v15 = vld [vmem:[%s0] sm:$0xff]
  %v16 = vld [vmem:[%s0 + $0x8] sm:$0xff]
  %v17 = vld [vmem:[%s0 + $0x10] sm:$0xff]
  %v18 = vld [vmem:[%s0 + $0x18] sm:$0xff]
  %v19 = vld [vmem:[%s0 + $0x20] sm:$0xff]
  %v20 = vld [vmem:[%s0 + $0x28] sm:$0xff]
  %v21 = vld [vmem:[%s0 + $0x30] sm:$0xff]
  %v22 = vld [vmem:[%s0 + $0x38] sm:$0xff]
  %v23 = vld [vmem:[%s0 + $0x40] sm:$0xff]
  %v24 = vld [vmem:[%s0 + $0x48] sm:$0xff]
  %v25 = vld [vmem:[%s0 + $0x50] sm:$0xff]
  %v26 = vld [vmem:[%s0 + $0x58] sm:$0xff]
  %v27 = vld [vmem:[%s0 + $0x60] sm:$0xff]
  %v28 = vld [vmem:[%s0 + $0x68] sm:$0xff]
  %v29 = vld [vmem:[%s0 + $0x70] sm:$0xff]
  %v30 = vld [vmem:[%s0 + $0x78] sm:$0xff]
  %v31 = vld [vmem:[%s0 + $0x80] sm:$0xff]
  %v32 = vld [vmem:[%s0 + $0x88] sm:$0xff]
  %v33 = vld [vmem:[%s0 + $0x90] sm:$0xff]
  %v34 = vld [vmem:[%s0 + $0x98] sm:$0xff]
  %v35 = vld [vmem:[%s0 + $0xa0] sm:$0xff]
  %v36 = vld [vmem:[%s0 + $0xa8] sm:$0xff]
  %v37 = vld [vmem:[%s0 + $0xb0] sm:$0xff]
  %v38 = vld [vmem:[%s0 + $0xb8] sm:$0xff]
  %v39 = vld [vmem:[%s0 + $0xc0] sm:$0xff]
  %v40 = vld [vmem:[%s0 + $0xc8] sm:$0xff]
  %v41 = vld [vmem:[%s0 + $0xd0] sm:$0xff]
  %v42 = vld [vmem:[%s0 + $0xd8] sm:$0xff]
  %v43 = vld [vmem:[%s0 + $0xe0] sm:$0xff]
  %v44 = vld [vmem:[%s0 + $0xe8] sm:$0xff]
  %v45 = vld [vmem:[%s0 + $0xf0] sm:$0xff]
  %v46 = vld [vmem:[%s0 + $0xf8] sm:$0xff]
  %v47 = vld [vmem:[%s1] sm:$0xf]
  %v48 = vld [vmem:[%s1 + $0x4] sm:$0xf]
  %v49 = vld [vmem:[%s1 + $0x8] sm:$0xf]
  %v50 = vld [vmem:[%s1 + $0xc] sm:$0xf]
  %v51 = vld [vmem:[%s1 + $0x10] sm:$0xf]
  %v52 = vld [vmem:[%s1 + $0x14] sm:$0xf]
  %v53 = vld [vmem:[%s1 + $0x18] sm:$0xf]
  %v54 = vld [vmem:[%s1 + $0x1c] sm:$0xf]
  %v55 = vld [vmem:[%s1 + $0x20] sm:$0xf]
  %v56 = vld [vmem:[%s1 + $0x24] sm:$0xf]
  %v57 = vld [vmem:[%s1 + $0x28] sm:$0xf]
  %v58 = vld [vmem:[%s1 + $0x2c] sm:$0xf]
  %v59 = vld [vmem:[%s1 + $0x30] sm:$0xf]
  %v60 = vld [vmem:[%s1 + $0x34] sm:$0xf]
  %v61 = vld [vmem:[%s1 + $0x38] sm:$0xf]
  %v62 = vld [vmem:[%s1 + $0x3c] sm:$0xf]
  %v63 = vld [vmem:[%s1 + $0x40] sm:$0xf]
  %v64 = vld [vmem:[%s1 + $0x44] sm:$0xf]
  %v65 = vld [vmem:[%s1 + $0x48] sm:$0xf]
  %v66 = vld [vmem:[%s1 + $0x4c] sm:$0xf]
  %v67 = vld [vmem:[%s1 + $0x50] sm:$0xf]
  %v68 = vld [vmem:[%s1 + $0x54] sm:$0xf]
  %v69 = vld [vmem:[%s1 + $0x58] sm:$0xf]
  %v70 = vld [vmem:[%s1 + $0x5c] sm:$0xf]
  %v71 = vld [vmem:[%s1 + $0x60] sm:$0xf]
  %v72 = vld [vmem:[%s1 + $0x64] sm:$0xf]
  %v73 = vld [vmem:[%s1 + $0x68] sm:$0xf]
  %v74 = vld [vmem:[%s1 + $0x6c] sm:$0xf]
  %v75 = vld [vmem:[%s1 + $0x70] sm:$0xf]
  %v76 = vld [vmem:[%s1 + $0x74] sm:$0xf]
  %v77 = vld [vmem:[%s1 + $0x78] sm:$0xf]
  %v78 = vld [vmem:[%s1 + $0x7c] sm:$0xf]
  %v79 = vld [vmem:[%s1 + $0x80] sm:$0xf]
  %v80 = vld [vmem:[%s1 + $0x84] sm:$0xf]
  %v81 = vld [vmem:[%s1 + $0x88] sm:$0xf]
  %v82 = vld [vmem:[%s1 + $0x8c] sm:$0xf]
  %v83 = vld [vmem:[%s1 + $0x90] sm:$0xf]
  %v84 = vld [vmem:[%s1 + $0x94] sm:$0xf]
  %v85 = vld [vmem:[%s1 + $0x98] sm:$0xf]
  %v86 = vld [vmem:[%s1 + $0x9c] sm:$0xf]
  %v87 = vld [vmem:[%s1 + $0xa0] sm:$0xf]
  %v88 = vld [vmem:[%s1 + $0xa4] sm:$0xf]
  %v89 = vld [vmem:[%s1 + $0xa8] sm:$0xf]
  %v90 = vld [vmem:[%s1 + $0xac] sm:$0xf]
  %v91 = vld [vmem:[%s1 + $0xb0] sm:$0xf]
  %v92 = vld [vmem:[%s1 + $0xb4] sm:$0xf]
  %v93 = vld [vmem:[%s1 + $0xb8] sm:$0xf]
  %v94 = vld [vmem:[%s1 + $0xbc] sm:$0xf]
  %v95 = vld [vmem:[%s1 + $0xc0] sm:$0xf]
  %v96 = vld [vmem:[%s1 + $0xc4] sm:$0xf]
  %v97 = vld [vmem:[%s2] sm:$0x1]
  %v99 = vlaneseq
  %v100 = vshrl.u32 %v99, 7
  %v101 = vsub.s32 0, %v100
  %v102 = vrot.slane %v97, %v101
  %v136 = vunpack.c.l.b16 %v15
  %v137 = vunpack.c.h.b16 %v15
  %v138 = vunpack.c.l.b16 %v16
  %v139 = vunpack.c.h.b16 %v16
  %v140 = vunpack.c.l.b16 %v17
  %v141 = vunpack.c.h.b16 %v17
  %v142 = vunpack.c.l.b16 %v18
  %v143 = vunpack.c.h.b16 %v18
  %v144 = vunpack.c.l.b16 %v19
  %v145 = vunpack.c.h.b16 %v19
  %v146 = vunpack.c.l.b16 %v20
  %v147 = vunpack.c.h.b16 %v20
  %v148 = vunpack.c.l.b16 %v21
  %v149 = vunpack.c.h.b16 %v21
  %v150 = vunpack.c.l.b16 %v22
  %v151 = vunpack.c.h.b16 %v22
  %v152 = vunpack.c.l.b16 %v23
  %v153 = vunpack.c.h.b16 %v23
  %v154 = vunpack.c.l.b16 %v24
  %v155 = vunpack.c.h.b16 %v24
  %v156 = vunpack.c.l.b16 %v25
  %v157 = vunpack.c.h.b16 %v25
  %v158 = vunpack.c.l.b16 %v26
  %v159 = vunpack.c.h.b16 %v26
  %v160 = vunpack.c.l.b16 %v27
  %v161 = vunpack.c.h.b16 %v27
  %v162 = vunpack.c.l.b16 %v28
  %v163 = vunpack.c.h.b16 %v28
  %v164 = vunpack.c.l.b16 %v29
  %v165 = vunpack.c.h.b16 %v29
  %v166 = vunpack.c.l.b16 %v30
  %v167 = vunpack.c.h.b16 %v30
  %v168 = vunpack.c.l.b16 %v31
  %v169 = vunpack.c.h.b16 %v31
  %v170 = vunpack.c.l.b16 %v32
  %v171 = vunpack.c.h.b16 %v32
  %v172 = vunpack.c.l.b16 %v33
  %v173 = vunpack.c.h.b16 %v33
  %v174 = vunpack.c.l.b16 %v34
  %v175 = vunpack.c.h.b16 %v34
  %v176 = vunpack.c.l.b16 %v35
  %v177 = vunpack.c.h.b16 %v35
  %v178 = vunpack.c.l.b16 %v36
  %v179 = vunpack.c.h.b16 %v36
  %v180 = vunpack.c.l.b16 %v37
  %v181 = vunpack.c.h.b16 %v37
  %v182 = vunpack.c.l.b16 %v38
  %v183 = vunpack.c.h.b16 %v38
  %v184 = vunpack.c.l.b16 %v39
  %v185 = vunpack.c.h.b16 %v39
  %v186 = vunpack.c.l.b16 %v40
  %v187 = vunpack.c.h.b16 %v40
  %v188 = vunpack.c.l.b16 %v41
  %v189 = vunpack.c.h.b16 %v41
  %v190 = vunpack.c.l.b16 %v42
  %v191 = vunpack.c.h.b16 %v42
  %v192 = vunpack.c.l.b16 %v43
  %v193 = vunpack.c.h.b16 %v43
  %v194 = vunpack.c.l.b16 %v44
  %v195 = vunpack.c.h.b16 %v44
  %v196 = vunpack.c.l.b16 %v45
  %v197 = vunpack.c.h.b16 %v45
  %v198 = vunpack.c.l.b16 %v46
  %v199 = vunpack.c.h.b16 %v46
  %v200 = vpack.c.b16 %v140, %v136
  %v201 = vpack.c.b16 %v141, %v137
  %v202 = vpack.c.b16 %v142, %v138
  %v203 = vpack.c.b16 %v143, %v139
  %v204 = vpack.c.b16 %v148, %v144
  %v205 = vpack.c.b16 %v149, %v145
  %v206 = vpack.c.b16 %v150, %v146
  %v207 = vpack.c.b16 %v151, %v147
  %v208 = vpack.c.b16 %v156, %v152
  %v209 = vpack.c.b16 %v157, %v153
  %v210 = vpack.c.b16 %v158, %v154
  %v211 = vpack.c.b16 %v159, %v155
  %v212 = vpack.c.b16 %v164, %v160
  %v213 = vpack.c.b16 %v165, %v161
  %v214 = vpack.c.b16 %v166, %v162
  %v215 = vpack.c.b16 %v167, %v163
  %v216 = vpack.c.b16 %v172, %v168
  %v217 = vpack.c.b16 %v173, %v169
  %v218 = vpack.c.b16 %v174, %v170
  %v219 = vpack.c.b16 %v175, %v171
  %v220 = vpack.c.b16 %v180, %v176
  %v221 = vpack.c.b16 %v181, %v177
  %v222 = vpack.c.b16 %v182, %v178
  %v223 = vpack.c.b16 %v183, %v179
  %v224 = vpack.c.b16 %v188, %v184
  %v225 = vpack.c.b16 %v189, %v185
  %v226 = vpack.c.b16 %v190, %v186
  %v227 = vpack.c.b16 %v191, %v187
  %v228 = vpack.c.b16 %v196, %v192
  %v229 = vpack.c.b16 %v197, %v193
  %v230 = vpack.c.b16 %v198, %v194
  %v231 = vpack.c.b16 %v199, %v195
  %v306 = vunpack.c.l.b16 %v47
  %v307 = vunpack.c.l.b16 %v48
  %v308 = vunpack.c.l.b16 %v49
  %v309 = vunpack.c.l.b16 %v50
  %v310 = vunpack.c.l.b16 %v51
  %v311 = vunpack.c.l.b16 %v52
  %v312 = vunpack.c.l.b16 %v53
  %v313 = vunpack.c.l.b16 %v54
  %v314 = vunpack.c.l.b16 %v55
  %v315 = vunpack.c.l.b16 %v56
  %v316 = vunpack.c.l.b16 %v57
  %v317 = vunpack.c.l.b16 %v58
  %v318 = vunpack.c.l.b16 %v59
  %v319 = vunpack.c.l.b16 %v60
  %v320 = vunpack.c.l.b16 %v61
  %v321 = vunpack.c.l.b16 %v62
  %v322 = vunpack.c.l.b16 %v63
  %v323 = vunpack.c.l.b16 %v64
  %v324 = vunpack.c.l.b16 %v65
  %v325 = vunpack.c.l.b16 %v66
  %v326 = vunpack.c.l.b16 %v67
  %v327 = vunpack.c.l.b16 %v68
  %v328 = vunpack.c.l.b16 %v69
  %v329 = vunpack.c.l.b16 %v70
  %v330 = vunpack.c.l.b16 %v71
  %v331 = vunpack.c.l.b16 %v72
  %v332 = vunpack.c.l.b16 %v73
  %v333 = vunpack.c.l.b16 %v74
  %v334 = vunpack.c.l.b16 %v75
  %v335 = vunpack.c.l.b16 %v76
  %v336 = vunpack.c.l.b16 %v77
  %v337 = vunpack.c.l.b16 %v78
  %v338 = vunpack.c.l.b16 %v79
  %v339 = vunpack.c.l.b16 %v80
  %v340 = vunpack.c.l.b16 %v81
  %v341 = vunpack.c.l.b16 %v82
  %v342 = vunpack.c.l.b16 %v83
  %v343 = vunpack.c.l.b16 %v84
  %v344 = vunpack.c.l.b16 %v85
  %v345 = vunpack.c.l.b16 %v86
  %v346 = vunpack.c.l.b16 %v87
  %v347 = vunpack.c.l.b16 %v88
  %v348 = vunpack.c.l.b16 %v89
  %v349 = vunpack.c.l.b16 %v90
  %v350 = vunpack.c.l.b16 %v91
  %v351 = vunpack.c.l.b16 %v92
  %v352 = vunpack.c.l.b16 %v93
  %v353 = vunpack.c.l.b16 %v94
  %v354 = vunpack.c.l.b16 %v95
  %v355 = vunpack.c.l.b16 %v96
  %v356 = vpack.c.b16 %v307, %v306
  %v357 = vpack.c.b16 %v309, %v308
  %v358 = vpack.c.b16 %v311, %v310
  %v359 = vpack.c.b16 %v313, %v312
  %v360 = vpack.c.b16 %v315, %v314
  %v361 = vpack.c.b16 %v317, %v316
  %v362 = vpack.c.b16 %v319, %v318
  %v363 = vpack.c.b16 %v321, %v320
  %v364 = vpack.c.b16 %v323, %v322
  %v365 = vpack.c.b16 %v325, %v324
  %v366 = vpack.c.b16 %v327, %v326
  %v367 = vpack.c.b16 %v329, %v328
  %v368 = vpack.c.b16 %v331, %v330
  %v369 = vpack.c.b16 %v333, %v332
  %v370 = vpack.c.b16 %v335, %v334
  %v371 = vpack.c.b16 %v337, %v336
  %v372 = vpack.c.b16 %v339, %v338
  %v373 = vpack.c.b16 %v341, %v340
  %v374 = vpack.c.b16 %v343, %v342
  %v375 = vpack.c.b16 %v345, %v344
  %v376 = vpack.c.b16 %v347, %v346
  %v377 = vpack.c.b16 %v349, %v348
  %v378 = vpack.c.b16 %v351, %v350
  %v379 = vpack.c.b16 %v353, %v352
  %v380 = vpack.c.b16 %v355, %v354
  %vm406 = vcmask 130048
  %v408 = vsel %vm406, %v203, 0
  %v411 = vsel %vm406, %v207, 0
  %v414 = vsel %vm406, %v211, 0
  %v417 = vsel %vm406, %v215, 0
  %v420 = vsel %vm406, %v219, 0
  %v423 = vsel %vm406, %v223, 0
  %v426 = vsel %vm406, %v227, 0
  %v429 = vsel %vm406, %v231, 0
  %431 = vmatprep.subr.bf16.mxu0 0
  %432 = vmatpush1.bf16.msra.mxu0 %v363
  %433 = vmatprep.subr.bf16.mxu0 0
  %434 = vmatpush1.bf16.msra.mxu0 %v362
  %435 = vmatprep.subr.bf16.mxu0 0
  %436 = vmatpush1.bf16.msra.mxu0 %v361
  %437 = vmatprep.subr.bf16.mxu0 0
  %438 = vmatpush1.bf16.msra.mxu0 %v360
  %439 = vmatprep.subr.bf16.mxu0 0
  %440 = vmatpush1.bf16.msra.mxu0 %v359
  %441 = vmatprep.subr.bf16.mxu0 0
  %442 = vmatpush1.bf16.msra.mxu0 %v358
  %443 = vmatprep.subr.bf16.mxu0 0
  %444 = vmatpush1.bf16.msra.mxu0 %v357
  %445 = vmatprep.subr.bf16.mxu0 0
  %446 = vmatpush1.bf16.msra.mxu0 %v356
  %447 = vmatprep.subr.bf16.mxu0 0
  %448 = vmatpush2.bf16.msra.mxu0 %v371
  %449 = vmatprep.subr.bf16.mxu0 0
  %450 = vmatpush2.bf16.msra.mxu0 %v370
  %451 = vmatprep.subr.bf16.mxu0 0
  %452 = vmatpush2.bf16.msra.mxu0 %v369
  %453 = vmatprep.subr.bf16.mxu0 0
  %454 = vmatpush2.bf16.msra.mxu0 %v368
  %455 = vmatprep.subr.bf16.mxu0 0
  %456 = vmatpush2.bf16.msra.mxu0 %v367
  %457 = vmatprep.subr.bf16.mxu0 0
  %458 = vmatpush2.bf16.msra.mxu0 %v366
  %459 = vmatprep.subr.bf16.mxu0 0
  %460 = vmatpush2.bf16.msra.mxu0 %v365
  %461 = vmatprep.subr.bf16.mxu0 0
  %462 = vmatpush2.bf16.msra.mxu0 %v364
  %463 = vmatprep.mubr.bf16.mxu0 %v201
  %464 = vmatmul.mubr.bf16.gmra.mxu0 %v200
  %v465 = vpop.f32.mrf.mxu0
  %v466 = vadd.f32 %v102, %v465
  %v467 = vpop.f32.mrf.mxu0
  %v468 = vpop.f32.mrf.mxu0
  %v469 = vadd.f32 %v102, %v468
  %v470 = vpop.f32.mrf.mxu0
  %471 = vmatprep.mubr.bf16.mxu0 %v205
  %472 = vmatmul.mubr.bf16.gmra.mxu0 %v204
  %v473 = vpop.f32.mrf.mxu0
  %v474 = vadd.f32 %v102, %v473
  %v475 = vpop.f32.mrf.mxu0
  %v476 = vpop.f32.mrf.mxu0
  %v477 = vadd.f32 %v102, %v476
  %v478 = vpop.f32.mrf.mxu0
  %479 = vmatprep.mubr.bf16.mxu0 %v209
  %480 = vmatmul.mubr.bf16.gmra.mxu0 %v208
  %v481 = vpop.f32.mrf.mxu0
  %v482 = vadd.f32 %v102, %v481
  %v483 = vpop.f32.mrf.mxu0
  %v484 = vpop.f32.mrf.mxu0
  %v485 = vadd.f32 %v102, %v484
  %v486 = vpop.f32.mrf.mxu0
  %487 = vmatprep.mubr.bf16.mxu0 %v213
  %488 = vmatmul.mubr.bf16.gmra.mxu0 %v212
  %v489 = vpop.f32.mrf.mxu0
  %v490 = vadd.f32 %v102, %v489
  %v491 = vpop.f32.mrf.mxu0
  %v492 = vpop.f32.mrf.mxu0
  %v493 = vadd.f32 %v102, %v492
  %v494 = vpop.f32.mrf.mxu0
  %495 = vmatprep.mubr.bf16.mxu0 %v217
  %496 = vmatmul.mubr.bf16.gmra.mxu0 %v216
  %v497 = vpop.f32.mrf.mxu0
  %v498 = vadd.f32 %v102, %v497
  %v499 = vpop.f32.mrf.mxu0
  %v500 = vpop.f32.mrf.mxu0
  %v501 = vadd.f32 %v102, %v500
  %v502 = vpop.f32.mrf.mxu0
  %503 = vmatprep.mubr.bf16.mxu0 %v221
  %504 = vmatmul.mubr.bf16.gmra.mxu0 %v220
  %v505 = vpop.f32.mrf.mxu0
  %v506 = vadd.f32 %v102, %v505
  %v507 = vpop.f32.mrf.mxu0
  %v508 = vpop.f32.mrf.mxu0
  %v509 = vadd.f32 %v102, %v508
  %v510 = vpop.f32.mrf.mxu0
  %511 = vmatprep.mubr.bf16.mxu0 %v225
  %512 = vmatmul.mubr.bf16.gmra.mxu0 %v224
  %v513 = vpop.f32.mrf.mxu0
  %v514 = vadd.f32 %v102, %v513
  %v515 = vpop.f32.mrf.mxu0
  %v516 = vpop.f32.mrf.mxu0
  %v517 = vadd.f32 %v102, %v516
  %v518 = vpop.f32.mrf.mxu0
  %519 = vmatprep.mubr.bf16.mxu0 %v229
  %520 = vmatmul.mubr.bf16.gmra.mxu0 %v228
  %v521 = vpop.f32.mrf.mxu0
  %v522 = vadd.f32 %v102, %v521
  %v523 = vpop.f32.mrf.mxu0
  %v524 = vpop.f32.mrf.mxu0
  %v525 = vadd.f32 %v102, %v524
  %v526 = vpop.f32.mrf.mxu0
  %527 = vdwg.mxu0
  %528 = vmatprep.subr.bf16.mxu0 0
  %529 = vmatpush1.bf16.msra.mxu0 %v379
  %530 = vmatprep.subr.bf16.mxu0 0
  %531 = vmatpush1.bf16.msra.mxu0 %v378
  %532 = vmatprep.subr.bf16.mxu0 0
  %533 = vmatpush1.bf16.msra.mxu0 %v377
  %534 = vmatprep.subr.bf16.mxu0 0
  %535 = vmatpush1.bf16.msra.mxu0 %v376
  %536 = vmatprep.subr.bf16.mxu0 0
  %537 = vmatpush1.bf16.msra.mxu0 %v375
  %538 = vmatprep.subr.bf16.mxu0 0
  %539 = vmatpush1.bf16.msra.mxu0 %v374
  %540 = vmatprep.subr.bf16.mxu0 0
  %541 = vmatpush1.bf16.msra.mxu0 %v373
  %542 = vmatprep.subr.bf16.mxu0 0
  %543 = vmatpush1.bf16.msra.mxu0 %v372
  %544 = vmatprep.subr.bf16.mxu0 0
  %545 = vmatpush2.bf16.msra.mxu0 0
  %546 = vmatprep.subr.bf16.mxu0 0
  %547 = vmatpush2.bf16.msra.mxu0 0
  %548 = vmatprep.subr.bf16.mxu0 0
  %549 = vmatpush2.bf16.msra.mxu0 0
  %550 = vmatprep.subr.bf16.mxu0 0
  %551 = vmatpush2.bf16.msra.mxu0 0
  %552 = vmatprep.subr.bf16.mxu0 0
  %553 = vmatpush2.bf16.msra.mxu0 0
  %554 = vmatprep.subr.bf16.mxu0 0
  %555 = vmatpush2.bf16.msra.mxu0 0
  %556 = vmatprep.subr.bf16.mxu0 0
  %557 = vmatpush2.bf16.msra.mxu0 0
  %558 = vmatprep.subr.bf16.mxu0 0
  %559 = vmatpush2.bf16.msra.mxu0 %v380
  %560 = vmatprep.mubr.bf16.mxu0 %v408
  %561 = vmatmul.mubr.bf16.gmra.mxu0 %v202
  %v562 = vpop.f32.mrf.mxu0
  %v563 = vadd.f32 %v466, %v562
  %v564 = vpop.f32.mrf.mxu0
  %v565 = vpop.f32.mrf.mxu0
  %v566 = vadd.f32 %v469, %v565
  %v567 = vpop.f32.mrf.mxu0
  %568 = vmatprep.mubr.bf16.mxu0 %v411
  %569 = vmatmul.mubr.bf16.gmra.mxu0 %v206
  %v570 = vpop.f32.mrf.mxu0
  %v571 = vadd.f32 %v474, %v570
  %v572 = vpop.f32.mrf.mxu0
  %v573 = vpop.f32.mrf.mxu0
  %v574 = vadd.f32 %v477, %v573
  %v575 = vpop.f32.mrf.mxu0
  %576 = vmatprep.mubr.bf16.mxu0 %v414
  %577 = vmatmul.mubr.bf16.gmra.mxu0 %v210
  %v578 = vpop.f32.mrf.mxu0
  %v579 = vadd.f32 %v482, %v578
  %v580 = vpop.f32.mrf.mxu0
  %v581 = vpop.f32.mrf.mxu0
  %v582 = vadd.f32 %v485, %v581
  %v583 = vpop.f32.mrf.mxu0
  %584 = vmatprep.mubr.bf16.mxu0 %v417
  %585 = vmatmul.mubr.bf16.gmra.mxu0 %v214
  %v586 = vpop.f32.mrf.mxu0
  %v587 = vadd.f32 %v490, %v586
  %v588 = vpop.f32.mrf.mxu0
  %v589 = vpop.f32.mrf.mxu0
  %v590 = vadd.f32 %v493, %v589
  %v591 = vpop.f32.mrf.mxu0
  %592 = vmatprep.mubr.bf16.mxu0 %v420
  %593 = vmatmul.mubr.bf16.gmra.mxu0 %v218
  %v594 = vpop.f32.mrf.mxu0
  %v595 = vadd.f32 %v498, %v594
  %v596 = vpop.f32.mrf.mxu0
  %v597 = vpop.f32.mrf.mxu0
  %v598 = vadd.f32 %v501, %v597
  %v599 = vpop.f32.mrf.mxu0
  %600 = vmatprep.mubr.bf16.mxu0 %v423
  %601 = vmatmul.mubr.bf16.gmra.mxu0 %v222
  %v602 = vpop.f32.mrf.mxu0
  %v603 = vadd.f32 %v506, %v602
  %v604 = vpop.f32.mrf.mxu0
  %v605 = vpop.f32.mrf.mxu0
  %v606 = vadd.f32 %v509, %v605
  %v607 = vpop.f32.mrf.mxu0
  %608 = vmatprep.mubr.bf16.mxu0 %v426
  %609 = vmatmul.mubr.bf16.gmra.mxu0 %v226
  %v610 = vpop.f32.mrf.mxu0
  %v611 = vadd.f32 %v514, %v610
  %v612 = vpop.f32.mrf.mxu0
  %v613 = vpop.f32.mrf.mxu0
  %v614 = vadd.f32 %v517, %v613
  %v615 = vpop.f32.mrf.mxu0
  %616 = vmatprep.mubr.bf16.mxu0 %v429
  %617 = vmatmul.mubr.bf16.gmra.mxu0 %v230
  %v618 = vpop.f32.mrf.mxu0
  %v619 = vadd.f32 %v522, %v618
  %v620 = vpop.f32.mrf.mxu0
  %v621 = vpop.f32.mrf.mxu0
  %v622 = vadd.f32 %v525, %v621
  %v623 = vpop.f32.mrf.mxu0
  %624 = vdwg.mxu0
  %v625 = vmul.f32 %v563, 0.2
  %v626 = vmul.f32 %v566, 0.2
  %v627 = vmul.f32 %v571, 0.2
  %v628 = vmul.f32 %v574, 0.2
  %v629 = vmul.f32 %v579, 0.2
  %v630 = vmul.f32 %v582, 0.2
  %v631 = vmul.f32 %v587, 0.2
  %v632 = vmul.f32 %v590, 0.2
  %v633 = vmul.f32 %v595, 0.2
  %v634 = vmul.f32 %v598, 0.2
  %v635 = vmul.f32 %v603, 0.2
  %v636 = vmul.f32 %v606, 0.2
  %v637 = vmul.f32 %v611, 0.2
  %v638 = vmul.f32 %v614, 0.2
  %v639 = vmul.f32 %v619, 0.2
  %v640 = vmul.f32 %v622, 0.2
  %v641 = vmax.f32 %v563, %v625
  %v642 = vmax.f32 %v566, %v626
  %v643 = vmax.f32 %v571, %v627
  %v644 = vmax.f32 %v574, %v628
  %v645 = vmax.f32 %v579, %v629
  %v646 = vmax.f32 %v582, %v630
  %v647 = vmax.f32 %v587, %v631
  %v648 = vmax.f32 %v590, %v632
  %v649 = vmax.f32 %v595, %v633
  %v650 = vmax.f32 %v598, %v634
  %v651 = vmax.f32 %v603, %v635
  %v652 = vmax.f32 %v606, %v636
  %v653 = vmax.f32 %v611, %v637
  %v654 = vmax.f32 %v614, %v638
  %v655 = vmax.f32 %v619, %v639
  %v656 = vmax.f32 %v622, %v640
  %v657 = vpack.c.bf16 %v642, %v641
  %v658 = vpack.c.bf16 %v644, %v643
  %v659 = vpack.c.bf16 %v646, %v645
  %v660 = vpack.c.bf16 %v648, %v647
  %v661 = vpack.c.bf16 %v650, %v649
  %v662 = vpack.c.bf16 %v652, %v651
  %v663 = vpack.c.bf16 %v654, %v653
  %v664 = vpack.c.bf16 %v656, %v655
  %v673 = vunpack.c.l.b16 %v657
  %v674 = vunpack.c.h.b16 %v657
  %v675 = vunpack.c.l.b16 %v658
  %v676 = vunpack.c.h.b16 %v658
  %v677 = vunpack.c.l.b16 %v659
  %v678 = vunpack.c.h.b16 %v659
  %v679 = vunpack.c.l.b16 %v660
  %v680 = vunpack.c.h.b16 %v660
  %v681 = vunpack.c.l.b16 %v661
  %v682 = vunpack.c.h.b16 %v661
  %v683 = vunpack.c.l.b16 %v662
  %v684 = vunpack.c.h.b16 %v662
  %v685 = vunpack.c.l.b16 %v663
  %v686 = vunpack.c.h.b16 %v663
  %v687 = vunpack.c.l.b16 %v664
  %v688 = vunpack.c.h.b16 %v664
  %v689 = vpack.c.b16 %v673, %v673
  %v690 = vpack.c.b16 %v674, %v674
  %v691 = vpack.c.b16 %v675, %v675
  %v692 = vpack.c.b16 %v676, %v676
  %v693 = vpack.c.b16 %v677, %v677
  %v694 = vpack.c.b16 %v678, %v678
  %v695 = vpack.c.b16 %v679, %v679
  %v696 = vpack.c.b16 %v680, %v680
  %v697 = vpack.c.b16 %v681, %v681
  %v698 = vpack.c.b16 %v682, %v682
  %v699 = vpack.c.b16 %v683, %v683
  %v700 = vpack.c.b16 %v684, %v684
  %v701 = vpack.c.b16 %v685, %v685
  %v702 = vpack.c.b16 %v686, %v686
  %v703 = vpack.c.b16 %v687, %v687
  %v704 = vpack.c.b16 %v688, %v688
  %721 = vst [vmem:[%s3] sm:$0xf] %v689
  %722 = vst [vmem:[%s3 + $0x4] sm:$0xf] %v690
  %723 = vst [vmem:[%s3 + $0x8] sm:$0xf] %v691
  %724 = vst [vmem:[%s3 + $0xc] sm:$0xf] %v692
  %725 = vst [vmem:[%s3 + $0x10] sm:$0xf] %v693
  %726 = vst [vmem:[%s3 + $0x14] sm:$0xf] %v694
  %727 = vst [vmem:[%s3 + $0x18] sm:$0xf] %v695
  %728 = vst [vmem:[%s3 + $0x1c] sm:$0xf] %v696
  %729 = vst [vmem:[%s3 + $0x20] sm:$0xf] %v697
  %730 = vst [vmem:[%s3 + $0x24] sm:$0xf] %v698
  %731 = vst [vmem:[%s3 + $0x28] sm:$0xf] %v699
  %732 = vst [vmem:[%s3 + $0x2c] sm:$0xf] %v700
  %733 = vst [vmem:[%s3 + $0x30] sm:$0xf] %v701
  %734 = vst [vmem:[%s3 + $0x34] sm:$0xf] %v702
  %735 = vst [vmem:[%s3 + $0x38] sm:$0xf] %v703
  %736 = vst [vmem:[%s3 + $0x3c] sm:$0xf] %v704
  // Predicated region
  $region14: #{netd2_forward.6} parent=0 // pred_check
    _
  $region15: #{netd2_forward.6} parent=0 // pred_check_branch
    %738 = sbr.rel (0) target = $region17
  $region16: #{netd2_forward.6} parent=0 // pred_region
    _
  $region17: #{netd2_forward.6} parent=0 // pred_fallthru
    _
  // Predicated region
  $region18: #{netd2_forward.6} parent=0 // pred_check
    _
  $region19: #{netd2_forward.6} parent=0 // pred_check_branch
    %740 = sbr.rel (0) target = $region21
  $region20: #{netd2_forward.6} parent=0 // pred_region
    _
  $region21: #{netd2_forward.6} parent=0 // pred_fallthru
    _

// kernel: netd2_forward.7
$region0: #{netd2_forward.7}
  #allocation0 [shape = 'u32[]', space=smem, size = 0x4, offset = 0x4, fixed_abs, tag = 'smem constant byte address 0x4 - core index']
  #allocation1 [shape = 'u32[144,128]{1,0:T(1,128)}', space=vmem, size = 0x12000, scoped, tag = 'internal scratch']
  #allocation2 [shape = 'f32[1,1]{1,0:T(1,128)S(1)}', space=vmem, size = 0x200, scoped, tag = 'scoped memory for netd2_forward.7']
  %s0 = inlined_call_operand.vmem [shape: bf16[2,16,800], index: 0, kind: input, shape index: {}]
  %s1 = inlined_call_operand.vmem [shape: bf16[800,128], index: 1, kind: input, shape index: {}]
  %s2 = inlined_call_operand.vmem [shape: f32[1,128], index: 2, kind: input, shape index: {}]
  %s3 = inlined_call_operand.vmem [shape: f32[16,128], index: 3, kind: input, shape index: {}]
  %s4 = inlined_call_operand.<no memory space> [shape: f32[1,1], index: 4, kind: input, shape index: {}]
  %s5 = inlined_call_operand.vmem [shape: f32[2,1,1], index: 5, kind: output, shape index: {}]
  %s6 = sld [smem:[#allocation0]]
  $region53: #{netd2_forward.7} parent=0
    _
  %s8 = ssub.s32 1, %s6
  %s9 = scalar_select 0, %s8, %s6
  %v10 = vstv %s4
  %11 = vst [vmem:[#allocation2] sm:$0x1] %v10
  loop: start=0, step=1, limit=4
  $region2: #{netd2_forward.7} parent=0 // loop_pre_header
    _
  $region3: #{netd2_forward.7} parent=0 // loop_header
    %s13 = sphi 0, %s17
    %p14 = scmp.ge.s32.totalorder %s13, 4
    %s23 = sphi 0, %s25
    %s26 = sphi 0, %s23
    %s27 = sphi 0, %s26
    %s43 = sphi 0, %s27
    %s47 = sphi 0, %s47
    %s49 = sphi 0, %s47
    %s50 = sphi 0, %s49
    %s64 = sphi 0, %s50
    %s68 = sphi 0, %s68
    %s70 = sphi 0, %s68
    %s71 = sphi 0, %s70
    %s85 = sphi 0, %s71
    %s89 = sphi 0, %s89
    %s91 = sphi 0, %s89
    %s92 = sphi 0, %s91
    %s106 = sphi 0, %s92
    %s110 = sphi 0, %s110
    %s112 = sphi 0, %s110
    %s113 = sphi 0, %s112
    %s127 = sphi 0, %s113
    %s133 = sphi 0, %s135
    %s136 = sphi 0, %s133
    %s137 = sphi 0, %s136
    %s153 = sphi 0, %s137
  $region4: #{netd2_forward.7} parent=0 // loop_header_branch
    %16 = sbr.rel (%p14) target = $region8
  $region5: #{netd2_forward.7} parent=0 // loop_body
    %s18 = ssub.s32 %s13, 1
    %s19 = ssub.s32 %s13, 2
    %s20 = sadd.s32 %s13, 1
    %s21 = ssub.s32 %s13, %s20
    %p22 = scmp.eq.s32.totalorder %s21, 0
    %s24 = sadd.s32 %s23, 1
    %s25 = scalar_select %p22, %s23, %s24
    %p28 = pneg %p22
    %p29 = scmp.eq.s32.totalorder %s13, 1
    %p30 = por %p28, %p29
    %p31 = scmp.ne.s32.totalorder %s23, %s26
    %p32 = scmp.eq.s32.totalorder %s13, 0
    %p33 = por %p31, %p32
    %p34 = scmp.ne.s32.totalorder %s23, %s26
    %p35 = scmp.eq.s32.totalorder %s18, 1
    %p36 = por %p34, %p35
    %p37 = scmp.ne.s32.totalorder %s26, %s27
    %p38 = scmp.eq.s32.totalorder %s18, 0
    %p39 = por %p37, %p38
    %p40 = scmp.ne.s32.totalorder %s26, %s27
    %p41 = scmp.eq.s32.totalorder %s19, 1
    %p42 = por %p40, %p41
    %p44 = scmp.ne.s32.totalorder %s27, %s43
    %p45 = scmp.eq.s32.totalorder %s19, 0
    %p46 = por %p44, %p45
    %s48 = sadd.s32 %s47, 1
    %p51 = scmp.eq.s32.totalorder %s13, 1
    %p52 = scmp.ne.s32.totalorder %s47, %s49
    %p53 = scmp.eq.s32.totalorder %s13, 0
    %p54 = por %p52, %p53
    %p55 = scmp.ne.s32.totalorder %s47, %s49
    %p56 = scmp.eq.s32.totalorder %s18, 1
    %p57 = por %p55, %p56
    %p58 = scmp.ne.s32.totalorder %s49, %s50
    %p59 = scmp.eq.s32.totalorder %s18, 0
    %p60 = por %p58, %p59
    %p61 = scmp.ne.s32.totalorder %s49, %s50
    %p62 = scmp.eq.s32.totalorder %s19, 1
    %p63 = por %p61, %p62
    %p65 = scmp.ne.s32.totalorder %s50, %s64
    %p66 = scmp.eq.s32.totalorder %s19, 0
    %p67 = por %p65, %p66
    %s69 = sadd.s32 %s68, 1
    %p72 = scmp.eq.s32.totalorder %s13, 1
    %p73 = scmp.ne.s32.totalorder %s68, %s70
    %p74 = scmp.eq.s32.totalorder %s13, 0
    %p75 = por %p73, %p74
    %p76 = scmp.ne.s32.totalorder %s68, %s70
    %p77 = scmp.eq.s32.totalorder %s18, 1
    %p78 = por %p76, %p77
    %p79 = scmp.ne.s32.totalorder %s70, %s71
    %p80 = scmp.eq.s32.totalorder %s18, 0
    %p81 = por %p79, %p80
    %p82 = scmp.ne.s32.totalorder %s70, %s71
    %p83 = scmp.eq.s32.totalorder %s19, 1
    %p84 = por %p82, %p83
    %p86 = scmp.ne.s32.totalorder %s71, %s85
    %p87 = scmp.eq.s32.totalorder %s19, 0
    %p88 = por %p86, %p87
    %s90 = sadd.s32 %s89, 1
    %p93 = scmp.eq.s32.totalorder %s13, 1
    %p94 = scmp.ne.s32.totalorder %s89, %s91
    %p95 = scmp.eq.s32.totalorder %s13, 0
    %p96 = por %p94, %p95
    %p97 = scmp.ne.s32.totalorder %s89, %s91
    %p98 = scmp.eq.s32.totalorder %s18, 1
    %p99 = por %p97, %p98
    %p100 = scmp.ne.s32.totalorder %s91, %s92
    %p101 = scmp.eq.s32.totalorder %s18, 0
    %p102 = por %p100, %p101
    %p103 = scmp.ne.s32.totalorder %s91, %s92
    %p104 = scmp.eq.s32.totalorder %s19, 1
    %p105 = por %p103, %p104
    %p107 = scmp.ne.s32.totalorder %s92, %s106
    %p108 = scmp.eq.s32.totalorder %s19, 0
    %p109 = por %p107, %p108
    %s111 = sadd.s32 %s110, 1
    %p114 = scmp.eq.s32.totalorder %s13, 1
    %p115 = scmp.ne.s32.totalorder %s110, %s112
    %p116 = scmp.eq.s32.totalorder %s13, 0
    %p117 = por %p115, %p116
    %p118 = scmp.ne.s32.totalorder %s110, %s112
    %p119 = scmp.eq.s32.totalorder %s18, 1
    %p120 = por %p118, %p119
    %p121 = scmp.ne.s32.totalorder %s112, %s113
    %p122 = scmp.eq.s32.totalorder %s18, 0
    %p123 = por %p121, %p122
    %p124 = scmp.ne.s32.totalorder %s112, %s113
    %p125 = scmp.eq.s32.totalorder %s19, 1
    %p126 = por %p124, %p125
    %p128 = scmp.ne.s32.totalorder %s113, %s127
    %p129 = scmp.eq.s32.totalorder %s19, 0
    %p130 = por %p128, %p129
    %s131 = ssub.s32 %s13, %s20
    %p132 = scmp.eq.s32.totalorder %s131, 0
    %s134 = sadd.s32 %s133, 1
    %s135 = scalar_select %p132, %s133, %s134
    %p138 = pneg %p132
    %p139 = scmp.eq.s32.totalorder %s13, 1
    %p140 = por %p138, %p139
    %p141 = scmp.ne.s32.totalorder %s133, %s136
    %p142 = scmp.eq.s32.totalorder %s13, 0
    %p143 = por %p141, %p142
    %p144 = scmp.ne.s32.totalorder %s133, %s136
    %p145 = scmp.eq.s32.totalorder %s18, 1
    %p146 = por %p144, %p145
    %p147 = scmp.ne.s32.totalorder %s136, %s137
    %p148 = scmp.eq.s32.totalorder %s18, 0
    %p149 = por %p147, %p148
    %p150 = scmp.ne.s32.totalorder %s136, %s137
    %p151 = scmp.eq.s32.totalorder %s19, 1
    %p152 = por %p150, %p151
    %p154 = scmp.ne.s32.totalorder %s137, %s153
    %p155 = scmp.eq.s32.totalorder %s19, 0
    %p156 = por %p154, %p155
    %p157 = scmp.le.s32.totalorder 1, %s13
    %p158 = scmp.lt.s32.totalorder %s13, 3
    %p159 = pnand %p157, %p158
    %p160 = pneg %p159
    // Predicated region
    $region9: #{netd2_forward.7} parent=5 // pred_check
      _
    $region10: #{netd2_forward.7} parent=5 // pred_check_branch
      %162 = sbr.rel (%p159) target = $region12
    $region11: #{netd2_forward.7} parent=5 // pred_region
      %s163 = ssub.s32 %s13, 1
      // Predicated region
      $region13: #{netd2_forward.7} parent=11 // pred_check
        %p164 = pneg %p60
      $region14: #{netd2_forward.7} parent=11 // pred_check_branch
        %166 = sbr.rel (%p164) target = $region16
      $region15: #{netd2_forward.7} parent=11 // pred_region
        _
      $region16: #{netd2_forward.7} parent=11 // pred_fallthru
        _
      // Predicated region
      $region17: #{netd2_forward.7} parent=11 // pred_check
        %p167 = pneg %p81
      $region18: #{netd2_forward.7} parent=11 // pred_check_branch
        %169 = sbr.rel (%p167) target = $region20
      $region19: #{netd2_forward.7} parent=11 // pred_region
        _
      $region20: #{netd2_forward.7} parent=11 // pred_fallthru
        _
      // Predicated region
      $region21: #{netd2_forward.7} parent=11 // pred_check
        %p170 = pneg %p102
      $region22: #{netd2_forward.7} parent=11 // pred_check_branch
        %172 = sbr.rel (%p170) target = $region24
      $region23: #{netd2_forward.7} parent=11 // pred_region
        _
      $region24: #{netd2_forward.7} parent=11 // pred_fallthru
        _
      // Predicated region
      $region25: #{netd2_forward.7} parent=11 // pred_check
        %p173 = pneg %p123
      $region26: #{netd2_forward.7} parent=11 // pred_check_branch
        %175 = sbr.rel (%p173) target = $region28
      $region27: #{netd2_forward.7} parent=11 // pred_region
        _
      $region28: #{netd2_forward.7} parent=11 // pred_fallthru
        _
    $region12: #{netd2_forward.7} parent=5 // pred_fallthru
      _
    %p176 = scmp.lt.s32.totalorder %s13, 2
    // Predicated region
    $region29: #{netd2_forward.7} parent=5 // pred_check
      %p177 = pneg %p176
    $region30: #{netd2_forward.7} parent=5 // pred_check_branch
      %179 = sbr.rel (%p177) target = $region32
    $region31: #{netd2_forward.7} parent=5 // pred_region
      // Predicated region
      $region33: #{netd2_forward.7} parent=31 // pred_check
        %p180 = pneg %p33
      $region34: #{netd2_forward.7} parent=31 // pred_check_branch
        %182 = sbr.rel (%p180) target = $region36
      $region35: #{netd2_forward.7} parent=31 // pred_region
        %p183 = scmp.lt.s32.totalorder %s13, 1
        %s184 = scalar_select %p183, %s13, 1
        %s185 = smul.addr %s184, 14
        %s186 = smul.addr %s185, 4
        %s187 = scalar_lea.vmem %s0, %s186
      $region36: #{netd2_forward.7} parent=31 // pred_fallthru
        _
    $region32: #{netd2_forward.7} parent=5 // pred_fallthru
      _
    %p188 = scmp.le.s32.totalorder 1, %s13
    %p189 = scmp.lt.s32.totalorder %s13, 3
    %p190 = pnand %p188, %p189
    %p191 = pneg %p190
    // Predicated region
    $region37: #{netd2_forward.7} parent=5 // pred_check
      _
    $region38: #{netd2_forward.7} parent=5 // pred_check_branch
      %193 = sbr.rel (%p190) target = $region40
    $region39: #{netd2_forward.7} parent=5 // pred_region
      %s194 = ssub.s32 %s13, 1
      %p195 = scmp.lt.s32.totalorder %s18, 1
      %s196 = scalar_select %p195, %s18, 1
      %s197 = smul.addr %s196, 14
      %s198 = smul.addr %s197, 4
      %s199 = scalar_lea.vmem %s0, %s198
      %p200 = pneg %p39
      %p201 = pneg %p36
      %p202 = pneg %p60
      %p203 = pneg %p57
      %p204 = pneg %p81
      %p205 = pneg %p78
      %p206 = pneg %p102
      %p207 = pneg %p99
      %p208 = pneg %p123
      %p209 = pneg %p120
      %p210 = pneg %p149
      %p211 = pneg %p146
      %p212 = scmp.lt.s32.totalorder %s18, 1
      %s213 = scalar_select %p212, %s18, 1
      %s214 = scalar_lea.vmem %s5, %s213
      %p215 = scmp.lt.s32.totalorder %s18, 1
      %s216 = scalar_select %p215, %s18, 1
      %s217 = smul.addr %s216, 14
      %s218 = smul.addr %s217, 4
      %s219 = scalar_lea.vmem %s0, %s218
      %p220 = scmp.lt.s32.totalorder %s18, 1
      %s221 = scalar_select %p220, %s18, 1
      %s222 = scalar_lea.vmem %s5, %s221
      %v224 = vld [vmem:[%s219] sm:$0xff]
      %v225 = vld [vmem:[%s219 + $0x8] sm:$0xff]
      %v226 = vld [vmem:[%s219 + $0x10] sm:$0xff]
      %v227 = vld [vmem:[%s219 + $0x18] sm:$0xf]
      %v228 = vld [vmem:[%s219 + $0x1c] sm:$0xff]
      %v229 = vld [vmem:[%s219 + $0x24] sm:$0xff]
      %v230 = vld [vmem:[%s219 + $0x2c] sm:$0xff]
      %v231 = vld [vmem:[%s219 + $0x34] sm:$0xf]
      %v232 = vld [vmem:[%s1] sm:$0xf]
      %v233 = vld [vmem:[%s1 + $0x4] sm:$0xf]
      %v234 = vld [vmem:[%s1 + $0x8] sm:$0xf]
      %v235 = vld [vmem:[%s1 + $0xc] sm:$0xf]
      %v236 = vld [vmem:[%s1 + $0x10] sm:$0xf]
      %v237 = vld [vmem:[%s1 + $0x14] sm:$0xf]
      %v238 = vld [vmem:[%s1 + $0x18] sm:$0xf]
      %v239 = vld [vmem:[%s1 + $0x1c] sm:$0xf]
      %v240 = vld [vmem:[%s1 + $0x20] sm:$0xf]
      %v241 = vld [vmem:[%s1 + $0x24] sm:$0xf]
      %v242 = vld [vmem:[%s1 + $0x28] sm:$0xf]
      %v243 = vld [vmem:[%s1 + $0x2c] sm:$0xf]
      %v244 = vld [vmem:[%s1 + $0x30] sm:$0xf]
      %v245 = vld [vmem:[%s1 + $0x34] sm:$0xf]
      %v246 = vld [vmem:[%s1 + $0x38] sm:$0xf]
      %v247 = vld [vmem:[%s1 + $0x3c] sm:$0xf]
      %v248 = vld [vmem:[%s1 + $0x40] sm:$0xf]
      %v249 = vld [vmem:[%s1 + $0x44] sm:$0xf]
      %v250 = vld [vmem:[%s1 + $0x48] sm:$0xf]
      %v251 = vld [vmem:[%s1 + $0x4c] sm:$0xf]
      %v252 = vld [vmem:[%s1 + $0x50] sm:$0xf]
      %v253 = vld [vmem:[%s1 + $0x54] sm:$0xf]
      %v254 = vld [vmem:[%s1 + $0x58] sm:$0xf]
      %v255 = vld [vmem:[%s1 + $0x5c] sm:$0xf]
      %v256 = vld [vmem:[%s1 + $0x60] sm:$0xf]
      %v257 = vld [vmem:[%s1 + $0x64] sm:$0xf]
      %v258 = vld [vmem:[%s1 + $0x68] sm:$0xf]
      %v259 = vld [vmem:[%s1 + $0x6c] sm:$0xf]
      %v260 = vld [vmem:[%s1 + $0x70] sm:$0xf]
      %v261 = vld [vmem:[%s1 + $0x74] sm:$0xf]
      %v262 = vld [vmem:[%s1 + $0x78] sm:$0xf]
      %v263 = vld [vmem:[%s1 + $0x7c] sm:$0xf]
      %v264 = vld [vmem:[%s1 + $0x80] sm:$0xf]
      %v265 = vld [vmem:[%s1 + $0x84] sm:$0xf]
      %v266 = vld [vmem:[%s1 + $0x88] sm:$0xf]
      %v267 = vld [vmem:[%s1 + $0x8c] sm:$0xf]
      %v268 = vld [vmem:[%s1 + $0x90] sm:$0xf]
      %v269 = vld [vmem:[%s1 + $0x94] sm:$0xf]
      %v270 = vld [vmem:[%s1 + $0x98] sm:$0xf]
      %v271 = vld [vmem:[%s1 + $0x9c] sm:$0xf]
      %v272 = vld [vmem:[%s1 + $0xa0] sm:$0xf]
      %v273 = vld [vmem:[%s1 + $0xa4] sm:$0xf]
      %v274 = vld [vmem:[%s1 + $0xa8] sm:$0xf]
      %v275 = vld [vmem:[%s1 + $0xac] sm:$0xf]
      %v276 = vld [vmem:[%s1 + $0xb0] sm:$0xf]
      %v277 = vld [vmem:[%s1 + $0xb4] sm:$0xf]
      %v278 = vld [vmem:[%s1 + $0xb8] sm:$0xf]
      %v279 = vld [vmem:[%s1 + $0xbc] sm:$0xf]
      %v280 = vld [vmem:[%s1 + $0xc0] sm:$0xf]
      %v281 = vld [vmem:[%s1 + $0xc4] sm:$0xf]
      %v282 = vld [vmem:[%s1 + $0xc8] sm:$0xf]
      %v283 = vld [vmem:[%s1 + $0xcc] sm:$0xf]
      %v284 = vld [vmem:[%s1 + $0xd0] sm:$0xf]
      %v285 = vld [vmem:[%s1 + $0xd4] sm:$0xf]
      %v286 = vld [vmem:[%s1 + $0xd8] sm:$0xf]
      %v287 = vld [vmem:[%s1 + $0xdc] sm:$0xf]
      %v288 = vld [vmem:[%s1 + $0xe0] sm:$0xf]
      %v289 = vld [vmem:[%s1 + $0xe4] sm:$0xf]
      %v290 = vld [vmem:[%s1 + $0xe8] sm:$0xf]
      %v291 = vld [vmem:[%s1 + $0xec] sm:$0xf]
      %v292 = vld [vmem:[%s1 + $0xf0] sm:$0xf]
      %v293 = vld [vmem:[%s1 + $0xf4] sm:$0xf]
      %v294 = vld [vmem:[%s1 + $0xf8] sm:$0xf]
      %v295 = vld [vmem:[%s1 + $0xfc] sm:$0xf]
      %v296 = vld [vmem:[%s1 + $0x100] sm:$0xf]
      %v297 = vld [vmem:[%s1 + $0x104] sm:$0xf]
      %v298 = vld [vmem:[%s1 + $0x108] sm:$0xf]
      %v299 = vld [vmem:[%s1 + $0x10c] sm:$0xf]
      %v300 = vld [vmem:[%s1 + $0x110] sm:$0xf]
      %v301 = vld [vmem:[%s1 + $0x114] sm:$0xf]
      %v302 = vld [vmem:[%s1 + $0x118] sm:$0xf]
      %v303 = vld [vmem:[%s1 + $0x11c] sm:$0xf]
      %v304 = vld [vmem:[%s1 + $0x120] sm:$0xf]
      %v305 = vld [vmem:[%s1 + $0x124] sm:$0xf]
      %v306 = vld [vmem:[%s1 + $0x128] sm:$0xf]
      %v307 = vld [vmem:[%s1 + $0x12c] sm:$0xf]
      %v308 = vld [vmem:[%s1 + $0x130] sm:$0xf]
      %v309 = vld [vmem:[%s1 + $0x134] sm:$0xf]
      %v310 = vld [vmem:[%s1 + $0x138] sm:$0xf]
      %v311 = vld [vmem:[%s1 + $0x13c] sm:$0xf]
      %v312 = vld [vmem:[%s1 + $0x140] sm:$0xf]
      %v313 = vld [vmem:[%s1 + $0x144] sm:$0xf]
      %v314 = vld [vmem:[%s1 + $0x148] sm:$0xf]
      %v315 = vld [vmem:[%s1 + $0x14c] sm:$0xf]
      %v316 = vld [vmem:[%s1 + $0x150] sm:$0xf]
      %v317 = vld [vmem:[%s1 + $0x154] sm:$0xf]
      %v318 = vld [vmem:[%s1 + $0x158] sm:$0xf]
      %v319 = vld [vmem:[%s1 + $0x15c] sm:$0xf]
      %v320 = vld [vmem:[%s1 + $0x160] sm:$0xf]
      %v321 = vld [vmem:[%s1 + $0x164] sm:$0xf]
      %v322 = vld [vmem:[%s1 + $0x168] sm:$0xf]
      %v323 = vld [vmem:[%s1 + $0x16c] sm:$0xf]
      %v324 = vld [vmem:[%s1 + $0x170] sm:$0xf]
      %v325 = vld [vmem:[%s1 + $0x174] sm:$0xf]
      %v326 = vld [vmem:[%s1 + $0x178] sm:$0xf]
      %v327 = vld [vmem:[%s1 + $0x17c] sm:$0xf]
      %v328 = vld [vmem:[%s1 + $0x180] sm:$0xf]
      %v329 = vld [vmem:[%s1 + $0x184] sm:$0xf]
      %v330 = vld [vmem:[%s1 + $0x188] sm:$0xf]
      %v331 = vld [vmem:[%s1 + $0x18c] sm:$0xf]
      %v332 = vld [vmem:[%s2] sm:$0x1]
      %v334 = vlaneseq
      %v335 = vshrl.u32 %v334, 7
      %v336 = vsub.s32 0, %v335
      %v337 = vrot.slane %v332, %v336
      %v347 = vunpack.c.l.b16 %v224
      %v348 = vunpack.c.h.b16 %v224
      %v349 = vunpack.c.l.b16 %v225
      %v350 = vunpack.c.h.b16 %v225
      %v351 = vunpack.c.l.b16 %v226
      %v352 = vunpack.c.h.b16 %v226
      %v353 = vunpack.c.l.b16 %v227
      %v354 = vunpack.c.l.b16 %v228
      %v355 = vunpack.c.h.b16 %v228
      %v356 = vunpack.c.l.b16 %v229
      %v357 = vunpack.c.h.b16 %v229
      %v358 = vunpack.c.l.b16 %v230
      %v359 = vunpack.c.h.b16 %v230
      %v360 = vunpack.c.l.b16 %v231
      %v361 = vpack.c.b16 %v354, %v347
      %v362 = vpack.c.b16 %v355, %v348
      %v363 = vpack.c.b16 %v356, %v349
      %v364 = vpack.c.b16 %v357, %v350
      %v365 = vpack.c.b16 %v358, %v351
      %v366 = vpack.c.b16 %v359, %v352
      %v367 = vpack.c.b16 %v360, %v353
      %v474 = vunpack.c.l.b16 %v232
      %v475 = vunpack.c.l.b16 %v233
      %v476 = vunpack.c.l.b16 %v234
      %v477 = vunpack.c.l.b16 %v235
      %v478 = vunpack.c.l.b16 %v236
      %v479 = vunpack.c.l.b16 %v237
      %v480 = vunpack.c.l.b16 %v238
      %v481 = vunpack.c.l.b16 %v239
      %v482 = vunpack.c.l.b16 %v240
      %v483 = vunpack.c.l.b16 %v241
      %v484 = vunpack.c.l.b16 %v242
      %v485 = vunpack.c.l.b16 %v243
      %v486 = vunpack.c.l.b16 %v244
      %v487 = vunpack.c.l.b16 %v245
      %v488 = vunpack.c.l.b16 %v246
      %v489 = vunpack.c.l.b16 %v247
      %v490 = vunpack.c.l.b16 %v248
      %v491 = vunpack.c.l.b16 %v249
      %v492 = vunpack.c.l.b16 %v250
      %v493 = vunpack.c.l.b16 %v251
      %v494 = vunpack.c.l.b16 %v252
      %v495 = vunpack.c.l.b16 %v253
      %v496 = vunpack.c.l.b16 %v254
      %v497 = vunpack.c.l.b16 %v255
      %v498 = vunpack.c.l.b16 %v256
      %v499 = vunpack.c.l.b16 %v257
      %v500 = vunpack.c.l.b16 %v258
      %v501 = vunpack.c.l.b16 %v259
      %v502 = vunpack.c.l.b16 %v260
      %v503 = vunpack.c.l.b16 %v261
      %v504 = vunpack.c.l.b16 %v262
      %v505 = vunpack.c.l.b16 %v263
      %v506 = vunpack.c.l.b16 %v264
      %v507 = vunpack.c.l.b16 %v265
      %v508 = vunpack.c.l.b16 %v266
      %v509 = vunpack.c.l.b16 %v267
      %v510 = vunpack.c.l.b16 %v268
      %v511 = vunpack.c.l.b16 %v269
      %v512 = vunpack.c.l.b16 %v270
      %v513 = vunpack.c.l.b16 %v271
      %v514 = vunpack.c.l.b16 %v272
      %v515 = vunpack.c.l.b16 %v273
      %v516 = vunpack.c.l.b16 %v274
      %v517 = vunpack.c.l.b16 %v275
      %v518 = vunpack.c.l.b16 %v276
      %v519 = vunpack.c.l.b16 %v277
      %v520 = vunpack.c.l.b16 %v278
      %v521 = vunpack.c.l.b16 %v279
      %v522 = vunpack.c.l.b16 %v280
      %v523 = vunpack.c.l.b16 %v281
      %v524 = vunpack.c.l.b16 %v282
      %v525 = vunpack.c.l.b16 %v283
      %v526 = vunpack.c.l.b16 %v284
      %v527 = vunpack.c.l.b16 %v285
      %v528 = vunpack.c.l.b16 %v286
      %v529 = vunpack.c.l.b16 %v287
      %v530 = vunpack.c.l.b16 %v288
      %v531 = vunpack.c.l.b16 %v289
      %v532 = vunpack.c.l.b16 %v290
      %v533 = vunpack.c.l.b16 %v291
      %v534 = vunpack.c.l.b16 %v292
      %v535 = vunpack.c.l.b16 %v293
      %v536 = vunpack.c.l.b16 %v294
      %v537 = vunpack.c.l.b16 %v295
      %v538 = vunpack.c.l.b16 %v296
      %v539 = vunpack.c.l.b16 %v297
      %v540 = vunpack.c.l.b16 %v298
      %v541 = vunpack.c.l.b16 %v299
      %v542 = vunpack.c.l.b16 %v300
      %v543 = vunpack.c.l.b16 %v301
      %v544 = vunpack.c.l.b16 %v302
      %v545 = vunpack.c.l.b16 %v303
      %v546 = vunpack.c.l.b16 %v304
      %v547 = vunpack.c.l.b16 %v305
      %v548 = vunpack.c.l.b16 %v306
      %v549 = vunpack.c.l.b16 %v307
      %v550 = vunpack.c.l.b16 %v308
      %v551 = vunpack.c.l.b16 %v309
      %v552 = vunpack.c.l.b16 %v310
      %v553 = vunpack.c.l.b16 %v311
      %v554 = vunpack.c.l.b16 %v312
      %v555 = vunpack.c.l.b16 %v313
      %v556 = vunpack.c.l.b16 %v314
      %v557 = vunpack.c.l.b16 %v315
      %v558 = vunpack.c.l.b16 %v316
      %v559 = vunpack.c.l.b16 %v317
      %v560 = vunpack.c.l.b16 %v318
      %v561 = vunpack.c.l.b16 %v319
      %v562 = vunpack.c.l.b16 %v320
      %v563 = vunpack.c.l.b16 %v321
      %v564 = vunpack.c.l.b16 %v322
      %v565 = vunpack.c.l.b16 %v323
      %v566 = vunpack.c.l.b16 %v324
      %v567 = vunpack.c.l.b16 %v325
      %v568 = vunpack.c.l.b16 %v326
      %v569 = vunpack.c.l.b16 %v327
      %v570 = vunpack.c.l.b16 %v328
      %v571 = vunpack.c.l.b16 %v329
      %v572 = vunpack.c.l.b16 %v330
      %v573 = vunpack.c.l.b16 %v331
      %v574 = vpack.c.b16 %v475, %v474
      %v575 = vpack.c.b16 %v477, %v476
      %v576 = vpack.c.b16 %v479, %v478
      %v577 = vpack.c.b16 %v481, %v480
      %v578 = vpack.c.b16 %v483, %v482
      %v579 = vpack.c.b16 %v485, %v484
      %v580 = vpack.c.b16 %v487, %v486
      %v581 = vpack.c.b16 %v489, %v488
      %v582 = vpack.c.b16 %v491, %v490
      %v583 = vpack.c.b16 %v493, %v492
      %v584 = vpack.c.b16 %v495, %v494
      %v585 = vpack.c.b16 %v497, %v496
      %v586 = vpack.c.b16 %v499, %v498
      %v587 = vpack.c.b16 %v501, %v500
      %v588 = vpack.c.b16 %v503, %v502
      %v589 = vpack.c.b16 %v505, %v504
      %v590 = vpack.c.b16 %v507, %v506
      %v591 = vpack.c.b16 %v509, %v508
      %v592 = vpack.c.b16 %v511, %v510
      %v593 = vpack.c.b16 %v513, %v512
      %v594 = vpack.c.b16 %v515, %v514
      %v595 = vpack.c.b16 %v517, %v516
      %v596 = vpack.c.b16 %v519, %v518
      %v597 = vpack.c.b16 %v521, %v520
      %v598 = vpack.c.b16 %v523, %v522
      %v599 = vpack.c.b16 %v525, %v524
      %v600 = vpack.c.b16 %v527, %v526
      %v601 = vpack.c.b16 %v529, %v528
      %v602 = vpack.c.b16 %v531, %v530
      %v603 = vpack.c.b16 %v533, %v532
      %v604 = vpack.c.b16 %v535, %v534
      %v605 = vpack.c.b16 %v537, %v536
      %v606 = vpack.c.b16 %v539, %v538
      %v607 = vpack.c.b16 %v541, %v540
      %v608 = vpack.c.b16 %v543, %v542
      %v609 = vpack.c.b16 %v545, %v544
      %v610 = vpack.c.b16 %v547, %v546
      %v611 = vpack.c.b16 %v549, %v548
      %v612 = vpack.c.b16 %v551, %v550
      %v613 = vpack.c.b16 %v553, %v552
      %v614 = vpack.c.b16 %v555, %v554
      %v615 = vpack.c.b16 %v557, %v556
      %v616 = vpack.c.b16 %v559, %v558
      %v617 = vpack.c.b16 %v561, %v560
      %v618 = vpack.c.b16 %v563, %v562
      %v619 = vpack.c.b16 %v565, %v564
      %v620 = vpack.c.b16 %v567, %v566
      %v621 = vpack.c.b16 %v569, %v568
      %v622 = vpack.c.b16 %v571, %v570
      %v623 = vpack.c.b16 %v573, %v572
      %vm674 = vcmask 261120
      %v676 = vsel %vm674, %v367, 0
      %678 = vmatprep.subr.bf16.mxu0 0
      %679 = vmatpush1.bf16.msra.mxu0 %v581
      %680 = vmatprep.subr.bf16.mxu0 0
      %681 = vmatpush1.bf16.msra.mxu0 %v580
      %682 = vmatprep.subr.bf16.mxu0 0
      %683 = vmatpush1.bf16.msra.mxu0 %v579
      %684 = vmatprep.subr.bf16.mxu0 0
      %685 = vmatpush1.bf16.msra.mxu0 %v578
      %686 = vmatprep.subr.bf16.mxu0 0
      %687 = vmatpush1.bf16.msra.mxu0 %v577
      %688 = vmatprep.subr.bf16.mxu0 0
      %689 = vmatpush1.bf16.msra.mxu0 %v576
      %690 = vmatprep.subr.bf16.mxu0 0
      %691 = vmatpush1.bf16.msra.mxu0 %v575
      %692 = vmatprep.subr.bf16.mxu0 0
      %693 = vmatpush1.bf16.msra.mxu0 %v574
      %694 = vmatprep.subr.bf16.mxu0 0
      %695 = vmatpush2.bf16.msra.mxu0 %v589
      %696 = vmatprep.subr.bf16.mxu0 0
      %697 = vmatpush2.bf16.msra.mxu0 %v588
      %698 = vmatprep.subr.bf16.mxu0 0
      %699 = vmatpush2.bf16.msra.mxu0 %v587
      %700 = vmatprep.subr.bf16.mxu0 0
      %701 = vmatpush2.bf16.msra.mxu0 %v586
      %702 = vmatprep.subr.bf16.mxu0 0
      %703 = vmatpush2.bf16.msra.mxu0 %v585
      %704 = vmatprep.subr.bf16.mxu0 0
      %705 = vmatpush2.bf16.msra.mxu0 %v584
      %706 = vmatprep.subr.bf16.mxu0 0
      %707 = vmatpush2.bf16.msra.mxu0 %v583
      %708 = vmatprep.subr.bf16.mxu0 0
      %709 = vmatpush2.bf16.msra.mxu0 %v582
      %710 = vmatprep.mubr.bf16.mxu0 %v362
      %711 = vmatmul.mubr.bf16.gmra.mxu0 %v361
      %v712 = vpop.f32.mrf.mxu0
      %v713 = vadd.f32 %v337, %v712
      %v714 = vpop.f32.mrf.mxu0
      %v715 = vpop.f32.mrf.mxu0
      %v716 = vadd.f32 %v337, %v715
      %v717 = vpop.f32.mrf.mxu0
      %718 = vdwg.mxu0
      %719 = vmatprep.subr.bf16.mxu0 0
      %720 = vmatpush1.bf16.msra.mxu0 %v597
      %721 = vmatprep.subr.bf16.mxu0 0
      %722 = vmatpush1.bf16.msra.mxu0 %v596
      %723 = vmatprep.subr.bf16.mxu0 0
      %724 = vmatpush1.bf16.msra.mxu0 %v595
      %725 = vmatprep.subr.bf16.mxu0 0
      %726 = vmatpush1.bf16.msra.mxu0 %v594
      %727 = vmatprep.subr.bf16.mxu0 0
      %728 = vmatpush1.bf16.msra.mxu0 %v593
      %729 = vmatprep.subr.bf16.mxu0 0
      %730 = vmatpush1.bf16.msra.mxu0 %v592
      %731 = vmatprep.subr.bf16.mxu0 0
      %732 = vmatpush1.bf16.msra.mxu0 %v591
      %733 = vmatprep.subr.bf16.mxu0 0
      %734 = vmatpush1.bf16.msra.mxu0 %v590
      %735 = vmatprep.subr.bf16.mxu0 0
      %736 = vmatpush2.bf16.msra.mxu0 %v605
      %737 = vmatprep.subr.bf16.mxu0 0
      %738 = vmatpush2.bf16.msra.mxu0 %v604
      %739 = vmatprep.subr.bf16.mxu0 0
      %740 = vmatpush2.bf16.msra.mxu0 %v603
      %741 = vmatprep.subr.bf16.mxu0 0
      %742 = vmatpush2.bf16.msra.mxu0 %v602
      %743 = vmatprep.subr.bf16.mxu0 0
      %744 = vmatpush2.bf16.msra.mxu0 %v601
      %745 = vmatprep.subr.bf16.mxu0 0
      %746 = vmatpush2.bf16.msra.mxu0 %v600
      %747 = vmatprep.subr.bf16.mxu0 0
      %748 = vmatpush2.bf16.msra.mxu0 %v599
      %749 = vmatprep.subr.bf16.mxu0 0
      %750 = vmatpush2.bf16.msra.mxu0 %v598
      %751 = vmatprep.mubr.bf16.mxu0 %v364
      %752 = vmatmul.mubr.bf16.gmra.mxu0 %v363
      %v753 = vpop.f32.mrf.mxu0
      %v754 = vadd.f32 %v713, %v753
      %v755 = vpop.f32.mrf.mxu0
      %v756 = vpop.f32.mrf.mxu0
      %v757 = vadd.f32 %v716, %v756
      %v758 = vpop.f32.mrf.mxu0
      %759 = vdwg.mxu0
      %760 = vmatprep.subr.bf16.mxu0 0
      %761 = vmatpush1.bf16.msra.mxu0 %v613
      %762 = vmatprep.subr.bf16.mxu0 0
      %763 = vmatpush1.bf16.msra.mxu0 %v612
      %764 = vmatprep.subr.bf16.mxu0 0
      %765 = vmatpush1.bf16.msra.mxu0 %v611
      %766 = vmatprep.subr.bf16.mxu0 0
      %767 = vmatpush1.bf16.msra.mxu0 %v610
      %768 = vmatprep.subr.bf16.mxu0 0
      %769 = vmatpush1.bf16.msra.mxu0 %v609
      %770 = vmatprep.subr.bf16.mxu0 0
      %771 = vmatpush1.bf16.msra.mxu0 %v608
      %772 = vmatprep.subr.bf16.mxu0 0
      %773 = vmatpush1.bf16.msra.mxu0 %v607
      %774 = vmatprep.subr.bf16.mxu0 0
      %775 = vmatpush1.bf16.msra.mxu0 %v606
      %776 = vmatprep.subr.bf16.mxu0 0
      %777 = vmatpush2.bf16.msra.mxu0 %v621
      %778 = vmatprep.subr.bf16.mxu0 0
      %779 = vmatpush2.bf16.msra.mxu0 %v620
      %780 = vmatprep.subr.bf16.mxu0 0
      %781 = vmatpush2.bf16.msra.mxu0 %v619
      %782 = vmatprep.subr.bf16.mxu0 0
      %783 = vmatpush2.bf16.msra.mxu0 %v618
      %784 = vmatprep.subr.bf16.mxu0 0
      %785 = vmatpush2.bf16.msra.mxu0 %v617
      %786 = vmatprep.subr.bf16.mxu0 0
      %787 = vmatpush2.bf16.msra.mxu0 %v616
      %788 = vmatprep.subr.bf16.mxu0 0
      %789 = vmatpush2.bf16.msra.mxu0 %v615
      %790 = vmatprep.subr.bf16.mxu0 0
      %791 = vmatpush2.bf16.msra.mxu0 %v614
      %792 = vmatprep.mubr.bf16.mxu0 %v366
      %793 = vmatmul.mubr.bf16.gmra.mxu0 %v365
      %v794 = vpop.f32.mrf.mxu0
      %v795 = vadd.f32 %v754, %v794
      %v796 = vpop.f32.mrf.mxu0
      %v797 = vpop.f32.mrf.mxu0
      %v798 = vadd.f32 %v757, %v797
      %v799 = vpop.f32.mrf.mxu0
      %800 = vdwg.mxu0
      %801 = vmatprep.subr.bf16.mxu0 0
      %802 = vmatpush1.bf16.msra.mxu0 0
      %803 = vmatprep.subr.bf16.mxu0 0
      %804 = vmatpush1.bf16.msra.mxu0 0
      %805 = vmatprep.subr.bf16.mxu0 0
      %806 = vmatpush1.bf16.msra.mxu0 0
      %807 = vmatprep.subr.bf16.mxu0 0
      %808 = vmatpush1.bf16.msra.mxu0 0
      %809 = vmatprep.subr.bf16.mxu0 0
      %810 = vmatpush1.bf16.msra.mxu0 0
      %811 = vmatprep.subr.bf16.mxu0 0
      %812 = vmatpush1.bf16.msra.mxu0 0
      %813 = vmatprep.subr.bf16.mxu0 0
      %814 = vmatpush1.bf16.msra.mxu0 %v623
      %815 = vmatprep.subr.bf16.mxu0 0
      %816 = vmatpush1.bf16.msra.mxu0 %v622
      %817 = vmatprep.subr.bf16.mxu0 0
      %818 = vmatpush2.bf16.msra.mxu0 0
      %819 = vmatprep.subr.bf16.mxu0 0
      %820 = vmatpush2.bf16.msra.mxu0 0
      %821 = vmatprep.subr.bf16.mxu0 0
      %822 = vmatpush2.bf16.msra.mxu0 0
      %823 = vmatprep.subr.bf16.mxu0 0
      %824 = vmatpush2.bf16.msra.mxu0 0
      %825 = vmatprep.subr.bf16.mxu0 0
      %826 = vmatpush2.bf16.msra.mxu0 0
      %827 = vmatprep.subr.bf16.mxu0 0
      %828 = vmatpush2.bf16.msra.mxu0 0
      %829 = vmatprep.subr.bf16.mxu0 0
      %830 = vmatpush2.bf16.msra.mxu0 0
      %831 = vmatprep.subr.bf16.mxu0 0
      %832 = vmatpush2.bf16.msra.mxu0 0
      %833 = vmatprep.mubr.bf16.mxu0 0
      %834 = vmatmul.mubr.bf16.gmra.mxu0 %v676
      %v835 = vpop.f32.mrf.mxu0
      %v836 = vadd.f32 %v795, %v835
      %v837 = vpop.f32.mrf.mxu0
      %v838 = vpop.f32.mrf.mxu0
      %v839 = vadd.f32 %v798, %v838
      %v840 = vpop.f32.mrf.mxu0
      %841 = vdwg.mxu0
      %v842 = vmul.f32 %v836, 0.2
      %v843 = vmul.f32 %v839, 0.2
      %v844 = vmax.f32 %v836, %v842
      %v845 = vmax.f32 %v839, %v843
      %v846 = vld [vmem:[%s3] sm:$0xff]
      %v847 = vld [vmem:[%s3 + $0x8] sm:$0xff]
      %v848 = vmul.f32 %v844, %v846
      %v849 = vmul.f32 %v845, %v847
      %850 = vadd.xlane.f32.xlu0 %v848
      %v851 = vpop.xlane.xlu0 %850
      %852 = vadd.xlane.f32.xlu0 %v849
      %v853 = vpop.xlane.xlu0 %852
      %v854 = vadd.f32 %v851, %v853
      %v855 = vrot.slane %v854, 4
      %v856 = vadd.f32 %v854, %v855
      %v857 = vrot.slane %v856, 2
      %v858 = vadd.f32 %v856, %v857
      %v859 = vrot.slane %v858, 1
      %v860 = vadd.f32 %v858, %v859
      %v861 = vld [vmem:[#allocation2] sm:$0x1]
      %v862 = vadd.f32 %v860, %v861
      %v863 = vsub.f32 0.0, %v862
      %v864 = vmul.f32 %v863, 1.442695
      %v865 = vpow.pop %v864
      %v866 = vadd.f32 %v865, 1.0
      %v867 = vrcp.pop %v866
      %v868 = vmul.f32 1.0, %v867
      %vm869 = vcmask 0
      %870 = vst.msk [vmem:[%s222] sm:$0x1] %vm869, %v868
      %p871 = scmp.lt.s32.totalorder %s18, 1
      %s872 = scalar_select %p871, %s18, 1
      %s873 = scalar_lea.vmem %s5, %s872
      // Predicated region
      $region41: #{netd2_forward.7} parent=39 // pred_check
        %p874 = pneg %p146
      $region42: #{netd2_forward.7} parent=39 // pred_check_branch
        %876 = sbr.rel (%p874) target = $region44
      $region43: #{netd2_forward.7} parent=39 // pred_region
        _
      $region44: #{netd2_forward.7} parent=39 // pred_fallthru
        _
    $region40: #{netd2_forward.7} parent=5 // pred_fallthru
      _
    %p877 = scmp.le.s32.totalorder 2, %s13
    // Predicated region
    $region45: #{netd2_forward.7} parent=5 // pred_check
      %p878 = pneg %p877
    $region46: #{netd2_forward.7} parent=5 // pred_check_branch
      %880 = sbr.rel (%p878) target = $region48
    $region47: #{netd2_forward.7} parent=5 // pred_region
      %s881 = ssub.s32 %s13, 2
      // Predicated region
      $region49: #{netd2_forward.7} parent=47 // pred_check
        %p882 = pneg %p152
      $region50: #{netd2_forward.7} parent=47 // pred_check_branch
        %884 = sbr.rel (%p882) target = $region52
      $region51: #{netd2_forward.7} parent=47 // pred_region
        %p885 = scmp.lt.s32.totalorder %s19, 1
        %s886 = scalar_select %p885, %s19, 1
        %s887 = scalar_lea.vmem %s5, %s886
      $region52: #{netd2_forward.7} parent=47 // pred_fallthru
        _
    $region48: #{netd2_forward.7} parent=5 // pred_fallthru
      _
  $region6: #{netd2_forward.7} parent=0 // loop_footer
    %s17 = sadd.s32 1, %s13
  $region7: #{netd2_forward.7} parent=0 // loop_footer_branch
    %12 = sbr.rel target = $region3
  $region8: #{netd2_forward.7} parent=0 // loop_exit
    _

</llo_original>
